<compile_context>
chip_gen: v7x
topology: tpu7x:2x2x1
jax: 0.10.0
libtpu: 0.0.40
codegen_flags: <defaults>
</compile_context>

<pallas_src>
import functools

import jax
import jax.numpy as jnp
import numpy as np
from jax import lax
from jax.experimental import pallas as pl
from jax.experimental.pallas import tpu as pltpu

BN_EPS = 1e-5


def _round_up(x, m):
    return (x + m - 1) // m * m


def _split_matmul_default():
    """True on chips with a 128-wide MXU (v5-class and older)."""
    try:
        kind = jax.devices()[0].device_kind.lower()
    except Exception:
        return True
    return not any(t in kind for t in ("v6", "v7"))


# ---------------------------------------------------------------------------
# Fused single-call kernel.  grid = (phase, tile); both axes sequential.
#   phase 0: conv matmul (bf16 operands -> f32 accum), conv tile stashed in a
#            VMEM scratch, global per-channel sum / sumsq accumulated.
#   phase 1: (tile 0) fold BN stats + gamma/beta into scale/shift, then every
#            tile applies relu(c3*s+b) + (c1*s+b) -> relu -> store.
# Conv outputs never round-trip through HBM.
# ---------------------------------------------------------------------------
def _fused_block_res_kernel(ops_ref, w_ref, gb_ref, out_ref, conv_sc, stat_sc,
                            *, cout_p, inv_n, split_matmul):
    p = pl.program_id(0)
    i = pl.program_id(1)

    @pl.when(p == 0)
    def _conv_phase():
        @pl.when(i == 0)
        def _init():
            stat_sc[...] = jnp.zeros_like(stat_sc)

        ops = ops_ref[...]
        w = w_ref[...]
        if split_matmul:
            # 128-wide MXU (v5-class): two N=128 matmuls over the same operand.
            c3 = jnp.dot(ops, w[:, :cout_p], preferred_element_type=jnp.float32)
            c1 = jnp.dot(ops, w[:, cout_p:], preferred_element_type=jnp.float32)
            c = jnp.concatenate([c3, c1], axis=1)
        else:
            # v6e / v7x: one N=2*cout_p matmul fills the 256-wide MXU.
            c = jnp.dot(ops, w, preferred_element_type=jnp.float32)
        conv_sc[i] = c
        stat_sc[0:1, :] += jnp.sum(c, axis=0, keepdims=True)
        stat_sc[1:2, :] += jnp.sum(c * c, axis=0, keepdims=True)

    @pl.when(jnp.logical_and(p == 1, i == 0))
    def _fold_bn():
        # NOTE: one-pass E[x^2]-mean^2 variance; fine for near-zero-mean conv
        # outputs (random weights, no bias).
        mean = stat_sc[0:1, :] * inv_n
        var = jnp.maximum(stat_sc[1:2, :] * inv_n - mean * mean, 0.0)
        scale = gb_ref[0:1, :] * lax.rsqrt(var + BN_EPS)
        stat_sc[2:3, :] = scale
        stat_sc[3:4, :] = gb_ref[1:2, :] - mean * scale

    @pl.when(p == 1)
    def _apply_phase():
        y = conv_sc[i] * stat_sc[2:3, :] + stat_sc[3:4, :]
        main = jnp.maximum(y[:, :cout_p], 0.0)
        out_ref[...] = jnp.maximum(main + y[:, cout_p:], 0.0).astype(out_ref.dtype)


# ---------------------------------------------------------------------------
# Two-pass fallback (used when the conv outputs do not fit in VMEM scratch).
# ---------------------------------------------------------------------------
def _conv_stats_kernel(ops_ref, w_ref, conv_ref, stats_ref, *, cout_p,
                       split_matmul):
    ops = ops_ref[...]
    w = w_ref[...]
    if split_matmul:
        c3 = jnp.dot(ops, w[:, :cout_p], preferred_element_type=jnp.float32)
        c1 = jnp.dot(ops, w[:, cout_p:], preferred_element_type=jnp.float32)
        c = jnp.concatenate([c3, c1], axis=1)
    else:
        c = jnp.dot(ops, w, preferred_element_type=jnp.float32)
    conv_ref[...] = c
    # Only rows 0/1 of the 8-row stats block are meaningful; the rest is
    # padding the wrapper never reads (no zeros materialized per step).
    stats_ref[0:1, :] = jnp.sum(c, axis=0, keepdims=True)
    stats_ref[1:2, :] = jnp.sum(c * c, axis=0, keepdims=True)


def _bn_apply_kernel(conv_ref, ss_ref, out_ref, *, cout_p):
    y = conv_ref[...] * ss_ref[0:1, :] + ss_ref[1:2, :]
    main = jnp.maximum(y[:, :cout_p], 0.0)
    out_ref[...] = jnp.maximum(main + y[:, cout_p:], 0.0).astype(out_ref.dtype)


# ---------------------------------------------------------------------------
# Wrapper (NHWC end-to-end; Group_2 should keep tensors NHWC between stages).
# ---------------------------------------------------------------------------
def block_res_forward_nhwc(x_nhwc, w3_oihw, w1_oihw,
                           gamma_main, beta_main, gamma_sc, beta_sc,
                           *, stride=2, tile_rows=1024,
                           compute_dtype=jnp.bfloat16, out_dtype=jnp.float32,
                           force_two_pass=False):
    N, H, W, Cin = x_nhwc.shape
    Cout = w3_oihw.shape[0]
    Ho = (H + 2 - 3) // stride + 1
    Wo = (W + 2 - 3) // stride + 1
    rows = N * Ho * Wo

    cin_p = _round_up(Cin, 8)
    cout_p = _round_up(Cout, 128)     # lane-dense output columns
    k3 = 9 * cin_p
    ncol = 2 * cout_p                 # [conv3 | conv1] combined result width
    itm_in = jnp.dtype(compute_dtype).itemsize
    itm_out = jnp.dtype(out_dtype).itemsize

    # ---- glue: cast to compute dtype FIRST, then pad + im2col (bf16) -------
    x_c = x_nhwc.astype(compute_dtype)
    if cin_p != Cin:
        x_c = jnp.pad(x_c, ((0, 0), (0, 0), (0, 0), (0, cin_p - Cin)))
    xp = jnp.pad(x_c, ((0, 0), (1, 1), (1, 1), (0, 0)))
    taps = [xp[:, kh:kh + stride * (Ho - 1) + 1:stride,
               kw:kw + stride * (Wo - 1) + 1:stride, :]
            for kh in range(3) for kw in range(3)]
    patches = jnp.stack(taps, axis=3).reshape(rows, k3)
    # The 1x1 stride-`stride` shortcut reads x[:, ::s, ::s, :], which is
    # exactly the centre tap (kh=kw=1) above -> no separate operand needed.

    # ---- tile selection + VMEM budgeting ------------------------------------
    stream_per_row = 2 * k3 * itm_in + 2 * ncol * 4 + 2 * cout_p * itm_out
    w_bytes = 2 * k3 * ncol * itm_in
    tile = _round_up(min(tile_rows, rows), 8)
    while tile > 128 and w_bytes + tile * stream_per_row > 28 * 2**20:
        tile = _round_up(max(tile // 2, 128), 8)
    rows_p = _round_up(rows, tile)
    num_tiles = rows_p // tile
    if rows_p != rows:
        patches = jnp.pad(patches, ((0, rows_p - rows), (0, 0)))

    # ---- weights: (k3, 2*cout_p); right block holds the 1x1 on centre rows --
    w3_mat = jnp.transpose(
        jnp.pad(w3_oihw.astype(jnp.float32),
                ((0, cout_p - Cout), (0, cin_p - Cin), (0, 0), (0, 0))),
        (2, 3, 1, 0)).reshape(k3, cout_p)                       # (kh,kw,ci,co)
    w1_mat = jnp.pad(w1_oihw[:, :, 0, 0].astype(jnp.float32),
                     ((0, cout_p - Cout), (0, cin_p - Cin))).T  # (cin_p,cout_p)
    w_right = jnp.zeros((k3, cout_p), jnp.float32).at[
        4 * cin_p:5 * cin_p, :].set(w1_mat)
    w_comb = jnp.concatenate([w3_mat, w_right], axis=1).astype(compute_dtype)

    # ---- gamma/beta packed per combined channel block ------------------------
    def _pad_c(v):
        return jnp.pad(v.astype(jnp.float32), (0, cout_p - Cout))
    g_comb = jnp.concatenate([_pad_c(gamma_main), _pad_c(gamma_sc)])
    b_comb = jnp.concatenate([_pad_c(beta_main), _pad_c(beta_sc)])
    gb = jnp.zeros((8, ncol), jnp.float32).at[0].set(g_comb).at[1].set(b_comb)

    split_matmul = _split_matmul_default()
    inv_n = 1.0 / rows

    conv_sc_bytes = rows_p * ncol * 4
    fused_ok = (not force_two_pass
                and conv_sc_bytes <= 16 * 2**20
                and conv_sc_bytes + w_bytes + tile * stream_per_row <= 36 * 2**20)

    if fused_ok:
        vmem_need = (conv_sc_bytes + w_bytes + tile * stream_per_row
                     + 8 * ncol * 4 + 2 * 8 * ncol * 4)
        cparams = pltpu.CompilerParams(
            dimension_semantics=("arbitrary", "arbitrary"),
            vmem_limit_bytes=min(int(vmem_need) + 16 * 2**20, 48 * 2**20))
        cost = pl.CostEstimate(
            flops=2 * rows_p * k3 * ncol,
            transcendentals=0,
            bytes_accessed=(rows_p * k3 * itm_in + k3 * ncol * itm_in
                            + rows_p * cout_p * itm_out))
        kernel = functools.partial(_fused_block_res_kernel, cout_p=cout_p,
                                   inv_n=inv_n, split_matmul=split_matmul)
        out_flat = pl.pallas_call(
            kernel,
            out_shape=jax.ShapeDtypeStruct((rows_p, cout_p), out_dtype),
            grid_spec=pltpu.PrefetchScalarGridSpec(
                num_scalar_prefetch=0,
                grid=(2, num_tiles),
                in_specs=[
                    # phase 0: stream tile i; phase 1: park on the last tile
                    # (no re-DMA, inputs are not needed anymore).
                    pl.BlockSpec((tile, k3),
                                 lambda p, i: (i * (1 - p) + (num_tiles - 1) * p, 0)),
                    pl.BlockSpec((k3, ncol), lambda p, i: (0, 0)),
                    pl.BlockSpec((8, ncol), lambda p, i: (0, 0)),
                ],
                # output blocks are only written (and flushed) during phase 1.
                out_specs=pl.BlockSpec((tile, cout_p), lambda p, i: (i * p, 0)),
                scratch_shapes=[pltpu.VMEM((num_tiles, tile, ncol), jnp.float32),
                                pltpu.VMEM((8, ncol), jnp.float32)]),
            compiler_params=cparams,
            cost_estimate=cost,
        )(patches, w_comb, gb)
    else:
        # ---- two-pass fallback: exact global BN at any size -----------------
        cparams = pltpu.CompilerParams(
            dimension_semantics=("parallel",),
            vmem_limit_bytes=min(int(w_bytes + tile * stream_per_row)
                                 + 16 * 2**20, 48 * 2**20))
        kernel1 = functools.partial(_conv_stats_kernel, cout_p=cout_p,
                                    split_matmul=split_matmul)
        # TODO(synk): for very large shapes the f32 intermediates could be
        # stored in bf16 to halve inter-pass traffic (precision caveat).
        conv_f, stats = pl.pallas_call(
            kernel1,
            out_shape=(jax.ShapeDtypeStruct((rows_p, ncol), jnp.float32),
                       jax.ShapeDtypeStruct((num_tiles * 8, ncol), jnp.float32)),
            grid_spec=pltpu.PrefetchScalarGridSpec(
                num_scalar_prefetch=0,
                grid=(num_tiles,),
                in_specs=[pl.BlockSpec((tile, k3), lambda i: (i, 0)),
                          pl.BlockSpec((k3, ncol), lambda i: (0, 0))],
                out_specs=[pl.BlockSpec((tile, ncol), lambda i: (i, 0)),
                           pl.BlockSpec((8, ncol), lambda i: (i, 0))]),
            compiler_params=cparams,
        )(patches, w_comb)

        stat = stats.reshape(num_tiles, 8, ncol)[:, :2, :].sum(axis=0)
        mean = stat[0] * inv_n
        var = jnp.maximum(stat[1] * inv_n - mean * mean, 0.0)
        scale = g_comb * lax.rsqrt(var + BN_EPS)
        shift = b_comb - mean * scale
        ss = jnp.zeros((8, ncol), jnp.float32).at[0].set(scale).at[1].set(shift)

        kernel2 = functools.partial(_bn_apply_kernel, cout_p=cout_p)
        out_flat = pl.pallas_call(
            kernel2,
            out_shape=jax.ShapeDtypeStruct((rows_p, cout_p), out_dtype),
            grid_spec=pltpu.PrefetchScalarGridSpec(
                num_scalar_prefetch=0,
                grid=(num_tiles,),
                in_specs=[pl.BlockSpec((tile, ncol), lambda i: (i, 0)),
                          pl.BlockSpec((8, ncol), lambda i: (0, 0))],
                out_specs=pl.BlockSpec((tile, cout_p), lambda i: (i, 0))),
            compiler_params=cparams,
        )(conv_f, ss)

    return out_flat[:rows, :Cout].reshape(N, Ho, Wo, Cout)


# ---------------------------------------------------------------------------
# Pure-JAX reference mirroring the PyTorch module (training-mode BN), NHWC.
# Inputs are rounded to the kernel's compute dtype so both sides see the same
# operands; accumulation / BN math stays f32 on both sides.
# ---------------------------------------------------------------------------
def _reference_forward_nhwc(x, w3_oihw, w1_oihw, g_m, b_m, g_s, b_s,
                            stride=2, compute_dtype=jnp.bfloat16):
    xr = x.astype(compute_dtype).astype(jnp.float32)
    w3r = jnp.transpose(w3_oihw, (2, 3, 1, 0)).astype(compute_dtype).astype(jnp.float32)
    w1r = jnp.transpose(w1_oihw, (2, 3, 1, 0)).astype(compute_dtype).astype(jnp.float32)

    def bn_train(y, g, b):
        mu = jnp.mean(y, axis=(0, 1, 2), keepdims=True)
        var = jnp.mean((y - mu) ** 2, axis=(0, 1, 2), keepdims=True)
        return (g.reshape(1, 1, 1, -1) * (y - mu) * lax.rsqrt(var + BN_EPS)
                + b.reshape(1, 1, 1, -1))

    conv = lax.conv_general_dilated(
        xr, w3r, (stride, stride), [(1, 1), (1, 1)],
        dimension_numbers=('NHWC', 'HWIO', 'NHWC'),
        precision=lax.Precision.HIGHEST)
    main = jnp.maximum(bn_train(conv, g_m, b_m), 0.0)
    sc = lax.conv_general_dilated(
        xr, w1r, (stride, stride), [(0, 0), (0, 0)],
        dimension_numbers=('NHWC', 'HWIO', 'NHWC'),
        precision=lax.Precision.HIGHEST)
    short = bn_train(sc, g_s, b_s)
    return jnp.maximum(main + short, 0.0)


if __name__ == "__main__":
    fwd = jax.jit(block_res_forward_nhwc,
                  static_argnames=("stride", "tile_rows", "compute_dtype",
                                   "out_dtype", "force_two_pass"))

    def run_case(N, Cin, Cout, H, W, seed, tile_rows=1024,
                 out_dtype=jnp.float32, force_two_pass=False,
                 atol=1e-3, rtol=1e-3):
        key = jax.random.PRNGKey(seed)
        kx, k3w, k1w = jax.random.split(key, 3)
        x = jax.random.normal(kx, (N, H, W, Cin), dtype=jnp.float32)
        # PyTorch init: Conv weight ~ N(0, sqrt(2 / (kh*kw*out_channels))).
        w3 = jax.random.normal(k3w, (Cout, Cin, 3, 3), dtype=jnp.float32) \
            * np.sqrt(2.0 / (3 * 3 * Cout))
        w1 = jax.random.normal(k1w, (Cout, Cin, 1, 1), dtype=jnp.float32) \
            * np.sqrt(2.0 / (1 * 1 * Cout))
        # BatchNorm: weight=1, bias=0.
        gm = jnp.ones((Cout,), jnp.float32)
        bm = jnp.zeros((Cout,), jnp.float32)
        gs = jnp.ones((Cout,), jnp.float32)
        bs = jnp.zeros((Cout,), jnp.float32)

        out = fwd(x, w3, w1, gm, bm, gs, bs, tile_rows=tile_rows,
                  out_dtype=out_dtype, force_two_pass=force_two_pass)
        out = jax.block_until_ready(out)
        ref = _reference_forward_nhwc(x, w3, w1, gm, bm, gs, bs)
        np.testing.assert_allclose(np.asarray(out.astype(jnp.float32)),
                                   np.asarray(ref), rtol=rtol, atol=atol)

    # Group_2 configuration (Block_res(128,128), stride 2): fused single-call
    # path, two row tiles -> exercises cross-tile BN stats in VMEM scratch.
    run_case(N=2, Cin=128, Cout=128, H=32, W=32, seed=0, tile_rows=256)
    # Small-channel case exercising the Cin/Cout padding paths.
    run_case(N=2, Cin=4, Cout=8, H=16, W=16, seed=1)
    # Two-pass fallback path (taken automatically for shapes whose conv
    # outputs do not fit VMEM; forced here for coverage).
    run_case(N=2, Cin=128, Cout=128, H=32, W=32, seed=2, tile_rows=256,
             force_two_pass=True)
    # bf16 output for bf16-consuming downstream Group_2 stages.
    run_case(N=2, Cin=128, Cout=128, H=32, W=32, seed=3, tile_rows=256,
             out_dtype=jnp.bfloat16, atol=5e-2, rtol=3e-2)

    print("KERNEL_OK")
</pallas_src>

<mosaic_0001>
module attributes {stable_mosaic.version = 11 : i64} {
  func.func @_fused_block_res_kernel(%arg0: i32, %arg1: i32, %arg2: memref<256x1152xbf16, #tpu.memory_space<vmem>>, %arg3: memref<1152x256xbf16, #tpu.memory_space<vmem>>, %arg4: memref<8x256xf32, #tpu.memory_space<vmem>>, %arg5: memref<256x128xf32, #tpu.memory_space<vmem>>, %arg6: memref<2x256x256xf32, #tpu.memory_space<vmem>>, %arg7: memref<8x256xf32, #tpu.memory_space<vmem>>) attributes {dimension_semantics = [#tpu.dimension_semantics<arbitrary>, #tpu.dimension_semantics<arbitrary>], iteration_bounds = array<i64: 2, 2>, scalar_prefetch = 0 : i64, scratch_operands = 2 : i64, tpu.core_type = #tpu.core_type<tc>, window_params = [{transform_indices = @transform_0, window_bounds = array<i64: 256, 1152>}, {pipeline_mode = #tpu.pipeline_mode<synchronous>, transform_indices = @transform_1, window_bounds = array<i64: 1152, 256>}, {pipeline_mode = #tpu.pipeline_mode<synchronous>, transform_indices = @transform_2, window_bounds = array<i64: 8, 256>}, {transform_indices = @transform_3, window_bounds = array<i64: 256, 128>}]} {
    %c0_i32 = arith.constant 0 : i32
    %0 = arith.cmpi eq, %arg0, %c0_i32 : i32
    %1 = arith.extui %0 : i1 to i32
    %c0_i32_0 = arith.constant 0 : i32
    %2 = arith.cmpi ne, %1, %c0_i32_0 : i32
    scf.if %2 {
      %c0_i32_5 = arith.constant 0 : i32
      %11 = arith.cmpi eq, %arg1, %c0_i32_5 : i32
      %12 = arith.extui %11 : i1 to i32
      %c0_i32_6 = arith.constant 0 : i32
      %13 = arith.cmpi ne, %12, %c0_i32_6 : i32
      scf.if %13 {
        %cst_22 = arith.constant 0.000000e+00 : f32
        %36 = vector.broadcast %cst_22 : f32 to vector<8x256xf32>
        %c0_23 = arith.constant 0 : index
        %c0_24 = arith.constant 0 : index
        %37 = vector.load %arg7[%c0_23, %c0_24] : memref<8x256xf32, #tpu.memory_space<vmem>>, vector<8x256xf32>
        tpu.vector_store %arg7[%c0_23, %c0_24], %36 {strides = array<i32>} : memref<8x256xf32, #tpu.memory_space<vmem>>, vector<8x256xf32>,
      } else {
      }
      %c0 = arith.constant 0 : index
      %c0_7 = arith.constant 0 : index
      %14 = vector.load %arg2[%c0, %c0_7] : memref<256x1152xbf16, #tpu.memory_space<vmem>>, vector<256x1152xbf16>
      %c0_8 = arith.constant 0 : index
      %c0_9 = arith.constant 0 : index
      %15 = vector.load %arg3[%c0_8, %c0_9] : memref<1152x256xbf16, #tpu.memory_space<vmem>>, vector<1152x256xbf16>
      %16 = vector.extract_strided_slice %15 {offsets = [0, 0], sizes = [1152, 128], strides = [1, 1]} : vector<1152x256xbf16> to vector<1152x128xbf16>
      %cst = arith.constant dense<0.000000e+00> : vector<256x128xf32>
      %17 = tpu.matmul %14, %16, %cst {dimension_numbers = #tpu.dot_dimension_numbers<[1], [0], [0], [1], [0, 0, 1, 1], [], []>} : vector<256x1152xbf16>, vector<1152x128xbf16>, vector<256x128xf32> -> vector<256x128xf32>
      %18 = vector.extract_strided_slice %15 {offsets = [0, 128], sizes = [1152, 128], strides = [1, 1]} : vector<1152x256xbf16> to vector<1152x128xbf16>
      %cst_10 = arith.constant dense<0.000000e+00> : vector<256x128xf32>
      %19 = tpu.matmul %14, %18, %cst_10 {dimension_numbers = #tpu.dot_dimension_numbers<[1], [0], [0], [1], [0, 0, 1, 1], [], []>} : vector<256x1152xbf16>, vector<1152x128xbf16>, vector<256x128xf32> -> vector<256x128xf32>
      %20 = tpu.concatenate %17, %19 in 1 : vector<256x128xf32>, vector<256x128xf32> -> vector<256x256xf32>
      %21 = arith.index_cast %arg1 : i32 to index
      %c0_11 = arith.constant 0 : index
      %c0_12 = arith.constant 0 : index
      %22 = vector.load %arg6[%21, %c0_11, %c0_12] : memref<2x256x256xf32, #tpu.memory_space<vmem>>, vector<1x256x256xf32>
      %23 = vector.shape_cast %22 : vector<1x256x256xf32> to vector<256x256xf32>
      %24 = vector.shape_cast %20 : vector<256x256xf32> to vector<1x256x256xf32>
      tpu.vector_store %arg6[%21, %c0_11, %c0_12], %24 {strides = array<i32>} : memref<2x256x256xf32, #tpu.memory_space<vmem>>, vector<1x256x256xf32>,
      %c0_13 = arith.constant 0 : index
      %c0_14 = arith.constant 0 : index
      %25 = vector.load %arg7[%c0_13, %c0_14] : memref<8x256xf32, #tpu.memory_space<vmem>>, vector<1x256xf32>
      %cst_15 = arith.constant dense<0.000000e+00> : vector<256xf32>
      %26 = vector.multi_reduction <add>, %20, %cst_15 [0] : vector<256x256xf32> to vector<256xf32>
      %27 = vector.shape_cast %26 : vector<256xf32> to vector<1x256xf32>
      %28 = arith.addf %25, %27 : vector<1x256xf32>
      %c0_16 = arith.constant 0 : index
      %c0_17 = arith.constant 0 : index
      %29 = vector.load %arg7[%c0_16, %c0_17] : memref<8x256xf32, #tpu.memory_space<vmem>>, vector<1x256xf32>
      tpu.vector_store %arg7[%c0_16, %c0_17], %28 {strides = array<i32>} : memref<8x256xf32, #tpu.memory_space<vmem>>, vector<1x256xf32>,
      %c1 = arith.constant 1 : index
      %c0_18 = arith.constant 0 : index
      %30 = vector.load %arg7[%c1, %c0_18] : memref<8x256xf32, #tpu.memory_space<vmem>>, vector<1x256xf32>
      %31 = arith.mulf %20, %20 : vector<256x256xf32>
      %cst_19 = arith.constant dense<0.000000e+00> : vector<256xf32>
      %32 = vector.multi_reduction <add>, %31, %cst_19 [0] : vector<256x256xf32> to vector<256xf32>
      %33 = vector.shape_cast %32 : vector<256xf32> to vector<1x256xf32>
      %34 = arith.addf %30, %33 : vector<1x256xf32>
      %c1_20 = arith.constant 1 : index
      %c0_21 = arith.constant 0 : index
      %35 = vector.load %arg7[%c1_20, %c0_21] : memref<8x256xf32, #tpu.memory_space<vmem>>, vector<1x256xf32>
      tpu.vector_store %arg7[%c1_20, %c0_21], %34 {strides = array<i32>} : memref<8x256xf32, #tpu.memory_space<vmem>>, vector<1x256xf32>,
    } else {
    }
    %c1_i32 = arith.constant 1 : i32
    %3 = arith.cmpi eq, %arg0, %c1_i32 : i32
    %c0_i32_1 = arith.constant 0 : i32
    %4 = arith.cmpi eq, %arg1, %c0_i32_1 : i32
    %5 = arith.andi %3, %4 : i1
    %6 = arith.extui %5 : i1 to i32
    %c0_i32_2 = arith.constant 0 : i32
    %7 = arith.cmpi ne, %6, %c0_i32_2 : i32
    scf.if %7 {
      %c0 = arith.constant 0 : index
      %c0_5 = arith.constant 0 : index
      %11 = vector.load %arg7[%c0, %c0_5] : memref<8x256xf32, #tpu.memory_space<vmem>>, vector<1x256xf32>
      %cst = arith.constant 0.001953125 : f32
      %12 = vector.broadcast %cst : f32 to vector<1x256xf32>
      %13 = arith.mulf %11, %12 : vector<1x256xf32>
      %c1 = arith.constant 1 : index
      %c0_6 = arith.constant 0 : index
      %14 = vector.load %arg7[%c1, %c0_6] : memref<8x256xf32, #tpu.memory_space<vmem>>, vector<1x256xf32>
      %cst_7 = arith.constant 0.001953125 : f32
      %15 = vector.broadcast %cst_7 : f32 to vector<1x256xf32>
      %16 = arith.mulf %14, %15 : vector<1x256xf32>
      %17 = arith.mulf %13, %13 : vector<1x256xf32>
      %18 = arith.subf %16, %17 : vector<1x256xf32>
      %cst_8 = arith.constant 0.000000e+00 : f32
      %19 = vector.broadcast %cst_8 : f32 to vector<1x256xf32>
      %20 = arith.maximumf %18, %19 : vector<1x256xf32>
      %c0_9 = arith.constant 0 : index
      %c0_10 = arith.constant 0 : index
      %21 = vector.load %arg4[%c0_9, %c0_10] : memref<8x256xf32, #tpu.memory_space<vmem>>, vector<1x256xf32>
      %cst_11 = arith.constant 9.99999974E-6 : f32
      %22 = vector.broadcast %cst_11 : f32 to vector<1x256xf32>
      %23 = arith.addf %20, %22 : vector<1x256xf32>
      %24 = math.rsqrt %23 : vector<1x256xf32>
      %25 = arith.mulf %21, %24 : vector<1x256xf32>
      %c2 = arith.constant 2 : index
      %c0_12 = arith.constant 0 : index
      %26 = vector.load %arg7[%c2, %c0_12] : memref<8x256xf32, #tpu.memory_space<vmem>>, vector<1x256xf32>
      tpu.vector_store %arg7[%c2, %c0_12], %25 {strides = array<i32>} : memref<8x256xf32, #tpu.memory_space<vmem>>, vector<1x256xf32>,
      %c1_13 = arith.constant 1 : index
      %c0_14 = arith.constant 0 : index
      %27 = vector.load %arg4[%c1_13, %c0_14] : memref<8x256xf32, #tpu.memory_space<vmem>>, vector<1x256xf32>
      %28 = arith.mulf %13, %25 : vector<1x256xf32>
      %29 = arith.subf %27, %28 : vector<1x256xf32>
      %c3 = arith.constant 3 : index
      %c0_15 = arith.constant 0 : index
      %30 = vector.load %arg7[%c3, %c0_15] : memref<8x256xf32, #tpu.memory_space<vmem>>, vector<1x256xf32>
      tpu.vector_store %arg7[%c3, %c0_15], %29 {strides = array<i32>} : memref<8x256xf32, #tpu.memory_space<vmem>>, vector<1x256xf32>,
    } else {
    }
    %c1_i32_3 = arith.constant 1 : i32
    %8 = arith.cmpi eq, %arg0, %c1_i32_3 : i32
    %9 = arith.extui %8 : i1 to i32
    %c0_i32_4 = arith.constant 0 : i32
    %10 = arith.cmpi ne, %9, %c0_i32_4 : i32
    scf.if %10 {
      %11 = arith.index_cast %arg1 : i32 to index
      %c0 = arith.constant 0 : index
      %c0_5 = arith.constant 0 : index
      %12 = vector.load %arg6[%11, %c0, %c0_5] : memref<2x256x256xf32, #tpu.memory_space<vmem>>, vector<1x256x256xf32>
      %13 = vector.shape_cast %12 : vector<1x256x256xf32> to vector<256x256xf32>
      %c2 = arith.constant 2 : index
      %c0_6 = arith.constant 0 : index
      %14 = vector.load %arg7[%c2, %c0_6] : memref<8x256xf32, #tpu.memory_space<vmem>>, vector<1x256xf32>
      %15 = vector.broadcast %14 : vector<1x256xf32> to vector<256x256xf32>
      %16 = arith.mulf %13, %15 : vector<256x256xf32>
      %c3 = arith.constant 3 : index
      %c0_7 = arith.constant 0 : index
      %17 = vector.load %arg7[%c3, %c0_7] : memref<8x256xf32, #tpu.memory_space<vmem>>, vector<1x256xf32>
      %18 = vector.broadcast %17 : vector<1x256xf32> to vector<256x256xf32>
      %19 = arith.addf %16, %18 : vector<256x256xf32>
      %20 = vector.extract_strided_slice %19 {offsets = [0, 0], sizes = [256, 128], strides = [1, 1]} : vector<256x256xf32> to vector<256x128xf32>
      %cst = arith.constant 0.000000e+00 : f32
      %21 = vector.broadcast %cst : f32 to vector<256x128xf32>
      %22 = arith.maximumf %20, %21 : vector<256x128xf32>
      %23 = vector.extract_strided_slice %19 {offsets = [0, 128], sizes = [256, 128], strides = [1, 1]} : vector<256x256xf32> to vector<256x128xf32>
      %24 = arith.addf %22, %23 : vector<256x128xf32>
      %cst_8 = arith.constant 0.000000e+00 : f32
      %25 = vector.broadcast %cst_8 : f32 to vector<256x128xf32>
      %26 = arith.maximumf %24, %25 : vector<256x128xf32>
      %c0_9 = arith.constant 0 : index
      %c0_10 = arith.constant 0 : index
      %27 = vector.load %arg5[%c0_9, %c0_10] : memref<256x128xf32, #tpu.memory_space<vmem>>, vector<256x128xf32>
      tpu.vector_store %arg5[%c0_9, %c0_10], %26 {strides = array<i32>} : memref<256x128xf32, #tpu.memory_space<vmem>>, vector<256x128xf32>,
    } else {
    }
    return
  }
  func.func @transform_0(%arg0: i32, %arg1: i32) -> (i32, i32) {
    %c1_i32 = arith.constant 1 : i32
    %0 = arith.subi %c1_i32, %arg0 : i32
    %1 = arith.muli %arg1, %0 : i32
    %c1_i32_0 = arith.constant 1 : i32
    %2 = arith.muli %c1_i32_0, %arg0 : i32
    %3 = arith.addi %1, %2 : i32
    %c0_i32 = arith.constant 0 : i32
    %c0_i32_1 = arith.constant 0 : i32
    return %3, %c0_i32 : i32, i32
  }
  func.func @transform_1(%arg0: i32, %arg1: i32) -> (i32, i32) {
    %c0_i32 = arith.constant 0 : i32
    %c0_i32_0 = arith.constant 0 : i32
    %c0_i32_1 = arith.constant 0 : i32
    return %c0_i32, %c0_i32_0 : i32, i32
  }
  func.func @transform_2(%arg0: i32, %arg1: i32) -> (i32, i32) {
    %c0_i32 = arith.constant 0 : i32
    %c0_i32_0 = arith.constant 0 : i32
    %c0_i32_1 = arith.constant 0 : i32
    return %c0_i32, %c0_i32_0 : i32, i32
  }
  func.func @transform_3(%arg0: i32, %arg1: i32) -> (i32, i32) {
    %0 = arith.muli %arg1, %arg0 : i32
    %c0_i32 = arith.constant 0 : i32
    %c0_i32_0 = arith.constant 0 : i32
    return %0, %c0_i32 : i32, i32
  }
}

</mosaic_0001>

<llo_original>
// kernel: block_res_forward_nhwc.1
$region0: #{block_res_forward_nhwc.1}
  #allocation0 [shape = 'u32[]', space=smem, size = 0x4, offset = 0x4, fixed_abs, tag = 'smem constant byte address 0x4 - core index']
  #allocation1 [shape = 'u32[144,128]{1,0:T(1,128)}', space=vmem, size = 0x12000, scoped, tag = 'internal scratch']
  #allocation2 [shape = 'f32[2,256,256]{2,1,0:T(8,128)}', space=vmem, size = 0x80000, scoped, tag = 'scratch operand']
  #allocation3 [shape = 'f32[8,256]{1,0:T(8,128)}', space=vmem, size = 0x2000, scoped, tag = 'scratch operand']
  %s0 = inlined_call_operand.vmem [shape: bf16[512,1152], index: 0, kind: input, shape index: {}]
  %s1 = inlined_call_operand.vmem [shape: bf16[1152,256], index: 1, kind: input, shape index: {}]
  %s2 = inlined_call_operand.vmem [shape: f32[8,256], index: 2, kind: input, shape index: {}]
  %s3 = inlined_call_operand.hbm [shape: f32[512,128], index: 3, kind: output, shape index: {}]
  %s4 = sld [smem:[#allocation0]]
  $region61: #{block_res_forward_nhwc.1} parent=0
    _
  %s6 = ssub.s32 1, %s4
  %s7 = scalar_select 0, %s6, %s4
  $region1: #{block_res_forward_nhwc.1} parent=0
    #allocation4 [shape = 'u8[262144]{0}', space=vmem, size = 0x40000, scoped, tag = 'output window, operand 0']
    #allocation5 [shape = 's32[2]{0}', space=sflag, size = 0x8, scoped, tag = 'scoped memory for block_res_forward_nhwc.1']
    %8 = vsyncpa [#allocation5], 0
    %s9 = scalar_lea.sflag [#allocation5], 1
    %10 = vsyncpa %s9, 0
    loop: start=0, step=1, limit=6
    $region2: #{block_res_forward_nhwc.1} parent=1 // loop_pre_header
      _
    $region3: #{block_res_forward_nhwc.1} parent=1 // loop_header
      %s12 = sphi 0, %s16
      %p13 = scmp.ge.s32.totalorder %s12, 6
      %s19 = sphi 0, %s31
      %s20 = sphi 0, %s27
      %s21 = sphi 0, %s19
      %s22 = sphi 0, %s20
      %s23 = sphi 0, %s21
      %s24 = sphi 0, %s22
      %s40 = sphi 0, %s42
      %s43 = sphi 0, %s40
      %s44 = sphi 0, %s43
      %s60 = sphi 0, %s44
      %s64 = sphi 0, %s64
      %s66 = sphi 0, %s64
      %s67 = sphi 0, %s66
      %s81 = sphi 0, %s67
      %s85 = sphi 0, %s85
      %s87 = sphi 0, %s85
      %s88 = sphi 0, %s87
      %s102 = sphi 0, %s88
      %s110 = sphi 0, %s112
      %s113 = sphi 0, %s110
      %s114 = sphi 0, %s113
      %s130 = sphi 0, %s114
    $region4: #{block_res_forward_nhwc.1} parent=1 // loop_header_branch
      %15 = sbr.rel (%p13) target = $region8
    $region5: #{block_res_forward_nhwc.1} parent=1 // loop_body
      %s17 = ssub.s32 %s12, 1
      %s18 = ssub.s32 %s12, 2
      %s25 = sadd.s32 1, %s20
      %p26 = scmp.ge.s32.totalorder %s25, 2
      %s27 = scalar_select %p26, 0, %s25
      %s28 = sadd.s32 1, %s19
      %s29 = scalar_select %p26, %s28, %s19
      %p30 = scmp.ge.s32.totalorder %s29, 2
      %s31 = scalar_select %p30, 0, %s29
      %s32 = ssub.s32 1, %s19
      %s33 = smul.u32 %s20, %s32
      %s34 = sadd.s32 %s33, %s19
      %s35 = ssub.s32 1, %s31
      %s36 = smul.u32 %s27, %s35
      %s37 = sadd.s32 %s36, %s31
      %s38 = ssub.s32 %s34, %s37
      %p39 = scmp.eq.s32.totalorder %s38, 0
      %s41 = sadd.s32 %s40, 1
      %s42 = scalar_select %p39, %s40, %s41
      %p45 = pneg %p39
      %p46 = scmp.eq.s32.totalorder %s12, 3
      %p47 = por %p45, %p46
      %p48 = scmp.ne.s32.totalorder %s40, %s43
      %p49 = scmp.eq.s32.totalorder %s12, 0
      %p50 = por %p48, %p49
      %p51 = scmp.ne.s32.totalorder %s40, %s43
      %p52 = scmp.eq.s32.totalorder %s17, 3
      %p53 = por %p51, %p52
      %p54 = scmp.ne.s32.totalorder %s43, %s44
      %p55 = scmp.eq.s32.totalorder %s17, 0
      %p56 = por %p54, %p55
      %p57 = scmp.ne.s32.totalorder %s43, %s44
      %p58 = scmp.eq.s32.totalorder %s18, 3
      %p59 = por %p57, %p58
      %p61 = scmp.ne.s32.totalorder %s44, %s60
      %p62 = scmp.eq.s32.totalorder %s18, 0
      %p63 = por %p61, %p62
      %s65 = sadd.s32 %s64, 1
      %p68 = scmp.eq.s32.totalorder %s12, 3
      %p69 = scmp.ne.s32.totalorder %s64, %s66
      %p70 = scmp.eq.s32.totalorder %s12, 0
      %p71 = por %p69, %p70
      %p72 = scmp.ne.s32.totalorder %s64, %s66
      %p73 = scmp.eq.s32.totalorder %s17, 3
      %p74 = por %p72, %p73
      %p75 = scmp.ne.s32.totalorder %s66, %s67
      %p76 = scmp.eq.s32.totalorder %s17, 0
      %p77 = por %p75, %p76
      %p78 = scmp.ne.s32.totalorder %s66, %s67
      %p79 = scmp.eq.s32.totalorder %s18, 3
      %p80 = por %p78, %p79
      %p82 = scmp.ne.s32.totalorder %s67, %s81
      %p83 = scmp.eq.s32.totalorder %s18, 0
      %p84 = por %p82, %p83
      %s86 = sadd.s32 %s85, 1
      %p89 = scmp.eq.s32.totalorder %s12, 3
      %p90 = scmp.ne.s32.totalorder %s85, %s87
      %p91 = scmp.eq.s32.totalorder %s12, 0
      %p92 = por %p90, %p91
      %p93 = scmp.ne.s32.totalorder %s85, %s87
      %p94 = scmp.eq.s32.totalorder %s17, 3
      %p95 = por %p93, %p94
      %p96 = scmp.ne.s32.totalorder %s87, %s88
      %p97 = scmp.eq.s32.totalorder %s17, 0
      %p98 = por %p96, %p97
      %p99 = scmp.ne.s32.totalorder %s87, %s88
      %p100 = scmp.eq.s32.totalorder %s18, 3
      %p101 = por %p99, %p100
      %p103 = scmp.ne.s32.totalorder %s88, %s102
      %p104 = scmp.eq.s32.totalorder %s18, 0
      %p105 = por %p103, %p104
      %s106 = smul.u32 %s20, %s19
      %s107 = smul.u32 %s27, %s31
      %s108 = ssub.s32 %s106, %s107
      %p109 = scmp.eq.s32.totalorder %s108, 0
      %s111 = sadd.s32 %s110, 1
      %s112 = scalar_select %p109, %s110, %s111
      %p115 = pneg %p109
      %p116 = scmp.eq.s32.totalorder %s12, 3
      %p117 = por %p115, %p116
      %p118 = scmp.ne.s32.totalorder %s110, %s113
      %p119 = scmp.eq.s32.totalorder %s12, 0
      %p120 = por %p118, %p119
      %p121 = scmp.ne.s32.totalorder %s110, %s113
      %p122 = scmp.eq.s32.totalorder %s17, 3
      %p123 = por %p121, %p122
      %p124 = scmp.ne.s32.totalorder %s113, %s114
      %p125 = scmp.eq.s32.totalorder %s17, 0
      %p126 = por %p124, %p125
      %p127 = scmp.ne.s32.totalorder %s113, %s114
      %p128 = scmp.eq.s32.totalorder %s18, 3
      %p129 = por %p127, %p128
      %p131 = scmp.ne.s32.totalorder %s114, %s130
      %p132 = scmp.eq.s32.totalorder %s18, 0
      %p133 = por %p131, %p132
      %p134 = scmp.le.s32.totalorder 1, %s12
      %p135 = scmp.lt.s32.totalorder %s12, 5
      %p136 = pnand %p134, %p135
      %p137 = pneg %p136
      // Predicated region
      $region9: #{block_res_forward_nhwc.1} parent=5 // pred_check
        _
      $region10: #{block_res_forward_nhwc.1} parent=5 // pred_check_branch
        %139 = sbr.rel (%p136) target = $region12
      $region11: #{block_res_forward_nhwc.1} parent=5 // pred_region
        %s140 = ssub.s32 %s12, 1
        // Predicated region
        $region13: #{block_res_forward_nhwc.1} parent=11 // pred_check
          %p141 = pneg %p77
        $region14: #{block_res_forward_nhwc.1} parent=11 // pred_check_branch
          %143 = sbr.rel (%p141) target = $region16
        $region15: #{block_res_forward_nhwc.1} parent=11 // pred_region
          _
        $region16: #{block_res_forward_nhwc.1} parent=11 // pred_fallthru
          _
        // Predicated region
        $region17: #{block_res_forward_nhwc.1} parent=11 // pred_check
          %p144 = pneg %p98
        $region18: #{block_res_forward_nhwc.1} parent=11 // pred_check_branch
          %146 = sbr.rel (%p144) target = $region20
        $region19: #{block_res_forward_nhwc.1} parent=11 // pred_region
          _
        $region20: #{block_res_forward_nhwc.1} parent=11 // pred_fallthru
          _
      $region12: #{block_res_forward_nhwc.1} parent=5 // pred_fallthru
        _
      %p147 = scmp.lt.s32.totalorder %s12, 4
      // Predicated region
      $region21: #{block_res_forward_nhwc.1} parent=5 // pred_check
        %p148 = pneg %p147
      $region22: #{block_res_forward_nhwc.1} parent=5 // pred_check_branch
        %150 = sbr.rel (%p148) target = $region24
      $region23: #{block_res_forward_nhwc.1} parent=5 // pred_region
        // Predicated region
        $region25: #{block_res_forward_nhwc.1} parent=23 // pred_check
          %p151 = pneg %p50
        $region26: #{block_res_forward_nhwc.1} parent=23 // pred_check_branch
          %153 = sbr.rel (%p151) target = $region28
        $region27: #{block_res_forward_nhwc.1} parent=23 // pred_region
          %s154 = ssub.s32 1, %s19
          %s155 = smul.u32 %s20, %s154
          %s156 = sadd.s32 %s155, %s19
          %s157 = smul.u32 32, %s156
          %p158 = scmp.lt.s32.totalorder %s157, 63
          %s159 = scalar_select %p158, %s157, 63
          %s160 = smul.addr %s159, 9
          %s161 = smul.addr %s160, 4
          %s162 = scalar_lea.vmem %s0, %s161
          %s163 = ssub.s32 1, %s19
          %s164 = smul.u32 %s20, %s163
          %s165 = sadd.s32 %s164, %s19
          %s166 = smul.u32 32, %s165
        $region28: #{block_res_forward_nhwc.1} parent=23 // pred_fallthru
          _
      $region24: #{block_res_forward_nhwc.1} parent=5 // pred_fallthru
        _
      %p167 = scmp.le.s32.totalorder 1, %s12
      %p168 = scmp.lt.s32.totalorder %s12, 5
      %p169 = pnand %p167, %p168
      %p170 = pneg %p169
      // Predicated region
      $region29: #{block_res_forward_nhwc.1} parent=5 // pred_check
        _
      $region30: #{block_res_forward_nhwc.1} parent=5 // pred_check_branch
        %172 = sbr.rel (%p169) target = $region32
      $region31: #{block_res_forward_nhwc.1} parent=5 // pred_region
        %s173 = ssub.s32 %s12, 1
        %s174 = ssub.s32 1, %s21
        %s175 = smul.u32 %s22, %s174
        %s176 = sadd.s32 %s175, %s21
        %s177 = smul.u32 32, %s176
        %p178 = scmp.lt.s32.totalorder %s177, 63
        %s179 = scalar_select %p178, %s177, 63
        %s180 = smul.addr %s179, 9
        %s181 = smul.addr %s180, 4
        %s182 = scalar_lea.vmem %s0, %s181
        %p183 = pneg %p56
        %p184 = pneg %p53
        %p185 = pneg %p77
        %p186 = pneg %p74
        %p187 = pneg %p98
        %p188 = pneg %p95
        %p189 = pneg %p126
        %p190 = pneg %p123
        %s191 = sand.u32 %s113, 1
        %s192 = scalar_lea.sflag [#allocation5], %s191
        %s193 = sand.u32 %s113, 1
        %s194 = smul.addr %s193, 256
        %s195 = scalar_lea.vmem [#allocation4], %s194
        %s196 = ssub.s32 1, %s21
        %s197 = smul.u32 %s22, %s196
        %s198 = sadd.s32 %s197, %s21
        %s199 = smul.u32 32, %s198
        %p200 = scmp.lt.s32.totalorder %s199, 63
        %s201 = scalar_select %p200, %s199, 63
        %s202 = smul.addr %s201, 9
        %s203 = smul.addr %s202, 4
        %s204 = scalar_lea.vmem %s0, %s203
        %s205 = ssub.s32 1, %s21
        %s206 = smul.u32 %s22, %s205
        %s207 = sadd.s32 %s206, %s21
        %s208 = smul.u32 32, %s207
        %s209 = smul.u32 %s22, %s21
        %s210 = smul.u32 32, %s209
        %p212 = scmp.eq.s32.totalorder %s21, 0
        // Predicated region
        $region33: #{block_res_forward_nhwc.1} parent=31 // pred_check
          %p213 = pneg %p212
        $region34: #{block_res_forward_nhwc.1} parent=31 // pred_check_branch
          %215 = sbr.rel (%p213) target = $region36
        $region35: #{block_res_forward_nhwc.1} parent=31 // pred_region
          %p216 = scmp.eq.s32.totalorder %s22, 0
          // Predicated region
          $region37: #{block_res_forward_nhwc.1} parent=35 // pred_check
            %p217 = pneg %p216
          $region38: #{block_res_forward_nhwc.1} parent=35 // pred_check_branch
            %219 = sbr.rel (%p217) target = $region40
          $region39: #{block_res_forward_nhwc.1} parent=35 // pred_region
            %220 = vst [vmem:[#allocation3] sm:$0xff] 0.0
            %221 = vst [vmem:[#allocation3 + $0x8] sm:$0xff] 0.0
          $region40: #{block_res_forward_nhwc.1} parent=35 // pred_fallthru
            _
          %v222 = vld [vmem:[%s204] sm:$0xff]
          %v223 = vld [vmem:[%s204 + $0x8] sm:$0xff]
          %v224 = vld [vmem:[%s204 + $0x10] sm:$0xff]
          %v225 = vld [vmem:[%s204 + $0x18] sm:$0xff]
          %v226 = vld [vmem:[%s204 + $0x20] sm:$0xf]
          %v227 = vld [vmem:[%s204 + $0x24] sm:$0xff]
          %v228 = vld [vmem:[%s204 + $0x2c] sm:$0xff]
          %v229 = vld [vmem:[%s204 + $0x34] sm:$0xff]
          %v230 = vld [vmem:[%s204 + $0x3c] sm:$0xff]
          %v231 = vld [vmem:[%s204 + $0x44] sm:$0xf]
          %v232 = vld [vmem:[%s204 + $0x48] sm:$0xff]
          %v233 = vld [vmem:[%s204 + $0x50] sm:$0xff]
          %v234 = vld [vmem:[%s204 + $0x58] sm:$0xff]
          %v235 = vld [vmem:[%s204 + $0x60] sm:$0xff]
          %v236 = vld [vmem:[%s204 + $0x68] sm:$0xf]
          %v237 = vld [vmem:[%s204 + $0x6c] sm:$0xff]
          %v238 = vld [vmem:[%s204 + $0x74] sm:$0xff]
          %v239 = vld [vmem:[%s204 + $0x7c] sm:$0xff]
          %v240 = vld [vmem:[%s204 + $0x84] sm:$0xff]
          %v241 = vld [vmem:[%s204 + $0x8c] sm:$0xf]
          %v242 = vld [vmem:[%s204 + $0x90] sm:$0xff]
          %v243 = vld [vmem:[%s204 + $0x98] sm:$0xff]
          %v244 = vld [vmem:[%s204 + $0xa0] sm:$0xff]
          %v245 = vld [vmem:[%s204 + $0xa8] sm:$0xff]
          %v246 = vld [vmem:[%s204 + $0xb0] sm:$0xf]
          %v247 = vld [vmem:[%s204 + $0xb4] sm:$0xff]
          %v248 = vld [vmem:[%s204 + $0xbc] sm:$0xff]
          %v249 = vld [vmem:[%s204 + $0xc4] sm:$0xff]
          %v250 = vld [vmem:[%s204 + $0xcc] sm:$0xff]
          %v251 = vld [vmem:[%s204 + $0xd4] sm:$0xf]
          %v252 = vld [vmem:[%s204 + $0xd8] sm:$0xff]
          %v253 = vld [vmem:[%s204 + $0xe0] sm:$0xff]
          %v254 = vld [vmem:[%s204 + $0xe8] sm:$0xff]
          %v255 = vld [vmem:[%s204 + $0xf0] sm:$0xff]
          %v256 = vld [vmem:[%s204 + $0xf8] sm:$0xf]
          %v257 = vld [vmem:[%s204 + $0xfc] sm:$0xff]
          %v258 = vld [vmem:[%s204 + $0x104] sm:$0xff]
          %v259 = vld [vmem:[%s204 + $0x10c] sm:$0xff]
          %v260 = vld [vmem:[%s204 + $0x114] sm:$0xff]
          %v261 = vld [vmem:[%s204 + $0x11c] sm:$0xf]
          %v262 = vld [vmem:[%s204 + $0x120] sm:$0xff]
          %v263 = vld [vmem:[%s204 + $0x128] sm:$0xff]
          %v264 = vld [vmem:[%s204 + $0x130] sm:$0xff]
          %v265 = vld [vmem:[%s204 + $0x138] sm:$0xff]
          %v266 = vld [vmem:[%s204 + $0x140] sm:$0xf]
          %v267 = vld [vmem:[%s204 + $0x144] sm:$0xff]
          %v268 = vld [vmem:[%s204 + $0x14c] sm:$0xff]
          %v269 = vld [vmem:[%s204 + $0x154] sm:$0xff]
          %v270 = vld [vmem:[%s204 + $0x15c] sm:$0xff]
          %v271 = vld [vmem:[%s204 + $0x164] sm:$0xf]
          %v272 = vld [vmem:[%s204 + $0x168] sm:$0xff]
          %v273 = vld [vmem:[%s204 + $0x170] sm:$0xff]
          %v274 = vld [vmem:[%s204 + $0x178] sm:$0xff]
          %v275 = vld [vmem:[%s204 + $0x180] sm:$0xff]
          %v276 = vld [vmem:[%s204 + $0x188] sm:$0xf]
          %v277 = vld [vmem:[%s204 + $0x18c] sm:$0xff]
          %v278 = vld [vmem:[%s204 + $0x194] sm:$0xff]
          %v279 = vld [vmem:[%s204 + $0x19c] sm:$0xff]
          %v280 = vld [vmem:[%s204 + $0x1a4] sm:$0xff]
          %v281 = vld [vmem:[%s204 + $0x1ac] sm:$0xf]
          %v282 = vld [vmem:[%s204 + $0x1b0] sm:$0xff]
          %v283 = vld [vmem:[%s204 + $0x1b8] sm:$0xff]
          %v284 = vld [vmem:[%s204 + $0x1c0] sm:$0xff]
          %v285 = vld [vmem:[%s204 + $0x1c8] sm:$0xff]
          %v286 = vld [vmem:[%s204 + $0x1d0] sm:$0xf]
          %v287 = vld [vmem:[%s204 + $0x1d4] sm:$0xff]
          %v288 = vld [vmem:[%s204 + $0x1dc] sm:$0xff]
          %v289 = vld [vmem:[%s204 + $0x1e4] sm:$0xff]
          %v290 = vld [vmem:[%s204 + $0x1ec] sm:$0xff]
          %v291 = vld [vmem:[%s204 + $0x1f4] sm:$0xf]
          %v292 = vld [vmem:[%s204 + $0x1f8] sm:$0xff]
          %v293 = vld [vmem:[%s204 + $0x200] sm:$0xff]
          %v294 = vld [vmem:[%s204 + $0x208] sm:$0xff]
          %v295 = vld [vmem:[%s204 + $0x210] sm:$0xff]
          %v296 = vld [vmem:[%s204 + $0x218] sm:$0xf]
          %v297 = vld [vmem:[%s204 + $0x21c] sm:$0xff]
          %v298 = vld [vmem:[%s204 + $0x224] sm:$0xff]
          %v299 = vld [vmem:[%s204 + $0x22c] sm:$0xff]
          %v300 = vld [vmem:[%s204 + $0x234] sm:$0xff]
          %v301 = vld [vmem:[%s204 + $0x23c] sm:$0xf]
          %v302 = vld [vmem:[%s204 + $0x240] sm:$0xff]
          %v303 = vld [vmem:[%s204 + $0x248] sm:$0xff]
          %v304 = vld [vmem:[%s204 + $0x250] sm:$0xff]
          %v305 = vld [vmem:[%s204 + $0x258] sm:$0xff]
          %v306 = vld [vmem:[%s204 + $0x260] sm:$0xf]
          %v307 = vld [vmem:[%s204 + $0x264] sm:$0xff]
          %v308 = vld [vmem:[%s204 + $0x26c] sm:$0xff]
          %v309 = vld [vmem:[%s204 + $0x274] sm:$0xff]
          %v310 = vld [vmem:[%s204 + $0x27c] sm:$0xff]
          %v311 = vld [vmem:[%s204 + $0x284] sm:$0xf]
          %v312 = vld [vmem:[%s204 + $0x288] sm:$0xff]
          %v313 = vld [vmem:[%s204 + $0x290] sm:$0xff]
          %v314 = vld [vmem:[%s204 + $0x298] sm:$0xff]
          %v315 = vld [vmem:[%s204 + $0x2a0] sm:$0xff]
          %v316 = vld [vmem:[%s204 + $0x2a8] sm:$0xf]
          %v317 = vld [vmem:[%s204 + $0x2ac] sm:$0xff]
          %v318 = vld [vmem:[%s204 + $0x2b4] sm:$0xff]
          %v319 = vld [vmem:[%s204 + $0x2bc] sm:$0xff]
          %v320 = vld [vmem:[%s204 + $0x2c4] sm:$0xff]
          %v321 = vld [vmem:[%s204 + $0x2cc] sm:$0xf]
          %v322 = vld [vmem:[%s204 + $0x2d0] sm:$0xff]
          %v323 = vld [vmem:[%s204 + $0x2d8] sm:$0xff]
          %v324 = vld [vmem:[%s204 + $0x2e0] sm:$0xff]
          %v325 = vld [vmem:[%s204 + $0x2e8] sm:$0xff]
          %v326 = vld [vmem:[%s204 + $0x2f0] sm:$0xf]
          %v327 = vld [vmem:[%s204 + $0x2f4] sm:$0xff]
          %v328 = vld [vmem:[%s204 + $0x2fc] sm:$0xff]
          %v329 = vld [vmem:[%s204 + $0x304] sm:$0xff]
          %v330 = vld [vmem:[%s204 + $0x30c] sm:$0xff]
          %v331 = vld [vmem:[%s204 + $0x314] sm:$0xf]
          %v332 = vld [vmem:[%s204 + $0x318] sm:$0xff]
          %v333 = vld [vmem:[%s204 + $0x320] sm:$0xff]
          %v334 = vld [vmem:[%s204 + $0x328] sm:$0xff]
          %v335 = vld [vmem:[%s204 + $0x330] sm:$0xff]
          %v336 = vld [vmem:[%s204 + $0x338] sm:$0xf]
          %v337 = vld [vmem:[%s204 + $0x33c] sm:$0xff]
          %v338 = vld [vmem:[%s204 + $0x344] sm:$0xff]
          %v339 = vld [vmem:[%s204 + $0x34c] sm:$0xff]
          %v340 = vld [vmem:[%s204 + $0x354] sm:$0xff]
          %v341 = vld [vmem:[%s204 + $0x35c] sm:$0xf]
          %v342 = vld [vmem:[%s204 + $0x360] sm:$0xff]
          %v343 = vld [vmem:[%s204 + $0x368] sm:$0xff]
          %v344 = vld [vmem:[%s204 + $0x370] sm:$0xff]
          %v345 = vld [vmem:[%s204 + $0x378] sm:$0xff]
          %v346 = vld [vmem:[%s204 + $0x380] sm:$0xf]
          %v347 = vld [vmem:[%s204 + $0x384] sm:$0xff]
          %v348 = vld [vmem:[%s204 + $0x38c] sm:$0xff]
          %v349 = vld [vmem:[%s204 + $0x394] sm:$0xff]
          %v350 = vld [vmem:[%s204 + $0x39c] sm:$0xff]
          %v351 = vld [vmem:[%s204 + $0x3a4] sm:$0xf]
          %v352 = vld [vmem:[%s204 + $0x3a8] sm:$0xff]
          %v353 = vld [vmem:[%s204 + $0x3b0] sm:$0xff]
          %v354 = vld [vmem:[%s204 + $0x3b8] sm:$0xff]
          %v355 = vld [vmem:[%s204 + $0x3c0] sm:$0xff]
          %v356 = vld [vmem:[%s204 + $0x3c8] sm:$0xf]
          %v357 = vld [vmem:[%s204 + $0x3cc] sm:$0xff]
          %v358 = vld [vmem:[%s204 + $0x3d4] sm:$0xff]
          %v359 = vld [vmem:[%s204 + $0x3dc] sm:$0xff]
          %v360 = vld [vmem:[%s204 + $0x3e4] sm:$0xff]
          %v361 = vld [vmem:[%s204 + $0x3ec] sm:$0xf]
          %v362 = vld [vmem:[%s204 + $0x3f0] sm:$0xff]
          %v363 = vld [vmem:[%s204 + $0x3f8] sm:$0xff]
          %v364 = vld [vmem:[%s204 + $0x400] sm:$0xff]
          %v365 = vld [vmem:[%s204 + $0x408] sm:$0xff]
          %v366 = vld [vmem:[%s204 + $0x410] sm:$0xf]
          %v367 = vld [vmem:[%s204 + $0x414] sm:$0xff]
          %v368 = vld [vmem:[%s204 + $0x41c] sm:$0xff]
          %v369 = vld [vmem:[%s204 + $0x424] sm:$0xff]
          %v370 = vld [vmem:[%s204 + $0x42c] sm:$0xff]
          %v371 = vld [vmem:[%s204 + $0x434] sm:$0xf]
          %v372 = vld [vmem:[%s204 + $0x438] sm:$0xff]
          %v373 = vld [vmem:[%s204 + $0x440] sm:$0xff]
          %v374 = vld [vmem:[%s204 + $0x448] sm:$0xff]
          %v375 = vld [vmem:[%s204 + $0x450] sm:$0xff]
          %v376 = vld [vmem:[%s204 + $0x458] sm:$0xf]
          %v377 = vld [vmem:[%s204 + $0x45c] sm:$0xff]
          %v378 = vld [vmem:[%s204 + $0x464] sm:$0xff]
          %v379 = vld [vmem:[%s204 + $0x46c] sm:$0xff]
          %v380 = vld [vmem:[%s204 + $0x474] sm:$0xff]
          %v381 = vld [vmem:[%s204 + $0x47c] sm:$0xf]
          %v382 = vld [vmem:[%s1] sm:$0xff]
          %v383 = vld [vmem:[%s1 + $0x8] sm:$0xff]
          %v384 = vld [vmem:[%s1 + $0x10] sm:$0xff]
          %v385 = vld [vmem:[%s1 + $0x18] sm:$0xff]
          %v386 = vld [vmem:[%s1 + $0x20] sm:$0xff]
          %v387 = vld [vmem:[%s1 + $0x28] sm:$0xff]
          %v388 = vld [vmem:[%s1 + $0x30] sm:$0xff]
          %v389 = vld [vmem:[%s1 + $0x38] sm:$0xff]
          %v390 = vld [vmem:[%s1 + $0x40] sm:$0xff]
          %v391 = vld [vmem:[%s1 + $0x48] sm:$0xff]
          %v392 = vld [vmem:[%s1 + $0x50] sm:$0xff]
          %v393 = vld [vmem:[%s1 + $0x58] sm:$0xff]
          %v394 = vld [vmem:[%s1 + $0x60] sm:$0xff]
          %v395 = vld [vmem:[%s1 + $0x68] sm:$0xff]
          %v396 = vld [vmem:[%s1 + $0x70] sm:$0xff]
          %v397 = vld [vmem:[%s1 + $0x78] sm:$0xff]
          %v398 = vld [vmem:[%s1 + $0x80] sm:$0xff]
          %v399 = vld [vmem:[%s1 + $0x88] sm:$0xff]
          %v400 = vld [vmem:[%s1 + $0x90] sm:$0xff]
          %v401 = vld [vmem:[%s1 + $0x98] sm:$0xff]
          %v402 = vld [vmem:[%s1 + $0xa0] sm:$0xff]
          %v403 = vld [vmem:[%s1 + $0xa8] sm:$0xff]
          %v404 = vld [vmem:[%s1 + $0xb0] sm:$0xff]
          %v405 = vld [vmem:[%s1 + $0xb8] sm:$0xff]
          %v406 = vld [vmem:[%s1 + $0xc0] sm:$0xff]
          %v407 = vld [vmem:[%s1 + $0xc8] sm:$0xff]
          %v408 = vld [vmem:[%s1 + $0xd0] sm:$0xff]
          %v409 = vld [vmem:[%s1 + $0xd8] sm:$0xff]
          %v410 = vld [vmem:[%s1 + $0xe0] sm:$0xff]
          %v411 = vld [vmem:[%s1 + $0xe8] sm:$0xff]
          %v412 = vld [vmem:[%s1 + $0xf0] sm:$0xff]
          %v413 = vld [vmem:[%s1 + $0xf8] sm:$0xff]
          %v414 = vld [vmem:[%s1 + $0x100] sm:$0xff]
          %v415 = vld [vmem:[%s1 + $0x108] sm:$0xff]
          %v416 = vld [vmem:[%s1 + $0x110] sm:$0xff]
          %v417 = vld [vmem:[%s1 + $0x118] sm:$0xff]
          %v418 = vld [vmem:[%s1 + $0x120] sm:$0xff]
          %v419 = vld [vmem:[%s1 + $0x128] sm:$0xff]
          %v420 = vld [vmem:[%s1 + $0x130] sm:$0xff]
          %v421 = vld [vmem:[%s1 + $0x138] sm:$0xff]
          %v422 = vld [vmem:[%s1 + $0x140] sm:$0xff]
          %v423 = vld [vmem:[%s1 + $0x148] sm:$0xff]
          %v424 = vld [vmem:[%s1 + $0x150] sm:$0xff]
          %v425 = vld [vmem:[%s1 + $0x158] sm:$0xff]
          %v426 = vld [vmem:[%s1 + $0x160] sm:$0xff]
          %v427 = vld [vmem:[%s1 + $0x168] sm:$0xff]
          %v428 = vld [vmem:[%s1 + $0x170] sm:$0xff]
          %v429 = vld [vmem:[%s1 + $0x178] sm:$0xff]
          %v430 = vld [vmem:[%s1 + $0x180] sm:$0xff]
          %v431 = vld [vmem:[%s1 + $0x188] sm:$0xff]
          %v432 = vld [vmem:[%s1 + $0x190] sm:$0xff]
          %v433 = vld [vmem:[%s1 + $0x198] sm:$0xff]
          %v434 = vld [vmem:[%s1 + $0x1a0] sm:$0xff]
          %v435 = vld [vmem:[%s1 + $0x1a8] sm:$0xff]
          %v436 = vld [vmem:[%s1 + $0x1b0] sm:$0xff]
          %v437 = vld [vmem:[%s1 + $0x1b8] sm:$0xff]
          %v438 = vld [vmem:[%s1 + $0x1c0] sm:$0xff]
          %v439 = vld [vmem:[%s1 + $0x1c8] sm:$0xff]
          %v440 = vld [vmem:[%s1 + $0x1d0] sm:$0xff]
          %v441 = vld [vmem:[%s1 + $0x1d8] sm:$0xff]
          %v442 = vld [vmem:[%s1 + $0x1e0] sm:$0xff]
          %v443 = vld [vmem:[%s1 + $0x1e8] sm:$0xff]
          %v444 = vld [vmem:[%s1 + $0x1f0] sm:$0xff]
          %v445 = vld [vmem:[%s1 + $0x1f8] sm:$0xff]
          %v446 = vld [vmem:[%s1 + $0x200] sm:$0xff]
          %v447 = vld [vmem:[%s1 + $0x208] sm:$0xff]
          %v448 = vld [vmem:[%s1 + $0x210] sm:$0xff]
          %v449 = vld [vmem:[%s1 + $0x218] sm:$0xff]
          %v450 = vld [vmem:[%s1 + $0x220] sm:$0xff]
          %v451 = vld [vmem:[%s1 + $0x228] sm:$0xff]
          %v452 = vld [vmem:[%s1 + $0x230] sm:$0xff]
          %v453 = vld [vmem:[%s1 + $0x238] sm:$0xff]
          %v454 = vld [vmem:[%s1 + $0x240] sm:$0xff]
          %v455 = vld [vmem:[%s1 + $0x248] sm:$0xff]
          %v456 = vld [vmem:[%s1 + $0x250] sm:$0xff]
          %v457 = vld [vmem:[%s1 + $0x258] sm:$0xff]
          %v458 = vld [vmem:[%s1 + $0x260] sm:$0xff]
          %v459 = vld [vmem:[%s1 + $0x268] sm:$0xff]
          %v460 = vld [vmem:[%s1 + $0x270] sm:$0xff]
          %v461 = vld [vmem:[%s1 + $0x278] sm:$0xff]
          %v462 = vld [vmem:[%s1 + $0x280] sm:$0xff]
          %v463 = vld [vmem:[%s1 + $0x288] sm:$0xff]
          %v464 = vld [vmem:[%s1 + $0x290] sm:$0xff]
          %v465 = vld [vmem:[%s1 + $0x298] sm:$0xff]
          %v466 = vld [vmem:[%s1 + $0x2a0] sm:$0xff]
          %v467 = vld [vmem:[%s1 + $0x2a8] sm:$0xff]
          %v468 = vld [vmem:[%s1 + $0x2b0] sm:$0xff]
          %v469 = vld [vmem:[%s1 + $0x2b8] sm:$0xff]
          %v470 = vld [vmem:[%s1 + $0x2c0] sm:$0xff]
          %v471 = vld [vmem:[%s1 + $0x2c8] sm:$0xff]
          %v472 = vld [vmem:[%s1 + $0x2d0] sm:$0xff]
          %v473 = vld [vmem:[%s1 + $0x2d8] sm:$0xff]
          %v474 = vld [vmem:[%s1 + $0x2e0] sm:$0xff]
          %v475 = vld [vmem:[%s1 + $0x2e8] sm:$0xff]
          %v476 = vld [vmem:[%s1 + $0x2f0] sm:$0xff]
          %v477 = vld [vmem:[%s1 + $0x2f8] sm:$0xff]
          %v478 = vld [vmem:[%s1 + $0x300] sm:$0xff]
          %v479 = vld [vmem:[%s1 + $0x308] sm:$0xff]
          %v480 = vld [vmem:[%s1 + $0x310] sm:$0xff]
          %v481 = vld [vmem:[%s1 + $0x318] sm:$0xff]
          %v482 = vld [vmem:[%s1 + $0x320] sm:$0xff]
          %v483 = vld [vmem:[%s1 + $0x328] sm:$0xff]
          %v484 = vld [vmem:[%s1 + $0x330] sm:$0xff]
          %v485 = vld [vmem:[%s1 + $0x338] sm:$0xff]
          %v486 = vld [vmem:[%s1 + $0x340] sm:$0xff]
          %v487 = vld [vmem:[%s1 + $0x348] sm:$0xff]
          %v488 = vld [vmem:[%s1 + $0x350] sm:$0xff]
          %v489 = vld [vmem:[%s1 + $0x358] sm:$0xff]
          %v490 = vld [vmem:[%s1 + $0x360] sm:$0xff]
          %v491 = vld [vmem:[%s1 + $0x368] sm:$0xff]
          %v492 = vld [vmem:[%s1 + $0x370] sm:$0xff]
          %v493 = vld [vmem:[%s1 + $0x378] sm:$0xff]
          %v494 = vld [vmem:[%s1 + $0x380] sm:$0xff]
          %v495 = vld [vmem:[%s1 + $0x388] sm:$0xff]
          %v496 = vld [vmem:[%s1 + $0x390] sm:$0xff]
          %v497 = vld [vmem:[%s1 + $0x398] sm:$0xff]
          %v498 = vld [vmem:[%s1 + $0x3a0] sm:$0xff]
          %v499 = vld [vmem:[%s1 + $0x3a8] sm:$0xff]
          %v500 = vld [vmem:[%s1 + $0x3b0] sm:$0xff]
          %v501 = vld [vmem:[%s1 + $0x3b8] sm:$0xff]
          %v502 = vld [vmem:[%s1 + $0x3c0] sm:$0xff]
          %v503 = vld [vmem:[%s1 + $0x3c8] sm:$0xff]
          %v504 = vld [vmem:[%s1 + $0x3d0] sm:$0xff]
          %v505 = vld [vmem:[%s1 + $0x3d8] sm:$0xff]
          %v506 = vld [vmem:[%s1 + $0x3e0] sm:$0xff]
          %v507 = vld [vmem:[%s1 + $0x3e8] sm:$0xff]
          %v508 = vld [vmem:[%s1 + $0x3f0] sm:$0xff]
          %v509 = vld [vmem:[%s1 + $0x3f8] sm:$0xff]
          %v510 = vld [vmem:[%s1 + $0x400] sm:$0xff]
          %v511 = vld [vmem:[%s1 + $0x408] sm:$0xff]
          %v512 = vld [vmem:[%s1 + $0x410] sm:$0xff]
          %v513 = vld [vmem:[%s1 + $0x418] sm:$0xff]
          %v514 = vld [vmem:[%s1 + $0x420] sm:$0xff]
          %v515 = vld [vmem:[%s1 + $0x428] sm:$0xff]
          %v516 = vld [vmem:[%s1 + $0x430] sm:$0xff]
          %v517 = vld [vmem:[%s1 + $0x438] sm:$0xff]
          %v518 = vld [vmem:[%s1 + $0x440] sm:$0xff]
          %v519 = vld [vmem:[%s1 + $0x448] sm:$0xff]
          %v520 = vld [vmem:[%s1 + $0x450] sm:$0xff]
          %v521 = vld [vmem:[%s1 + $0x458] sm:$0xff]
          %v522 = vld [vmem:[%s1 + $0x460] sm:$0xff]
          %v523 = vld [vmem:[%s1 + $0x468] sm:$0xff]
          %v524 = vld [vmem:[%s1 + $0x470] sm:$0xff]
          %v525 = vld [vmem:[%s1 + $0x478] sm:$0xff]
          %v686 = vunpack.c.l.b16 %v222
          %v687 = vunpack.c.h.b16 %v222
          %v688 = vunpack.c.l.b16 %v223
          %v689 = vunpack.c.h.b16 %v223
          %v690 = vunpack.c.l.b16 %v224
          %v691 = vunpack.c.h.b16 %v224
          %v692 = vunpack.c.l.b16 %v225
          %v693 = vunpack.c.h.b16 %v225
          %v694 = vunpack.c.l.b16 %v226
          %v695 = vunpack.c.l.b16 %v227
          %v696 = vunpack.c.h.b16 %v227
          %v697 = vunpack.c.l.b16 %v228
          %v698 = vunpack.c.h.b16 %v228
          %v699 = vunpack.c.l.b16 %v229
          %v700 = vunpack.c.h.b16 %v229
          %v701 = vunpack.c.l.b16 %v230
          %v702 = vunpack.c.h.b16 %v230
          %v703 = vunpack.c.l.b16 %v231
          %v704 = vunpack.c.l.b16 %v232
          %v705 = vunpack.c.h.b16 %v232
          %v706 = vunpack.c.l.b16 %v233
          %v707 = vunpack.c.h.b16 %v233
          %v708 = vunpack.c.l.b16 %v234
          %v709 = vunpack.c.h.b16 %v234
          %v710 = vunpack.c.l.b16 %v235
          %v711 = vunpack.c.h.b16 %v235
          %v712 = vunpack.c.l.b16 %v236
          %v713 = vunpack.c.l.b16 %v237
          %v714 = vunpack.c.h.b16 %v237
          %v715 = vunpack.c.l.b16 %v238
          %v716 = vunpack.c.h.b16 %v238
          %v717 = vunpack.c.l.b16 %v239
          %v718 = vunpack.c.h.b16 %v239
          %v719 = vunpack.c.l.b16 %v240
          %v720 = vunpack.c.h.b16 %v240
          %v721 = vunpack.c.l.b16 %v241
          %v722 = vunpack.c.l.b16 %v242
          %v723 = vunpack.c.h.b16 %v242
          %v724 = vunpack.c.l.b16 %v243
          %v725 = vunpack.c.h.b16 %v243
          %v726 = vunpack.c.l.b16 %v244
          %v727 = vunpack.c.h.b16 %v244
          %v728 = vunpack.c.l.b16 %v245
          %v729 = vunpack.c.h.b16 %v245
          %v730 = vunpack.c.l.b16 %v246
          %v731 = vunpack.c.l.b16 %v247
          %v732 = vunpack.c.h.b16 %v247
          %v733 = vunpack.c.l.b16 %v248
          %v734 = vunpack.c.h.b16 %v248
          %v735 = vunpack.c.l.b16 %v249
          %v736 = vunpack.c.h.b16 %v249
          %v737 = vunpack.c.l.b16 %v250
          %v738 = vunpack.c.h.b16 %v250
          %v739 = vunpack.c.l.b16 %v251
          %v740 = vunpack.c.l.b16 %v252
          %v741 = vunpack.c.h.b16 %v252
          %v742 = vunpack.c.l.b16 %v253
          %v743 = vunpack.c.h.b16 %v253
          %v744 = vunpack.c.l.b16 %v254
          %v745 = vunpack.c.h.b16 %v254
          %v746 = vunpack.c.l.b16 %v255
          %v747 = vunpack.c.h.b16 %v255
          %v748 = vunpack.c.l.b16 %v256
          %v749 = vunpack.c.l.b16 %v257
          %v750 = vunpack.c.h.b16 %v257
          %v751 = vunpack.c.l.b16 %v258
          %v752 = vunpack.c.h.b16 %v258
          %v753 = vunpack.c.l.b16 %v259
          %v754 = vunpack.c.h.b16 %v259
          %v755 = vunpack.c.l.b16 %v260
          %v756 = vunpack.c.h.b16 %v260
          %v757 = vunpack.c.l.b16 %v261
          %v758 = vunpack.c.l.b16 %v262
          %v759 = vunpack.c.h.b16 %v262
          %v760 = vunpack.c.l.b16 %v263
          %v761 = vunpack.c.h.b16 %v263
          %v762 = vunpack.c.l.b16 %v264
          %v763 = vunpack.c.h.b16 %v264
          %v764 = vunpack.c.l.b16 %v265
          %v765 = vunpack.c.h.b16 %v265
          %v766 = vunpack.c.l.b16 %v266
          %v767 = vunpack.c.l.b16 %v267
          %v768 = vunpack.c.h.b16 %v267
          %v769 = vunpack.c.l.b16 %v268
          %v770 = vunpack.c.h.b16 %v268
          %v771 = vunpack.c.l.b16 %v269
          %v772 = vunpack.c.h.b16 %v269
          %v773 = vunpack.c.l.b16 %v270
          %v774 = vunpack.c.h.b16 %v270
          %v775 = vunpack.c.l.b16 %v271
          %v776 = vunpack.c.l.b16 %v272
          %v777 = vunpack.c.h.b16 %v272
          %v778 = vunpack.c.l.b16 %v273
          %v779 = vunpack.c.h.b16 %v273
          %v780 = vunpack.c.l.b16 %v274
          %v781 = vunpack.c.h.b16 %v274
          %v782 = vunpack.c.l.b16 %v275
          %v783 = vunpack.c.h.b16 %v275
          %v784 = vunpack.c.l.b16 %v276
          %v785 = vunpack.c.l.b16 %v277
          %v786 = vunpack.c.h.b16 %v277
          %v787 = vunpack.c.l.b16 %v278
          %v788 = vunpack.c.h.b16 %v278
          %v789 = vunpack.c.l.b16 %v279
          %v790 = vunpack.c.h.b16 %v279
          %v791 = vunpack.c.l.b16 %v280
          %v792 = vunpack.c.h.b16 %v280
          %v793 = vunpack.c.l.b16 %v281
          %v794 = vunpack.c.l.b16 %v282
          %v795 = vunpack.c.h.b16 %v282
          %v796 = vunpack.c.l.b16 %v283
          %v797 = vunpack.c.h.b16 %v283
          %v798 = vunpack.c.l.b16 %v284
          %v799 = vunpack.c.h.b16 %v284
          %v800 = vunpack.c.l.b16 %v285
          %v801 = vunpack.c.h.b16 %v285
          %v802 = vunpack.c.l.b16 %v286
          %v803 = vunpack.c.l.b16 %v287
          %v804 = vunpack.c.h.b16 %v287
          %v805 = vunpack.c.l.b16 %v288
          %v806 = vunpack.c.h.b16 %v288
          %v807 = vunpack.c.l.b16 %v289
          %v808 = vunpack.c.h.b16 %v289
          %v809 = vunpack.c.l.b16 %v290
          %v810 = vunpack.c.h.b16 %v290
          %v811 = vunpack.c.l.b16 %v291
          %v812 = vunpack.c.l.b16 %v292
          %v813 = vunpack.c.h.b16 %v292
          %v814 = vunpack.c.l.b16 %v293
          %v815 = vunpack.c.h.b16 %v293
          %v816 = vunpack.c.l.b16 %v294
          %v817 = vunpack.c.h.b16 %v294
          %v818 = vunpack.c.l.b16 %v295
          %v819 = vunpack.c.h.b16 %v295
          %v820 = vunpack.c.l.b16 %v296
          %v821 = vunpack.c.l.b16 %v297
          %v822 = vunpack.c.h.b16 %v297
          %v823 = vunpack.c.l.b16 %v298
          %v824 = vunpack.c.h.b16 %v298
          %v825 = vunpack.c.l.b16 %v299
          %v826 = vunpack.c.h.b16 %v299
          %v827 = vunpack.c.l.b16 %v300
          %v828 = vunpack.c.h.b16 %v300
          %v829 = vunpack.c.l.b16 %v301
          %v830 = vunpack.c.l.b16 %v302
          %v831 = vunpack.c.h.b16 %v302
          %v832 = vunpack.c.l.b16 %v303
          %v833 = vunpack.c.h.b16 %v303
          %v834 = vunpack.c.l.b16 %v304
          %v835 = vunpack.c.h.b16 %v304
          %v836 = vunpack.c.l.b16 %v305
          %v837 = vunpack.c.h.b16 %v305
          %v838 = vunpack.c.l.b16 %v306
          %v839 = vunpack.c.l.b16 %v307
          %v840 = vunpack.c.h.b16 %v307
          %v841 = vunpack.c.l.b16 %v308
          %v842 = vunpack.c.h.b16 %v308
          %v843 = vunpack.c.l.b16 %v309
          %v844 = vunpack.c.h.b16 %v309
          %v845 = vunpack.c.l.b16 %v310
          %v846 = vunpack.c.h.b16 %v310
          %v847 = vunpack.c.l.b16 %v311
          %v848 = vunpack.c.l.b16 %v312
          %v849 = vunpack.c.h.b16 %v312
          %v850 = vunpack.c.l.b16 %v313
          %v851 = vunpack.c.h.b16 %v313
          %v852 = vunpack.c.l.b16 %v314
          %v853 = vunpack.c.h.b16 %v314
          %v854 = vunpack.c.l.b16 %v315
          %v855 = vunpack.c.h.b16 %v315
          %v856 = vunpack.c.l.b16 %v316
          %v857 = vunpack.c.l.b16 %v317
          %v858 = vunpack.c.h.b16 %v317
          %v859 = vunpack.c.l.b16 %v318
          %v860 = vunpack.c.h.b16 %v318
          %v861 = vunpack.c.l.b16 %v319
          %v862 = vunpack.c.h.b16 %v319
          %v863 = vunpack.c.l.b16 %v320
          %v864 = vunpack.c.h.b16 %v320
          %v865 = vunpack.c.l.b16 %v321
          %v866 = vunpack.c.l.b16 %v322
          %v867 = vunpack.c.h.b16 %v322
          %v868 = vunpack.c.l.b16 %v323
          %v869 = vunpack.c.h.b16 %v323
          %v870 = vunpack.c.l.b16 %v324
          %v871 = vunpack.c.h.b16 %v324
          %v872 = vunpack.c.l.b16 %v325
          %v873 = vunpack.c.h.b16 %v325
          %v874 = vunpack.c.l.b16 %v326
          %v875 = vunpack.c.l.b16 %v327
          %v876 = vunpack.c.h.b16 %v327
          %v877 = vunpack.c.l.b16 %v328
          %v878 = vunpack.c.h.b16 %v328
          %v879 = vunpack.c.l.b16 %v329
          %v880 = vunpack.c.h.b16 %v329
          %v881 = vunpack.c.l.b16 %v330
          %v882 = vunpack.c.h.b16 %v330
          %v883 = vunpack.c.l.b16 %v331
          %v884 = vunpack.c.l.b16 %v332
          %v885 = vunpack.c.h.b16 %v332
          %v886 = vunpack.c.l.b16 %v333
          %v887 = vunpack.c.h.b16 %v333
          %v888 = vunpack.c.l.b16 %v334
          %v889 = vunpack.c.h.b16 %v334
          %v890 = vunpack.c.l.b16 %v335
          %v891 = vunpack.c.h.b16 %v335
          %v892 = vunpack.c.l.b16 %v336
          %v893 = vunpack.c.l.b16 %v337
          %v894 = vunpack.c.h.b16 %v337
          %v895 = vunpack.c.l.b16 %v338
          %v896 = vunpack.c.h.b16 %v338
          %v897 = vunpack.c.l.b16 %v339
          %v898 = vunpack.c.h.b16 %v339
          %v899 = vunpack.c.l.b16 %v340
          %v900 = vunpack.c.h.b16 %v340
          %v901 = vunpack.c.l.b16 %v341
          %v902 = vunpack.c.l.b16 %v342
          %v903 = vunpack.c.h.b16 %v342
          %v904 = vunpack.c.l.b16 %v343
          %v905 = vunpack.c.h.b16 %v343
          %v906 = vunpack.c.l.b16 %v344
          %v907 = vunpack.c.h.b16 %v344
          %v908 = vunpack.c.l.b16 %v345
          %v909 = vunpack.c.h.b16 %v345
          %v910 = vunpack.c.l.b16 %v346
          %v911 = vunpack.c.l.b16 %v347
          %v912 = vunpack.c.h.b16 %v347
          %v913 = vunpack.c.l.b16 %v348
          %v914 = vunpack.c.h.b16 %v348
          %v915 = vunpack.c.l.b16 %v349
          %v916 = vunpack.c.h.b16 %v349
          %v917 = vunpack.c.l.b16 %v350
          %v918 = vunpack.c.h.b16 %v350
          %v919 = vunpack.c.l.b16 %v351
          %v920 = vunpack.c.l.b16 %v352
          %v921 = vunpack.c.h.b16 %v352
          %v922 = vunpack.c.l.b16 %v353
          %v923 = vunpack.c.h.b16 %v353
          %v924 = vunpack.c.l.b16 %v354
          %v925 = vunpack.c.h.b16 %v354
          %v926 = vunpack.c.l.b16 %v355
          %v927 = vunpack.c.h.b16 %v355
          %v928 = vunpack.c.l.b16 %v356
          %v929 = vunpack.c.l.b16 %v357
          %v930 = vunpack.c.h.b16 %v357
          %v931 = vunpack.c.l.b16 %v358
          %v932 = vunpack.c.h.b16 %v358
          %v933 = vunpack.c.l.b16 %v359
          %v934 = vunpack.c.h.b16 %v359
          %v935 = vunpack.c.l.b16 %v360
          %v936 = vunpack.c.h.b16 %v360
          %v937 = vunpack.c.l.b16 %v361
          %v938 = vunpack.c.l.b16 %v362
          %v939 = vunpack.c.h.b16 %v362
          %v940 = vunpack.c.l.b16 %v363
          %v941 = vunpack.c.h.b16 %v363
          %v942 = vunpack.c.l.b16 %v364
          %v943 = vunpack.c.h.b16 %v364
          %v944 = vunpack.c.l.b16 %v365
          %v945 = vunpack.c.h.b16 %v365
          %v946 = vunpack.c.l.b16 %v366
          %v947 = vunpack.c.l.b16 %v367
          %v948 = vunpack.c.h.b16 %v367
          %v949 = vunpack.c.l.b16 %v368
          %v950 = vunpack.c.h.b16 %v368
          %v951 = vunpack.c.l.b16 %v369
          %v952 = vunpack.c.h.b16 %v369
          %v953 = vunpack.c.l.b16 %v370
          %v954 = vunpack.c.h.b16 %v370
          %v955 = vunpack.c.l.b16 %v371
          %v956 = vunpack.c.l.b16 %v372
          %v957 = vunpack.c.h.b16 %v372
          %v958 = vunpack.c.l.b16 %v373
          %v959 = vunpack.c.h.b16 %v373
          %v960 = vunpack.c.l.b16 %v374
          %v961 = vunpack.c.h.b16 %v374
          %v962 = vunpack.c.l.b16 %v375
          %v963 = vunpack.c.h.b16 %v375
          %v964 = vunpack.c.l.b16 %v376
          %v965 = vunpack.c.l.b16 %v377
          %v966 = vunpack.c.h.b16 %v377
          %v967 = vunpack.c.l.b16 %v378
          %v968 = vunpack.c.h.b16 %v378
          %v969 = vunpack.c.l.b16 %v379
          %v970 = vunpack.c.h.b16 %v379
          %v971 = vunpack.c.l.b16 %v380
          %v972 = vunpack.c.h.b16 %v380
          %v973 = vunpack.c.l.b16 %v381
          %v974 = vpack.c.b16 %v695, %v686
          %v975 = vpack.c.b16 %v696, %v687
          %v976 = vpack.c.b16 %v697, %v688
          %v977 = vpack.c.b16 %v698, %v689
          %v978 = vpack.c.b16 %v699, %v690
          %v979 = vpack.c.b16 %v700, %v691
          %v980 = vpack.c.b16 %v701, %v692
          %v981 = vpack.c.b16 %v702, %v693
          %v982 = vpack.c.b16 %v703, %v694
          %v983 = vpack.c.b16 %v713, %v704
          %v984 = vpack.c.b16 %v714, %v705
          %v985 = vpack.c.b16 %v715, %v706
          %v986 = vpack.c.b16 %v716, %v707
          %v987 = vpack.c.b16 %v717, %v708
          %v988 = vpack.c.b16 %v718, %v709
          %v989 = vpack.c.b16 %v719, %v710
          %v990 = vpack.c.b16 %v720, %v711
          %v991 = vpack.c.b16 %v721, %v712
          %v992 = vpack.c.b16 %v731, %v722
          %v993 = vpack.c.b16 %v732, %v723
          %v994 = vpack.c.b16 %v733, %v724
          %v995 = vpack.c.b16 %v734, %v725
          %v996 = vpack.c.b16 %v735, %v726
          %v997 = vpack.c.b16 %v736, %v727
          %v998 = vpack.c.b16 %v737, %v728
          %v999 = vpack.c.b16 %v738, %v729
          %v1000 = vpack.c.b16 %v739, %v730
          %v1001 = vpack.c.b16 %v749, %v740
          %v1002 = vpack.c.b16 %v750, %v741
          %v1003 = vpack.c.b16 %v751, %v742
          %v1004 = vpack.c.b16 %v752, %v743
          %v1005 = vpack.c.b16 %v753, %v744
          %v1006 = vpack.c.b16 %v754, %v745
          %v1007 = vpack.c.b16 %v755, %v746
          %v1008 = vpack.c.b16 %v756, %v747
          %v1009 = vpack.c.b16 %v757, %v748
          %v1010 = vpack.c.b16 %v767, %v758
          %v1011 = vpack.c.b16 %v768, %v759
          %v1012 = vpack.c.b16 %v769, %v760
          %v1013 = vpack.c.b16 %v770, %v761
          %v1014 = vpack.c.b16 %v771, %v762
          %v1015 = vpack.c.b16 %v772, %v763
          %v1016 = vpack.c.b16 %v773, %v764
          %v1017 = vpack.c.b16 %v774, %v765
          %v1018 = vpack.c.b16 %v775, %v766
          %v1019 = vpack.c.b16 %v785, %v776
          %v1020 = vpack.c.b16 %v786, %v777
          %v1021 = vpack.c.b16 %v787, %v778
          %v1022 = vpack.c.b16 %v788, %v779
          %v1023 = vpack.c.b16 %v789, %v780
          %v1024 = vpack.c.b16 %v790, %v781
          %v1025 = vpack.c.b16 %v791, %v782
          %v1026 = vpack.c.b16 %v792, %v783
          %v1027 = vpack.c.b16 %v793, %v784
          %v1028 = vpack.c.b16 %v803, %v794
          %v1029 = vpack.c.b16 %v804, %v795
          %v1030 = vpack.c.b16 %v805, %v796
          %v1031 = vpack.c.b16 %v806, %v797
          %v1032 = vpack.c.b16 %v807, %v798
          %v1033 = vpack.c.b16 %v808, %v799
          %v1034 = vpack.c.b16 %v809, %v800
          %v1035 = vpack.c.b16 %v810, %v801
          %v1036 = vpack.c.b16 %v811, %v802
          %v1037 = vpack.c.b16 %v821, %v812
          %v1038 = vpack.c.b16 %v822, %v813
          %v1039 = vpack.c.b16 %v823, %v814
          %v1040 = vpack.c.b16 %v824, %v815
          %v1041 = vpack.c.b16 %v825, %v816
          %v1042 = vpack.c.b16 %v826, %v817
          %v1043 = vpack.c.b16 %v827, %v818
          %v1044 = vpack.c.b16 %v828, %v819
          %v1045 = vpack.c.b16 %v829, %v820
          %v1046 = vpack.c.b16 %v839, %v830
          %v1047 = vpack.c.b16 %v840, %v831
          %v1048 = vpack.c.b16 %v841, %v832
          %v1049 = vpack.c.b16 %v842, %v833
          %v1050 = vpack.c.b16 %v843, %v834
          %v1051 = vpack.c.b16 %v844, %v835
          %v1052 = vpack.c.b16 %v845, %v836
          %v1053 = vpack.c.b16 %v846, %v837
          %v1054 = vpack.c.b16 %v847, %v838
          %v1055 = vpack.c.b16 %v857, %v848
          %v1056 = vpack.c.b16 %v858, %v849
          %v1057 = vpack.c.b16 %v859, %v850
          %v1058 = vpack.c.b16 %v860, %v851
          %v1059 = vpack.c.b16 %v861, %v852
          %v1060 = vpack.c.b16 %v862, %v853
          %v1061 = vpack.c.b16 %v863, %v854
          %v1062 = vpack.c.b16 %v864, %v855
          %v1063 = vpack.c.b16 %v865, %v856
          %v1064 = vpack.c.b16 %v875, %v866
          %v1065 = vpack.c.b16 %v876, %v867
          %v1066 = vpack.c.b16 %v877, %v868
          %v1067 = vpack.c.b16 %v878, %v869
          %v1068 = vpack.c.b16 %v879, %v870
          %v1069 = vpack.c.b16 %v880, %v871
          %v1070 = vpack.c.b16 %v881, %v872
          %v1071 = vpack.c.b16 %v882, %v873
          %v1072 = vpack.c.b16 %v883, %v874
          %v1073 = vpack.c.b16 %v893, %v884
          %v1074 = vpack.c.b16 %v894, %v885
          %v1075 = vpack.c.b16 %v895, %v886
          %v1076 = vpack.c.b16 %v896, %v887
          %v1077 = vpack.c.b16 %v897, %v888
          %v1078 = vpack.c.b16 %v898, %v889
          %v1079 = vpack.c.b16 %v899, %v890
          %v1080 = vpack.c.b16 %v900, %v891
          %v1081 = vpack.c.b16 %v901, %v892
          %v1082 = vpack.c.b16 %v911, %v902
          %v1083 = vpack.c.b16 %v912, %v903
          %v1084 = vpack.c.b16 %v913, %v904
          %v1085 = vpack.c.b16 %v914, %v905
          %v1086 = vpack.c.b16 %v915, %v906
          %v1087 = vpack.c.b16 %v916, %v907
          %v1088 = vpack.c.b16 %v917, %v908
          %v1089 = vpack.c.b16 %v918, %v909
          %v1090 = vpack.c.b16 %v919, %v910
          %v1091 = vpack.c.b16 %v929, %v920
          %v1092 = vpack.c.b16 %v930, %v921
          %v1093 = vpack.c.b16 %v931, %v922
          %v1094 = vpack.c.b16 %v932, %v923
          %v1095 = vpack.c.b16 %v933, %v924
          %v1096 = vpack.c.b16 %v934, %v925
          %v1097 = vpack.c.b16 %v935, %v926
          %v1098 = vpack.c.b16 %v936, %v927
          %v1099 = vpack.c.b16 %v937, %v928
          %v1100 = vpack.c.b16 %v947, %v938
          %v1101 = vpack.c.b16 %v948, %v939
          %v1102 = vpack.c.b16 %v949, %v940
          %v1103 = vpack.c.b16 %v950, %v941
          %v1104 = vpack.c.b16 %v951, %v942
          %v1105 = vpack.c.b16 %v952, %v943
          %v1106 = vpack.c.b16 %v953, %v944
          %v1107 = vpack.c.b16 %v954, %v945
          %v1108 = vpack.c.b16 %v955, %v946
          %v1109 = vpack.c.b16 %v965, %v956
          %v1110 = vpack.c.b16 %v966, %v957
          %v1111 = vpack.c.b16 %v967, %v958
          %v1112 = vpack.c.b16 %v968, %v959
          %v1113 = vpack.c.b16 %v969, %v960
          %v1114 = vpack.c.b16 %v970, %v961
          %v1115 = vpack.c.b16 %v971, %v962
          %v1116 = vpack.c.b16 %v972, %v963
          %v1117 = vpack.c.b16 %v973, %v964
          %v1406 = vunpack.c.l.b16 %v382
          %v1407 = vunpack.c.l.b16 %v383
          %v1408 = vunpack.c.l.b16 %v384
          %v1409 = vunpack.c.l.b16 %v385
          %v1410 = vunpack.c.l.b16 %v386
          %v1411 = vunpack.c.l.b16 %v387
          %v1412 = vunpack.c.l.b16 %v388
          %v1413 = vunpack.c.l.b16 %v389
          %v1414 = vunpack.c.l.b16 %v390
          %v1415 = vunpack.c.l.b16 %v391
          %v1416 = vunpack.c.l.b16 %v392
          %v1417 = vunpack.c.l.b16 %v393
          %v1418 = vunpack.c.l.b16 %v394
          %v1419 = vunpack.c.l.b16 %v395
          %v1420 = vunpack.c.l.b16 %v396
          %v1421 = vunpack.c.l.b16 %v397
          %v1422 = vunpack.c.l.b16 %v398
          %v1423 = vunpack.c.l.b16 %v399
          %v1424 = vunpack.c.l.b16 %v400
          %v1425 = vunpack.c.l.b16 %v401
          %v1426 = vunpack.c.l.b16 %v402
          %v1427 = vunpack.c.l.b16 %v403
          %v1428 = vunpack.c.l.b16 %v404
          %v1429 = vunpack.c.l.b16 %v405
          %v1430 = vunpack.c.l.b16 %v406
          %v1431 = vunpack.c.l.b16 %v407
          %v1432 = vunpack.c.l.b16 %v408
          %v1433 = vunpack.c.l.b16 %v409
          %v1434 = vunpack.c.l.b16 %v410
          %v1435 = vunpack.c.l.b16 %v411
          %v1436 = vunpack.c.l.b16 %v412
          %v1437 = vunpack.c.l.b16 %v413
          %v1438 = vunpack.c.l.b16 %v414
          %v1439 = vunpack.c.l.b16 %v415
          %v1440 = vunpack.c.l.b16 %v416
          %v1441 = vunpack.c.l.b16 %v417
          %v1442 = vunpack.c.l.b16 %v418
          %v1443 = vunpack.c.l.b16 %v419
          %v1444 = vunpack.c.l.b16 %v420
          %v1445 = vunpack.c.l.b16 %v421
          %v1446 = vunpack.c.l.b16 %v422
          %v1447 = vunpack.c.l.b16 %v423
          %v1448 = vunpack.c.l.b16 %v424
          %v1449 = vunpack.c.l.b16 %v425
          %v1450 = vunpack.c.l.b16 %v426
          %v1451 = vunpack.c.l.b16 %v427
          %v1452 = vunpack.c.l.b16 %v428
          %v1453 = vunpack.c.l.b16 %v429
          %v1454 = vunpack.c.l.b16 %v430
          %v1455 = vunpack.c.l.b16 %v431
          %v1456 = vunpack.c.l.b16 %v432
          %v1457 = vunpack.c.l.b16 %v433
          %v1458 = vunpack.c.l.b16 %v434
          %v1459 = vunpack.c.l.b16 %v435
          %v1460 = vunpack.c.l.b16 %v436
          %v1461 = vunpack.c.l.b16 %v437
          %v1462 = vunpack.c.l.b16 %v438
          %v1463 = vunpack.c.l.b16 %v439
          %v1464 = vunpack.c.l.b16 %v440
          %v1465 = vunpack.c.l.b16 %v441
          %v1466 = vunpack.c.l.b16 %v442
          %v1467 = vunpack.c.l.b16 %v443
          %v1468 = vunpack.c.l.b16 %v444
          %v1469 = vunpack.c.l.b16 %v445
          %v1470 = vunpack.c.l.b16 %v446
          %v1471 = vunpack.c.l.b16 %v447
          %v1472 = vunpack.c.l.b16 %v448
          %v1473 = vunpack.c.l.b16 %v449
          %v1474 = vunpack.c.l.b16 %v450
          %v1475 = vunpack.c.l.b16 %v451
          %v1476 = vunpack.c.l.b16 %v452
          %v1477 = vunpack.c.l.b16 %v453
          %v1478 = vunpack.c.l.b16 %v454
          %v1479 = vunpack.c.l.b16 %v455
          %v1480 = vunpack.c.l.b16 %v456
          %v1481 = vunpack.c.l.b16 %v457
          %v1482 = vunpack.c.l.b16 %v458
          %v1483 = vunpack.c.l.b16 %v459
          %v1484 = vunpack.c.l.b16 %v460
          %v1485 = vunpack.c.l.b16 %v461
          %v1486 = vunpack.c.l.b16 %v462
          %v1487 = vunpack.c.l.b16 %v463
          %v1488 = vunpack.c.l.b16 %v464
          %v1489 = vunpack.c.l.b16 %v465
          %v1490 = vunpack.c.l.b16 %v466
          %v1491 = vunpack.c.l.b16 %v467
          %v1492 = vunpack.c.l.b16 %v468
          %v1493 = vunpack.c.l.b16 %v469
          %v1494 = vunpack.c.l.b16 %v470
          %v1495 = vunpack.c.l.b16 %v471
          %v1496 = vunpack.c.l.b16 %v472
          %v1497 = vunpack.c.l.b16 %v473
          %v1498 = vunpack.c.l.b16 %v474
          %v1499 = vunpack.c.l.b16 %v475
          %v1500 = vunpack.c.l.b16 %v476
          %v1501 = vunpack.c.l.b16 %v477
          %v1502 = vunpack.c.l.b16 %v478
          %v1503 = vunpack.c.l.b16 %v479
          %v1504 = vunpack.c.l.b16 %v480
          %v1505 = vunpack.c.l.b16 %v481
          %v1506 = vunpack.c.l.b16 %v482
          %v1507 = vunpack.c.l.b16 %v483
          %v1508 = vunpack.c.l.b16 %v484
          %v1509 = vunpack.c.l.b16 %v485
          %v1510 = vunpack.c.l.b16 %v486
          %v1511 = vunpack.c.l.b16 %v487
          %v1512 = vunpack.c.l.b16 %v488
          %v1513 = vunpack.c.l.b16 %v489
          %v1514 = vunpack.c.l.b16 %v490
          %v1515 = vunpack.c.l.b16 %v491
          %v1516 = vunpack.c.l.b16 %v492
          %v1517 = vunpack.c.l.b16 %v493
          %v1518 = vunpack.c.l.b16 %v494
          %v1519 = vunpack.c.l.b16 %v495
          %v1520 = vunpack.c.l.b16 %v496
          %v1521 = vunpack.c.l.b16 %v497
          %v1522 = vunpack.c.l.b16 %v498
          %v1523 = vunpack.c.l.b16 %v499
          %v1524 = vunpack.c.l.b16 %v500
          %v1525 = vunpack.c.l.b16 %v501
          %v1526 = vunpack.c.l.b16 %v502
          %v1527 = vunpack.c.l.b16 %v503
          %v1528 = vunpack.c.l.b16 %v504
          %v1529 = vunpack.c.l.b16 %v505
          %v1530 = vunpack.c.l.b16 %v506
          %v1531 = vunpack.c.l.b16 %v507
          %v1532 = vunpack.c.l.b16 %v508
          %v1533 = vunpack.c.l.b16 %v509
          %v1534 = vunpack.c.l.b16 %v510
          %v1535 = vunpack.c.l.b16 %v511
          %v1536 = vunpack.c.l.b16 %v512
          %v1537 = vunpack.c.l.b16 %v513
          %v1538 = vunpack.c.l.b16 %v514
          %v1539 = vunpack.c.l.b16 %v515
          %v1540 = vunpack.c.l.b16 %v516
          %v1541 = vunpack.c.l.b16 %v517
          %v1542 = vunpack.c.l.b16 %v518
          %v1543 = vunpack.c.l.b16 %v519
          %v1544 = vunpack.c.l.b16 %v520
          %v1545 = vunpack.c.l.b16 %v521
          %v1546 = vunpack.c.l.b16 %v522
          %v1547 = vunpack.c.l.b16 %v523
          %v1548 = vunpack.c.l.b16 %v524
          %v1549 = vunpack.c.l.b16 %v525
          %v1550 = vpack.c.b16 %v1407, %v1406
          %v1551 = vpack.c.b16 %v1409, %v1408
          %v1552 = vpack.c.b16 %v1411, %v1410
          %v1553 = vpack.c.b16 %v1413, %v1412
          %v1554 = vpack.c.b16 %v1415, %v1414
          %v1555 = vpack.c.b16 %v1417, %v1416
          %v1556 = vpack.c.b16 %v1419, %v1418
          %v1557 = vpack.c.b16 %v1421, %v1420
          %v1558 = vpack.c.b16 %v1423, %v1422
          %v1559 = vpack.c.b16 %v1425, %v1424
          %v1560 = vpack.c.b16 %v1427, %v1426
          %v1561 = vpack.c.b16 %v1429, %v1428
          %v1562 = vpack.c.b16 %v1431, %v1430
          %v1563 = vpack.c.b16 %v1433, %v1432
          %v1564 = vpack.c.b16 %v1435, %v1434
          %v1565 = vpack.c.b16 %v1437, %v1436
          %v1566 = vpack.c.b16 %v1439, %v1438
          %v1567 = vpack.c.b16 %v1441, %v1440
          %v1568 = vpack.c.b16 %v1443, %v1442
          %v1569 = vpack.c.b16 %v1445, %v1444
          %v1570 = vpack.c.b16 %v1447, %v1446
          %v1571 = vpack.c.b16 %v1449, %v1448
          %v1572 = vpack.c.b16 %v1451, %v1450
          %v1573 = vpack.c.b16 %v1453, %v1452
          %v1574 = vpack.c.b16 %v1455, %v1454
          %v1575 = vpack.c.b16 %v1457, %v1456
          %v1576 = vpack.c.b16 %v1459, %v1458
          %v1577 = vpack.c.b16 %v1461, %v1460
          %v1578 = vpack.c.b16 %v1463, %v1462
          %v1579 = vpack.c.b16 %v1465, %v1464
          %v1580 = vpack.c.b16 %v1467, %v1466
          %v1581 = vpack.c.b16 %v1469, %v1468
          %v1582 = vpack.c.b16 %v1471, %v1470
          %v1583 = vpack.c.b16 %v1473, %v1472
          %v1584 = vpack.c.b16 %v1475, %v1474
          %v1585 = vpack.c.b16 %v1477, %v1476
          %v1586 = vpack.c.b16 %v1479, %v1478
          %v1587 = vpack.c.b16 %v1481, %v1480
          %v1588 = vpack.c.b16 %v1483, %v1482
          %v1589 = vpack.c.b16 %v1485, %v1484
          %v1590 = vpack.c.b16 %v1487, %v1486
          %v1591 = vpack.c.b16 %v1489, %v1488
          %v1592 = vpack.c.b16 %v1491, %v1490
          %v1593 = vpack.c.b16 %v1493, %v1492
          %v1594 = vpack.c.b16 %v1495, %v1494
          %v1595 = vpack.c.b16 %v1497, %v1496
          %v1596 = vpack.c.b16 %v1499, %v1498
          %v1597 = vpack.c.b16 %v1501, %v1500
          %v1598 = vpack.c.b16 %v1503, %v1502
          %v1599 = vpack.c.b16 %v1505, %v1504
          %v1600 = vpack.c.b16 %v1507, %v1506
          %v1601 = vpack.c.b16 %v1509, %v1508
          %v1602 = vpack.c.b16 %v1511, %v1510
          %v1603 = vpack.c.b16 %v1513, %v1512
          %v1604 = vpack.c.b16 %v1515, %v1514
          %v1605 = vpack.c.b16 %v1517, %v1516
          %v1606 = vpack.c.b16 %v1519, %v1518
          %v1607 = vpack.c.b16 %v1521, %v1520
          %v1608 = vpack.c.b16 %v1523, %v1522
          %v1609 = vpack.c.b16 %v1525, %v1524
          %v1610 = vpack.c.b16 %v1527, %v1526
          %v1611 = vpack.c.b16 %v1529, %v1528
          %v1612 = vpack.c.b16 %v1531, %v1530
          %v1613 = vpack.c.b16 %v1533, %v1532
          %v1614 = vpack.c.b16 %v1535, %v1534
          %v1615 = vpack.c.b16 %v1537, %v1536
          %v1616 = vpack.c.b16 %v1539, %v1538
          %v1617 = vpack.c.b16 %v1541, %v1540
          %v1618 = vpack.c.b16 %v1543, %v1542
          %v1619 = vpack.c.b16 %v1545, %v1544
          %v1620 = vpack.c.b16 %v1547, %v1546
          %v1621 = vpack.c.b16 %v1549, %v1548
          %1694 = vmatprep.subr.bf16.mxu0 0
          %1695 = vmatpush1.bf16.msra.mxu0 %v1550
          %1696 = vmatprep.subr.bf16.mxu0 0
          %1697 = vmatpush1.bf16.msra.mxu0 %v1551
          %1698 = vmatprep.subr.bf16.mxu0 0
          %1699 = vmatpush1.bf16.msra.mxu0 %v1552
          %1700 = vmatprep.subr.bf16.mxu0 0
          %1701 = vmatpush1.bf16.msra.mxu0 %v1553
          %1702 = vmatprep.subr.bf16.mxu0 0
          %1703 = vmatpush1.bf16.msra.mxu0 %v1554
          %1704 = vmatprep.subr.bf16.mxu0 0
          %1705 = vmatpush1.bf16.msra.mxu0 %v1555
          %1706 = vmatprep.subr.bf16.mxu0 0
          %1707 = vmatpush1.bf16.msra.mxu0 %v1556
          %1708 = vmatprep.subr.bf16.mxu0 0
          %1709 = vmatpush1.bf16.msra.mxu0 %v1557
          %1710 = vmatprep.subr.bf16.mxu0 0
          %1711 = vmatpush1.bf16.msra.mxu0 %v1558
          %1712 = vmatprep.subr.bf16.mxu0 0
          %1713 = vmatpush1.bf16.msra.mxu0 %v1559
          %1714 = vmatprep.subr.bf16.mxu0 0
          %1715 = vmatpush1.bf16.msra.mxu0 %v1560
          %1716 = vmatprep.subr.bf16.mxu0 0
          %1717 = vmatpush1.bf16.msra.mxu0 %v1561
          %1718 = vmatprep.subr.bf16.mxu0 0
          %1719 = vmatpush1.bf16.msra.mxu0 %v1562
          %1720 = vmatprep.subr.bf16.mxu0 0
          %1721 = vmatpush1.bf16.msra.mxu0 %v1563
          %1722 = vmatprep.subr.bf16.mxu0 0
          %1723 = vmatpush1.bf16.msra.mxu0 %v1564
          %1724 = vmatprep.subr.bf16.mxu0 0
          %1725 = vmatpush1.bf16.msra.mxu0 %v1565
          %1726 = vmatprep.mubr.bf16.mxu0 %v975
          %1727 = vmatmul.mubr.bf16.gmra.mrb[0].mxu0 %v974
          %v1728 = vpop.f32.mrb[0].mxu0
          %v1729 = vadd.f32 0.0, %v1728
          %v1730 = vpop.f32.mrb[0].mxu0
          %v1731 = vpop.f32.mrb[0].mxu0
          %v1732 = vadd.f32 0.0, %v1731
          %v1733 = vpop.f32.mrb[0].mxu0
          %1734 = vmatprep.mubr.bf16.mxu0 %v984
          %1735 = vmatmul.mubr.bf16.gmra.mrb[0].mxu0 %v983
          %v1736 = vpop.f32.mrb[0].mxu0
          %v1737 = vadd.f32 0.0, %v1736
          %v1738 = vpop.f32.mrb[0].mxu0
          %v1739 = vpop.f32.mrb[0].mxu0
          %v1740 = vadd.f32 0.0, %v1739
          %v1741 = vpop.f32.mrb[0].mxu0
          %1742 = vmatprep.mubr.bf16.mxu0 %v993
          %1743 = vmatmul.mubr.bf16.gmra.mrb[0].mxu0 %v992
          %v1744 = vpop.f32.mrb[0].mxu0
          %v1745 = vadd.f32 0.0, %v1744
          %v1746 = vpop.f32.mrb[0].mxu0
          %v1747 = vpop.f32.mrb[0].mxu0
          %v1748 = vadd.f32 0.0, %v1747
          %v1749 = vpop.f32.mrb[0].mxu0
          %1750 = vmatprep.mubr.bf16.mxu0 %v1002
          %1751 = vmatmul.mubr.bf16.gmra.mrb[0].mxu0 %v1001
          %v1752 = vpop.f32.mrb[0].mxu0
          %v1753 = vadd.f32 0.0, %v1752
          %v1754 = vpop.f32.mrb[0].mxu0
          %v1755 = vpop.f32.mrb[0].mxu0
          %v1756 = vadd.f32 0.0, %v1755
          %v1757 = vpop.f32.mrb[0].mxu0
          %1758 = vmatprep.mubr.bf16.mxu0 %v1011
          %1759 = vmatmul.mubr.bf16.gmra.mrb[0].mxu0 %v1010
          %v1760 = vpop.f32.mrb[0].mxu0
          %v1761 = vadd.f32 0.0, %v1760
          %v1762 = vpop.f32.mrb[0].mxu0
          %v1763 = vpop.f32.mrb[0].mxu0
          %v1764 = vadd.f32 0.0, %v1763
          %v1765 = vpop.f32.mrb[0].mxu0
          %1766 = vmatprep.mubr.bf16.mxu0 %v1020
          %1767 = vmatmul.mubr.bf16.gmra.mrb[0].mxu0 %v1019
          %v1768 = vpop.f32.mrb[0].mxu0
          %v1769 = vadd.f32 0.0, %v1768
          %v1770 = vpop.f32.mrb[0].mxu0
          %v1771 = vpop.f32.mrb[0].mxu0
          %v1772 = vadd.f32 0.0, %v1771
          %v1773 = vpop.f32.mrb[0].mxu0
          %1774 = vmatprep.mubr.bf16.mxu0 %v1029
          %1775 = vmatmul.mubr.bf16.gmra.mrb[0].mxu0 %v1028
          %v1776 = vpop.f32.mrb[0].mxu0
          %v1777 = vadd.f32 0.0, %v1776
          %v1778 = vpop.f32.mrb[0].mxu0
          %v1779 = vpop.f32.mrb[0].mxu0
          %v1780 = vadd.f32 0.0, %v1779
          %v1781 = vpop.f32.mrb[0].mxu0
          %1782 = vmatprep.mubr.bf16.mxu0 %v1038
          %1783 = vmatmul.mubr.bf16.gmra.mrb[0].mxu0 %v1037
          %v1784 = vpop.f32.mrb[0].mxu0
          %v1785 = vadd.f32 0.0, %v1784
          %v1786 = vpop.f32.mrb[0].mxu0
          %v1787 = vpop.f32.mrb[0].mxu0
          %v1788 = vadd.f32 0.0, %v1787
          %v1789 = vpop.f32.mrb[0].mxu0
          %1790 = vmatprep.mubr.bf16.mxu0 %v1047
          %1791 = vmatmul.mubr.bf16.gmra.mrb[0].mxu0 %v1046
          %v1792 = vpop.f32.mrb[0].mxu0
          %v1793 = vadd.f32 0.0, %v1792
          %v1794 = vpop.f32.mrb[0].mxu0
          %v1795 = vpop.f32.mrb[0].mxu0
          %v1796 = vadd.f32 0.0, %v1795
          %v1797 = vpop.f32.mrb[0].mxu0
          %1798 = vmatprep.mubr.bf16.mxu0 %v1056
          %1799 = vmatmul.mubr.bf16.gmra.mrb[0].mxu0 %v1055
          %v1800 = vpop.f32.mrb[0].mxu0
          %v1801 = vadd.f32 0.0, %v1800
          %v1802 = vpop.f32.mrb[0].mxu0
          %v1803 = vpop.f32.mrb[0].mxu0
          %v1804 = vadd.f32 0.0, %v1803
          %v1805 = vpop.f32.mrb[0].mxu0
          %1806 = vmatprep.mubr.bf16.mxu0 %v1065
          %1807 = vmatmul.mubr.bf16.gmra.mrb[0].mxu0 %v1064
          %v1808 = vpop.f32.mrb[0].mxu0
          %v1809 = vadd.f32 0.0, %v1808
          %v1810 = vpop.f32.mrb[0].mxu0
          %v1811 = vpop.f32.mrb[0].mxu0
          %v1812 = vadd.f32 0.0, %v1811
          %v1813 = vpop.f32.mrb[0].mxu0
          %1814 = vmatprep.mubr.bf16.mxu0 %v1074
          %1815 = vmatmul.mubr.bf16.gmra.mrb[0].mxu0 %v1073
          %v1816 = vpop.f32.mrb[0].mxu0
          %v1817 = vadd.f32 0.0, %v1816
          %v1818 = vpop.f32.mrb[0].mxu0
          %v1819 = vpop.f32.mrb[0].mxu0
          %v1820 = vadd.f32 0.0, %v1819
          %v1821 = vpop.f32.mrb[0].mxu0
          %1822 = vmatprep.mubr.bf16.mxu0 %v1083
          %1823 = vmatmul.mubr.bf16.gmra.mrb[0].mxu0 %v1082
          %v1824 = vpop.f32.mrb[0].mxu0
          %v1825 = vadd.f32 0.0, %v1824
          %v1826 = vpop.f32.mrb[0].mxu0
          %v1827 = vpop.f32.mrb[0].mxu0
          %v1828 = vadd.f32 0.0, %v1827
          %v1829 = vpop.f32.mrb[0].mxu0
          %1830 = vmatprep.mubr.bf16.mxu0 %v1092
          %1831 = vmatmul.mubr.bf16.gmra.mrb[0].mxu0 %v1091
          %v1832 = vpop.f32.mrb[0].mxu0
          %v1833 = vadd.f32 0.0, %v1832
          %v1834 = vpop.f32.mrb[0].mxu0
          %v1835 = vpop.f32.mrb[0].mxu0
          %v1836 = vadd.f32 0.0, %v1835
          %v1837 = vpop.f32.mrb[0].mxu0
          %1838 = vmatprep.mubr.bf16.mxu0 %v1101
          %1839 = vmatmul.mubr.bf16.gmra.mrb[0].mxu0 %v1100
          %v1840 = vpop.f32.mrb[0].mxu0
          %v1841 = vadd.f32 0.0, %v1840
          %v1842 = vpop.f32.mrb[0].mxu0
          %v1843 = vpop.f32.mrb[0].mxu0
          %v1844 = vadd.f32 0.0, %v1843
          %v1845 = vpop.f32.mrb[0].mxu0
          %1846 = vmatprep.mubr.bf16.mxu0 %v1110
          %1847 = vmatmul.mubr.bf16.gmra.mrb[0].mxu0 %v1109
          %v1848 = vpop.f32.mrb[0].mxu0
          %v1849 = vadd.f32 0.0, %v1848
          %v1850 = vpop.f32.mrb[0].mxu0
          %v1851 = vpop.f32.mrb[0].mxu0
          %v1852 = vadd.f32 0.0, %v1851
          %v1853 = vpop.f32.mrb[0].mxu0
          %1854 = vdwg.mxu0
          %1855 = vmatprep.subr.bf16.mxu0 0
          %1856 = vmatpush1.bf16.msra.mxu0 %v1566
          %1857 = vmatprep.subr.bf16.mxu0 0
          %1858 = vmatpush1.bf16.msra.mxu0 %v1567
          %1859 = vmatprep.subr.bf16.mxu0 0
          %1860 = vmatpush1.bf16.msra.mxu0 %v1568
          %1861 = vmatprep.subr.bf16.mxu0 0
          %1862 = vmatpush1.bf16.msra.mxu0 %v1569
          %1863 = vmatprep.subr.bf16.mxu0 0
          %1864 = vmatpush1.bf16.msra.mxu0 %v1570
          %1865 = vmatprep.subr.bf16.mxu0 0
          %1866 = vmatpush1.bf16.msra.mxu0 %v1571
          %1867 = vmatprep.subr.bf16.mxu0 0
          %1868 = vmatpush1.bf16.msra.mxu0 %v1572
          %1869 = vmatprep.subr.bf16.mxu0 0
          %1870 = vmatpush1.bf16.msra.mxu0 %v1573
          %1871 = vmatprep.subr.bf16.mxu0 0
          %1872 = vmatpush1.bf16.msra.mxu0 %v1574
          %1873 = vmatprep.subr.bf16.mxu0 0
          %1874 = vmatpush1.bf16.msra.mxu0 %v1575
          %1875 = vmatprep.subr.bf16.mxu0 0
          %1876 = vmatpush1.bf16.msra.mxu0 %v1576
          %1877 = vmatprep.subr.bf16.mxu0 0
          %1878 = vmatpush1.bf16.msra.mxu0 %v1577
          %1879 = vmatprep.subr.bf16.mxu0 0
          %1880 = vmatpush1.bf16.msra.mxu0 %v1578
          %1881 = vmatprep.subr.bf16.mxu0 0
          %1882 = vmatpush1.bf16.msra.mxu0 %v1579
          %1883 = vmatprep.subr.bf16.mxu0 0
          %1884 = vmatpush1.bf16.msra.mxu0 %v1580
          %1885 = vmatprep.subr.bf16.mxu0 0
          %1886 = vmatpush1.bf16.msra.mxu0 %v1581
          %1887 = vmatprep.mubr.bf16.mxu0 %v977
          %1888 = vmatmul.mubr.bf16.gmra.mrb[0].mxu0 %v976
          %v1889 = vpop.f32.mrb[0].mxu0
          %v1890 = vadd.f32 %v1729, %v1889
          %v1891 = vpop.f32.mrb[0].mxu0
          %v1892 = vpop.f32.mrb[0].mxu0
          %v1893 = vadd.f32 %v1732, %v1892
          %v1894 = vpop.f32.mrb[0].mxu0
          %1895 = vmatprep.mubr.bf16.mxu0 %v986
          %1896 = vmatmul.mubr.bf16.gmra.mrb[0].mxu0 %v985
          %v1897 = vpop.f32.mrb[0].mxu0
          %v1898 = vadd.f32 %v1737, %v1897
          %v1899 = vpop.f32.mrb[0].mxu0
          %v1900 = vpop.f32.mrb[0].mxu0
          %v1901 = vadd.f32 %v1740, %v1900
          %v1902 = vpop.f32.mrb[0].mxu0
          %1903 = vmatprep.mubr.bf16.mxu0 %v995
          %1904 = vmatmul.mubr.bf16.gmra.mrb[0].mxu0 %v994
          %v1905 = vpop.f32.mrb[0].mxu0
          %v1906 = vadd.f32 %v1745, %v1905
          %v1907 = vpop.f32.mrb[0].mxu0
          %v1908 = vpop.f32.mrb[0].mxu0
          %v1909 = vadd.f32 %v1748, %v1908
          %v1910 = vpop.f32.mrb[0].mxu0
          %1911 = vmatprep.mubr.bf16.mxu0 %v1004
          %1912 = vmatmul.mubr.bf16.gmra.mrb[0].mxu0 %v1003
          %v1913 = vpop.f32.mrb[0].mxu0
          %v1914 = vadd.f32 %v1753, %v1913
          %v1915 = vpop.f32.mrb[0].mxu0
          %v1916 = vpop.f32.mrb[0].mxu0
          %v1917 = vadd.f32 %v1756, %v1916
          %v1918 = vpop.f32.mrb[0].mxu0
          %1919 = vmatprep.mubr.bf16.mxu0 %v1013
          %1920 = vmatmul.mubr.bf16.gmra.mrb[0].mxu0 %v1012
          %v1921 = vpop.f32.mrb[0].mxu0
          %v1922 = vadd.f32 %v1761, %v1921
          %v1923 = vpop.f32.mrb[0].mxu0
          %v1924 = vpop.f32.mrb[0].mxu0
          %v1925 = vadd.f32 %v1764, %v1924
          %v1926 = vpop.f32.mrb[0].mxu0
          %1927 = vmatprep.mubr.bf16.mxu0 %v1022
          %1928 = vmatmul.mubr.bf16.gmra.mrb[0].mxu0 %v1021
          %v1929 = vpop.f32.mrb[0].mxu0
          %v1930 = vadd.f32 %v1769, %v1929
          %v1931 = vpop.f32.mrb[0].mxu0
          %v1932 = vpop.f32.mrb[0].mxu0
          %v1933 = vadd.f32 %v1772, %v1932
          %v1934 = vpop.f32.mrb[0].mxu0
          %1935 = vmatprep.mubr.bf16.mxu0 %v1031
          %1936 = vmatmul.mubr.bf16.gmra.mrb[0].mxu0 %v1030
          %v1937 = vpop.f32.mrb[0].mxu0
          %v1938 = vadd.f32 %v1777, %v1937
          %v1939 = vpop.f32.mrb[0].mxu0
          %v1940 = vpop.f32.mrb[0].mxu0
          %v1941 = vadd.f32 %v1780, %v1940
          %v1942 = vpop.f32.mrb[0].mxu0
          %1943 = vmatprep.mubr.bf16.mxu0 %v1040
          %1944 = vmatmul.mubr.bf16.gmra.mrb[0].mxu0 %v1039
          %v1945 = vpop.f32.mrb[0].mxu0
          %v1946 = vadd.f32 %v1785, %v1945
          %v1947 = vpop.f32.mrb[0].mxu0
          %v1948 = vpop.f32.mrb[0].mxu0
          %v1949 = vadd.f32 %v1788, %v1948
          %v1950 = vpop.f32.mrb[0].mxu0
          %1951 = vmatprep.mubr.bf16.mxu0 %v1049
          %1952 = vmatmul.mubr.bf16.gmra.mrb[0].mxu0 %v1048
          %v1953 = vpop.f32.mrb[0].mxu0
          %v1954 = vadd.f32 %v1793, %v1953
          %v1955 = vpop.f32.mrb[0].mxu0
          %v1956 = vpop.f32.mrb[0].mxu0
          %v1957 = vadd.f32 %v1796, %v1956
          %v1958 = vpop.f32.mrb[0].mxu0
          %1959 = vmatprep.mubr.bf16.mxu0 %v1058
          %1960 = vmatmul.mubr.bf16.gmra.mrb[0].mxu0 %v1057
          %v1961 = vpop.f32.mrb[0].mxu0
          %v1962 = vadd.f32 %v1801, %v1961
          %v1963 = vpop.f32.mrb[0].mxu0
          %v1964 = vpop.f32.mrb[0].mxu0
          %v1965 = vadd.f32 %v1804, %v1964
          %v1966 = vpop.f32.mrb[0].mxu0
          %1967 = vmatprep.mubr.bf16.mxu0 %v1067
          %1968 = vmatmul.mubr.bf16.gmra.mrb[0].mxu0 %v1066
          %v1969 = vpop.f32.mrb[0].mxu0
          %v1970 = vadd.f32 %v1809, %v1969
          %v1971 = vpop.f32.mrb[0].mxu0
          %v1972 = vpop.f32.mrb[0].mxu0
          %v1973 = vadd.f32 %v1812, %v1972
          %v1974 = vpop.f32.mrb[0].mxu0
          %1975 = vmatprep.mubr.bf16.mxu0 %v1076
          %1976 = vmatmul.mubr.bf16.gmra.mrb[0].mxu0 %v1075
          %v1977 = vpop.f32.mrb[0].mxu0
          %v1978 = vadd.f32 %v1817, %v1977
          %v1979 = vpop.f32.mrb[0].mxu0
          %v1980 = vpop.f32.mrb[0].mxu0
          %v1981 = vadd.f32 %v1820, %v1980
          %v1982 = vpop.f32.mrb[0].mxu0
          %1983 = vmatprep.mubr.bf16.mxu0 %v1085
          %1984 = vmatmul.mubr.bf16.gmra.mrb[0].mxu0 %v1084
          %v1985 = vpop.f32.mrb[0].mxu0
          %v1986 = vadd.f32 %v1825, %v1985
          %v1987 = vpop.f32.mrb[0].mxu0
          %v1988 = vpop.f32.mrb[0].mxu0
          %v1989 = vadd.f32 %v1828, %v1988
          %v1990 = vpop.f32.mrb[0].mxu0
          %1991 = vmatprep.mubr.bf16.mxu0 %v1094
          %1992 = vmatmul.mubr.bf16.gmra.mrb[0].mxu0 %v1093
          %v1993 = vpop.f32.mrb[0].mxu0
          %v1994 = vadd.f32 %v1833, %v1993
          %v1995 = vpop.f32.mrb[0].mxu0
          %v1996 = vpop.f32.mrb[0].mxu0
          %v1997 = vadd.f32 %v1836, %v1996
          %v1998 = vpop.f32.mrb[0].mxu0
          %1999 = vmatprep.mubr.bf16.mxu0 %v1103
          %2000 = vmatmul.mubr.bf16.gmra.mrb[0].mxu0 %v1102
          %v2001 = vpop.f32.mrb[0].mxu0
          %v2002 = vadd.f32 %v1841, %v2001
          %v2003 = vpop.f32.mrb[0].mxu0
          %v2004 = vpop.f32.mrb[0].mxu0
          %v2005 = vadd.f32 %v1844, %v2004
          %v2006 = vpop.f32.mrb[0].mxu0
          %2007 = vmatprep.mubr.bf16.mxu0 %v1112
          %2008 = vmatmul.mubr.bf16.gmra.mrb[0].mxu0 %v1111
          %v2009 = vpop.f32.mrb[0].mxu0
          %v2010 = vadd.f32 %v1849, %v2009
          %v2011 = vpop.f32.mrb[0].mxu0
          %v2012 = vpop.f32.mrb[0].mxu0
          %v2013 = vadd.f32 %v1852, %v2012
          %v2014 = vpop.f32.mrb[0].mxu0
          %2015 = vdwg.mxu0
          %2016 = vmatprep.subr.bf16.mxu0 0
          %2017 = vmatpush1.bf16.msra.mxu0 %v1582
          %2018 = vmatprep.subr.bf16.mxu0 0
          %2019 = vmatpush1.bf16.msra.mxu0 %v1583
          %2020 = vmatprep.subr.bf16.mxu0 0
          %2021 = vmatpush1.bf16.msra.mxu0 %v1584
          %2022 = vmatprep.subr.bf16.mxu0 0
          %2023 = vmatpush1.bf16.msra.mxu0 %v1585
          %2024 = vmatprep.subr.bf16.mxu0 0
          %2025 = vmatpush1.bf16.msra.mxu0 %v1586
          %2026 = vmatprep.subr.bf16.mxu0 0
          %2027 = vmatpush1.bf16.msra.mxu0 %v1587
          %2028 = vmatprep.subr.bf16.mxu0 0
          %2029 = vmatpush1.bf16.msra.mxu0 %v1588
          %2030 = vmatprep.subr.bf16.mxu0 0
          %2031 = vmatpush1.bf16.msra.mxu0 %v1589
          %2032 = vmatprep.subr.bf16.mxu0 0
          %2033 = vmatpush1.bf16.msra.mxu0 %v1590
          %2034 = vmatprep.subr.bf16.mxu0 0
          %2035 = vmatpush1.bf16.msra.mxu0 %v1591
          %2036 = vmatprep.subr.bf16.mxu0 0
          %2037 = vmatpush1.bf16.msra.mxu0 %v1592
          %2038 = vmatprep.subr.bf16.mxu0 0
          %2039 = vmatpush1.bf16.msra.mxu0 %v1593
          %2040 = vmatprep.subr.bf16.mxu0 0
          %2041 = vmatpush1.bf16.msra.mxu0 %v1594
          %2042 = vmatprep.subr.bf16.mxu0 0
          %2043 = vmatpush1.bf16.msra.mxu0 %v1595
          %2044 = vmatprep.subr.bf16.mxu0 0
          %2045 = vmatpush1.bf16.msra.mxu0 %v1596
          %2046 = vmatprep.subr.bf16.mxu0 0
          %2047 = vmatpush1.bf16.msra.mxu0 %v1597
          %2048 = vmatprep.mubr.bf16.mxu0 %v979
          %2049 = vmatmul.mubr.bf16.gmra.mrb[0].mxu0 %v978
          %v2050 = vpop.f32.mrb[0].mxu0
          %v2051 = vadd.f32 %v1890, %v2050
          %v2052 = vpop.f32.mrb[0].mxu0
          %v2053 = vpop.f32.mrb[0].mxu0
          %v2054 = vadd.f32 %v1893, %v2053
          %v2055 = vpop.f32.mrb[0].mxu0
          %2056 = vmatprep.mubr.bf16.mxu0 %v988
          %2057 = vmatmul.mubr.bf16.gmra.mrb[0].mxu0 %v987
          %v2058 = vpop.f32.mrb[0].mxu0
          %v2059 = vadd.f32 %v1898, %v2058
          %v2060 = vpop.f32.mrb[0].mxu0
          %v2061 = vpop.f32.mrb[0].mxu0
          %v2062 = vadd.f32 %v1901, %v2061
          %v2063 = vpop.f32.mrb[0].mxu0
          %2064 = vmatprep.mubr.bf16.mxu0 %v997
          %2065 = vmatmul.mubr.bf16.gmra.mrb[0].mxu0 %v996
          %v2066 = vpop.f32.mrb[0].mxu0
          %v2067 = vadd.f32 %v1906, %v2066
          %v2068 = vpop.f32.mrb[0].mxu0
          %v2069 = vpop.f32.mrb[0].mxu0
          %v2070 = vadd.f32 %v1909, %v2069
          %v2071 = vpop.f32.mrb[0].mxu0
          %2072 = vmatprep.mubr.bf16.mxu0 %v1006
          %2073 = vmatmul.mubr.bf16.gmra.mrb[0].mxu0 %v1005
          %v2074 = vpop.f32.mrb[0].mxu0
          %v2075 = vadd.f32 %v1914, %v2074
          %v2076 = vpop.f32.mrb[0].mxu0
          %v2077 = vpop.f32.mrb[0].mxu0
          %v2078 = vadd.f32 %v1917, %v2077
          %v2079 = vpop.f32.mrb[0].mxu0
          %2080 = vmatprep.mubr.bf16.mxu0 %v1015
          %2081 = vmatmul.mubr.bf16.gmra.mrb[0].mxu0 %v1014
          %v2082 = vpop.f32.mrb[0].mxu0
          %v2083 = vadd.f32 %v1922, %v2082
          %v2084 = vpop.f32.mrb[0].mxu0
          %v2085 = vpop.f32.mrb[0].mxu0
          %v2086 = vadd.f32 %v1925, %v2085
          %v2087 = vpop.f32.mrb[0].mxu0
          %2088 = vmatprep.mubr.bf16.mxu0 %v1024
          %2089 = vmatmul.mubr.bf16.gmra.mrb[0].mxu0 %v1023
          %v2090 = vpop.f32.mrb[0].mxu0
          %v2091 = vadd.f32 %v1930, %v2090
          %v2092 = vpop.f32.mrb[0].mxu0
          %v2093 = vpop.f32.mrb[0].mxu0
          %v2094 = vadd.f32 %v1933, %v2093
          %v2095 = vpop.f32.mrb[0].mxu0
          %2096 = vmatprep.mubr.bf16.mxu0 %v1033
          %2097 = vmatmul.mubr.bf16.gmra.mrb[0].mxu0 %v1032
          %v2098 = vpop.f32.mrb[0].mxu0
          %v2099 = vadd.f32 %v1938, %v2098
          %v2100 = vpop.f32.mrb[0].mxu0
          %v2101 = vpop.f32.mrb[0].mxu0
          %v2102 = vadd.f32 %v1941, %v2101
          %v2103 = vpop.f32.mrb[0].mxu0
          %2104 = vmatprep.mubr.bf16.mxu0 %v1042
          %2105 = vmatmul.mubr.bf16.gmra.mrb[0].mxu0 %v1041
          %v2106 = vpop.f32.mrb[0].mxu0
          %v2107 = vadd.f32 %v1946, %v2106
          %v2108 = vpop.f32.mrb[0].mxu0
          %v2109 = vpop.f32.mrb[0].mxu0
          %v2110 = vadd.f32 %v1949, %v2109
          %v2111 = vpop.f32.mrb[0].mxu0
          %2112 = vmatprep.mubr.bf16.mxu0 %v1051
          %2113 = vmatmul.mubr.bf16.gmra.mrb[0].mxu0 %v1050
          %v2114 = vpop.f32.mrb[0].mxu0
          %v2115 = vadd.f32 %v1954, %v2114
          %v2116 = vpop.f32.mrb[0].mxu0
          %v2117 = vpop.f32.mrb[0].mxu0
          %v2118 = vadd.f32 %v1957, %v2117
          %v2119 = vpop.f32.mrb[0].mxu0
          %2120 = vmatprep.mubr.bf16.mxu0 %v1060
          %2121 = vmatmul.mubr.bf16.gmra.mrb[0].mxu0 %v1059
          %v2122 = vpop.f32.mrb[0].mxu0
          %v2123 = vadd.f32 %v1962, %v2122
          %v2124 = vpop.f32.mrb[0].mxu0
          %v2125 = vpop.f32.mrb[0].mxu0
          %v2126 = vadd.f32 %v1965, %v2125
          %v2127 = vpop.f32.mrb[0].mxu0
          %2128 = vmatprep.mubr.bf16.mxu0 %v1069
          %2129 = vmatmul.mubr.bf16.gmra.mrb[0].mxu0 %v1068
          %v2130 = vpop.f32.mrb[0].mxu0
          %v2131 = vadd.f32 %v1970, %v2130
          %v2132 = vpop.f32.mrb[0].mxu0
          %v2133 = vpop.f32.mrb[0].mxu0
          %v2134 = vadd.f32 %v1973, %v2133
          %v2135 = vpop.f32.mrb[0].mxu0
          %2136 = vmatprep.mubr.bf16.mxu0 %v1078
          %2137 = vmatmul.mubr.bf16.gmra.mrb[0].mxu0 %v1077
          %v2138 = vpop.f32.mrb[0].mxu0
          %v2139 = vadd.f32 %v1978, %v2138
          %v2140 = vpop.f32.mrb[0].mxu0
          %v2141 = vpop.f32.mrb[0].mxu0
          %v2142 = vadd.f32 %v1981, %v2141
          %v2143 = vpop.f32.mrb[0].mxu0
          %2144 = vmatprep.mubr.bf16.mxu0 %v1087
          %2145 = vmatmul.mubr.bf16.gmra.mrb[0].mxu0 %v1086
          %v2146 = vpop.f32.mrb[0].mxu0
          %v2147 = vadd.f32 %v1986, %v2146
          %v2148 = vpop.f32.mrb[0].mxu0
          %v2149 = vpop.f32.mrb[0].mxu0
          %v2150 = vadd.f32 %v1989, %v2149
          %v2151 = vpop.f32.mrb[0].mxu0
          %2152 = vmatprep.mubr.bf16.mxu0 %v1096
          %2153 = vmatmul.mubr.bf16.gmra.mrb[0].mxu0 %v1095
          %v2154 = vpop.f32.mrb[0].mxu0
          %v2155 = vadd.f32 %v1994, %v2154
          %v2156 = vpop.f32.mrb[0].mxu0
          %v2157 = vpop.f32.mrb[0].mxu0
          %v2158 = vadd.f32 %v1997, %v2157
          %v2159 = vpop.f32.mrb[0].mxu0
          %2160 = vmatprep.mubr.bf16.mxu0 %v1105
          %2161 = vmatmul.mubr.bf16.gmra.mrb[0].mxu0 %v1104
          %v2162 = vpop.f32.mrb[0].mxu0
          %v2163 = vadd.f32 %v2002, %v2162
          %v2164 = vpop.f32.mrb[0].mxu0
          %v2165 = vpop.f32.mrb[0].mxu0
          %v2166 = vadd.f32 %v2005, %v2165
          %v2167 = vpop.f32.mrb[0].mxu0
          %2168 = vmatprep.mubr.bf16.mxu0 %v1114
          %2169 = vmatmul.mubr.bf16.gmra.mrb[0].mxu0 %v1113
          %v2170 = vpop.f32.mrb[0].mxu0
          %v2171 = vadd.f32 %v2010, %v2170
          %v2172 = vpop.f32.mrb[0].mxu0
          %v2173 = vpop.f32.mrb[0].mxu0
          %v2174 = vadd.f32 %v2013, %v2173
          %v2175 = vpop.f32.mrb[0].mxu0
          %2176 = vdwg.mxu0
          %2177 = vmatprep.subr.bf16.mxu0 0
          %2178 = vmatpush1.bf16.msra.mxu0 %v1598
          %2179 = vmatprep.subr.bf16.mxu0 0
          %2180 = vmatpush1.bf16.msra.mxu0 %v1599
          %2181 = vmatprep.subr.bf16.mxu0 0
          %2182 = vmatpush1.bf16.msra.mxu0 %v1600
          %2183 = vmatprep.subr.bf16.mxu0 0
          %2184 = vmatpush1.bf16.msra.mxu0 %v1601
          %2185 = vmatprep.subr.bf16.mxu0 0
          %2186 = vmatpush1.bf16.msra.mxu0 %v1602
          %2187 = vmatprep.subr.bf16.mxu0 0
          %2188 = vmatpush1.bf16.msra.mxu0 %v1603
          %2189 = vmatprep.subr.bf16.mxu0 0
          %2190 = vmatpush1.bf16.msra.mxu0 %v1604
          %2191 = vmatprep.subr.bf16.mxu0 0
          %2192 = vmatpush1.bf16.msra.mxu0 %v1605
          %2193 = vmatprep.subr.bf16.mxu0 0
          %2194 = vmatpush1.bf16.msra.mxu0 %v1606
          %2195 = vmatprep.subr.bf16.mxu0 0
          %2196 = vmatpush1.bf16.msra.mxu0 %v1607
          %2197 = vmatprep.subr.bf16.mxu0 0
          %2198 = vmatpush1.bf16.msra.mxu0 %v1608
          %2199 = vmatprep.subr.bf16.mxu0 0
          %2200 = vmatpush1.bf16.msra.mxu0 %v1609
          %2201 = vmatprep.subr.bf16.mxu0 0
          %2202 = vmatpush1.bf16.msra.mxu0 %v1610
          %2203 = vmatprep.subr.bf16.mxu0 0
          %2204 = vmatpush1.bf16.msra.mxu0 %v1611
          %2205 = vmatprep.subr.bf16.mxu0 0
          %2206 = vmatpush1.bf16.msra.mxu0 %v1612
          %2207 = vmatprep.subr.bf16.mxu0 0
          %2208 = vmatpush1.bf16.msra.mxu0 %v1613
          %2209 = vmatprep.mubr.bf16.mxu0 %v981
          %2210 = vmatmul.mubr.bf16.gmra.mrb[0].mxu0 %v980
          %v2211 = vpop.f32.mrb[0].mxu0
          %v2212 = vadd.f32 %v2051, %v2211
          %v2213 = vpop.f32.mrb[0].mxu0
          %v2214 = vpop.f32.mrb[0].mxu0
          %v2215 = vadd.f32 %v2054, %v2214
          %v2216 = vpop.f32.mrb[0].mxu0
          %2217 = vmatprep.mubr.bf16.mxu0 %v990
          %2218 = vmatmul.mubr.bf16.gmra.mrb[0].mxu0 %v989
          %v2219 = vpop.f32.mrb[0].mxu0
          %v2220 = vadd.f32 %v2059, %v2219
          %v2221 = vpop.f32.mrb[0].mxu0
          %v2222 = vpop.f32.mrb[0].mxu0
          %v2223 = vadd.f32 %v2062, %v2222
          %v2224 = vpop.f32.mrb[0].mxu0
          %2225 = vmatprep.mubr.bf16.mxu0 %v999
          %2226 = vmatmul.mubr.bf16.gmra.mrb[0].mxu0 %v998
          %v2227 = vpop.f32.mrb[0].mxu0
          %v2228 = vadd.f32 %v2067, %v2227
          %v2229 = vpop.f32.mrb[0].mxu0
          %v2230 = vpop.f32.mrb[0].mxu0
          %v2231 = vadd.f32 %v2070, %v2230
          %v2232 = vpop.f32.mrb[0].mxu0
          %2233 = vmatprep.mubr.bf16.mxu0 %v1008
          %2234 = vmatmul.mubr.bf16.gmra.mrb[0].mxu0 %v1007
          %v2235 = vpop.f32.mrb[0].mxu0
          %v2236 = vadd.f32 %v2075, %v2235
          %v2237 = vpop.f32.mrb[0].mxu0
          %v2238 = vpop.f32.mrb[0].mxu0
          %v2239 = vadd.f32 %v2078, %v2238
          %v2240 = vpop.f32.mrb[0].mxu0
          %2241 = vmatprep.mubr.bf16.mxu0 %v1017
          %2242 = vmatmul.mubr.bf16.gmra.mrb[0].mxu0 %v1016
          %v2243 = vpop.f32.mrb[0].mxu0
          %v2244 = vadd.f32 %v2083, %v2243
          %v2245 = vpop.f32.mrb[0].mxu0
          %v2246 = vpop.f32.mrb[0].mxu0
          %v2247 = vadd.f32 %v2086, %v2246
          %v2248 = vpop.f32.mrb[0].mxu0
          %2249 = vmatprep.mubr.bf16.mxu0 %v1026
          %2250 = vmatmul.mubr.bf16.gmra.mrb[0].mxu0 %v1025
          %v2251 = vpop.f32.mrb[0].mxu0
          %v2252 = vadd.f32 %v2091, %v2251
          %v2253 = vpop.f32.mrb[0].mxu0
          %v2254 = vpop.f32.mrb[0].mxu0
          %v2255 = vadd.f32 %v2094, %v2254
          %v2256 = vpop.f32.mrb[0].mxu0
          %2257 = vmatprep.mubr.bf16.mxu0 %v1035
          %2258 = vmatmul.mubr.bf16.gmra.mrb[0].mxu0 %v1034
          %v2259 = vpop.f32.mrb[0].mxu0
          %v2260 = vadd.f32 %v2099, %v2259
          %v2261 = vpop.f32.mrb[0].mxu0
          %v2262 = vpop.f32.mrb[0].mxu0
          %v2263 = vadd.f32 %v2102, %v2262
          %v2264 = vpop.f32.mrb[0].mxu0
          %2265 = vmatprep.mubr.bf16.mxu0 %v1044
          %2266 = vmatmul.mubr.bf16.gmra.mrb[0].mxu0 %v1043
          %v2267 = vpop.f32.mrb[0].mxu0
          %v2268 = vadd.f32 %v2107, %v2267
          %v2269 = vpop.f32.mrb[0].mxu0
          %v2270 = vpop.f32.mrb[0].mxu0
          %v2271 = vadd.f32 %v2110, %v2270
          %v2272 = vpop.f32.mrb[0].mxu0
          %2273 = vmatprep.mubr.bf16.mxu0 %v1053
          %2274 = vmatmul.mubr.bf16.gmra.mrb[0].mxu0 %v1052
          %v2275 = vpop.f32.mrb[0].mxu0
          %v2276 = vadd.f32 %v2115, %v2275
          %v2277 = vpop.f32.mrb[0].mxu0
          %v2278 = vpop.f32.mrb[0].mxu0
          %v2279 = vadd.f32 %v2118, %v2278
          %v2280 = vpop.f32.mrb[0].mxu0
          %2281 = vmatprep.mubr.bf16.mxu0 %v1062
          %2282 = vmatmul.mubr.bf16.gmra.mrb[0].mxu0 %v1061
          %v2283 = vpop.f32.mrb[0].mxu0
          %v2284 = vadd.f32 %v2123, %v2283
          %v2285 = vpop.f32.mrb[0].mxu0
          %v2286 = vpop.f32.mrb[0].mxu0
          %v2287 = vadd.f32 %v2126, %v2286
          %v2288 = vpop.f32.mrb[0].mxu0
          %2289 = vmatprep.mubr.bf16.mxu0 %v1071
          %2290 = vmatmul.mubr.bf16.gmra.mrb[0].mxu0 %v1070
          %v2291 = vpop.f32.mrb[0].mxu0
          %v2292 = vadd.f32 %v2131, %v2291
          %v2293 = vpop.f32.mrb[0].mxu0
          %v2294 = vpop.f32.mrb[0].mxu0
          %v2295 = vadd.f32 %v2134, %v2294
          %v2296 = vpop.f32.mrb[0].mxu0
          %2297 = vmatprep.mubr.bf16.mxu0 %v1080
          %2298 = vmatmul.mubr.bf16.gmra.mrb[0].mxu0 %v1079
          %v2299 = vpop.f32.mrb[0].mxu0
          %v2300 = vadd.f32 %v2139, %v2299
          %v2301 = vpop.f32.mrb[0].mxu0
          %v2302 = vpop.f32.mrb[0].mxu0
          %v2303 = vadd.f32 %v2142, %v2302
          %v2304 = vpop.f32.mrb[0].mxu0
          %2305 = vmatprep.mubr.bf16.mxu0 %v1089
          %2306 = vmatmul.mubr.bf16.gmra.mrb[0].mxu0 %v1088
          %v2307 = vpop.f32.mrb[0].mxu0
          %v2308 = vadd.f32 %v2147, %v2307
          %v2309 = vpop.f32.mrb[0].mxu0
          %v2310 = vpop.f32.mrb[0].mxu0
          %v2311 = vadd.f32 %v2150, %v2310
          %v2312 = vpop.f32.mrb[0].mxu0
          %2313 = vmatprep.mubr.bf16.mxu0 %v1098
          %2314 = vmatmul.mubr.bf16.gmra.mrb[0].mxu0 %v1097
          %v2315 = vpop.f32.mrb[0].mxu0
          %v2316 = vadd.f32 %v2155, %v2315
          %v2317 = vpop.f32.mrb[0].mxu0
          %v2318 = vpop.f32.mrb[0].mxu0
          %v2319 = vadd.f32 %v2158, %v2318
          %v2320 = vpop.f32.mrb[0].mxu0
          %2321 = vmatprep.mubr.bf16.mxu0 %v1107
          %2322 = vmatmul.mubr.bf16.gmra.mrb[0].mxu0 %v1106
          %v2323 = vpop.f32.mrb[0].mxu0
          %v2324 = vadd.f32 %v2163, %v2323
          %v2325 = vpop.f32.mrb[0].mxu0
          %v2326 = vpop.f32.mrb[0].mxu0
          %v2327 = vadd.f32 %v2166, %v2326
          %v2328 = vpop.f32.mrb[0].mxu0
          %2329 = vmatprep.mubr.bf16.mxu0 %v1116
          %2330 = vmatmul.mubr.bf16.gmra.mrb[0].mxu0 %v1115
          %v2331 = vpop.f32.mrb[0].mxu0
          %v2332 = vadd.f32 %v2171, %v2331
          %v2333 = vpop.f32.mrb[0].mxu0
          %v2334 = vpop.f32.mrb[0].mxu0
          %v2335 = vadd.f32 %v2174, %v2334
          %v2336 = vpop.f32.mrb[0].mxu0
          %2337 = vdwg.mxu0
          %2338 = vmatprep.subr.bf16.mxu0 0
          %2339 = vmatpush1.bf16.msra.mxu0 %v1614
          %2340 = vmatprep.subr.bf16.mxu0 0
          %2341 = vmatpush1.bf16.msra.mxu0 %v1615
          %2342 = vmatprep.subr.bf16.mxu0 0
          %2343 = vmatpush1.bf16.msra.mxu0 %v1616
          %2344 = vmatprep.subr.bf16.mxu0 0
          %2345 = vmatpush1.bf16.msra.mxu0 %v1617
          %2346 = vmatprep.subr.bf16.mxu0 0
          %2347 = vmatpush1.bf16.msra.mxu0 %v1618
          %2348 = vmatprep.subr.bf16.mxu0 0
          %2349 = vmatpush1.bf16.msra.mxu0 %v1619
          %2350 = vmatprep.subr.bf16.mxu0 0
          %2351 = vmatpush1.bf16.msra.mxu0 %v1620
          %2352 = vmatprep.subr.bf16.mxu0 0
          %2353 = vmatpush1.bf16.msra.mxu0 %v1621
          %2354 = vmatprep.subr.bf16.mxu0 0
          %2355 = vmatpush1.bf16.msra.mxu0 0
          %2356 = vmatprep.subr.bf16.mxu0 0
          %2357 = vmatpush1.bf16.msra.mxu0 0
          %2358 = vmatprep.subr.bf16.mxu0 0
          %2359 = vmatpush1.bf16.msra.mxu0 0
          %2360 = vmatprep.subr.bf16.mxu0 0
          %2361 = vmatpush1.bf16.msra.mxu0 0
          %2362 = vmatprep.subr.bf16.mxu0 0
          %2363 = vmatpush1.bf16.msra.mxu0 0
          %2364 = vmatprep.subr.bf16.mxu0 0
          %2365 = vmatpush1.bf16.msra.mxu0 0
          %2366 = vmatprep.subr.bf16.mxu0 0
          %2367 = vmatpush1.bf16.msra.mxu0 0
          %2368 = vmatprep.subr.bf16.mxu0 0
          %2369 = vmatpush1.bf16.msra.mxu0 0
          %2370 = vmatprep.mubr.bf16.mxu0 0
          %2371 = vmatmul.mubr.bf16.gmra.mrb[0].mxu0 %v982
          %v2372 = vpop.f32.mrb[0].mxu0
          %v2373 = vadd.f32 %v2212, %v2372
          %v2374 = vpop.f32.mrb[0].mxu0
          %v2375 = vpop.f32.mrb[0].mxu0
          %v2376 = vadd.f32 %v2215, %v2375
          %v2377 = vpop.f32.mrb[0].mxu0
          %2378 = vmatprep.mubr.bf16.mxu0 0
          %2379 = vmatmul.mubr.bf16.gmra.mrb[0].mxu0 %v991
          %v2380 = vpop.f32.mrb[0].mxu0
          %v2381 = vadd.f32 %v2220, %v2380
          %v2382 = vpop.f32.mrb[0].mxu0
          %v2383 = vpop.f32.mrb[0].mxu0
          %v2384 = vadd.f32 %v2223, %v2383
          %v2385 = vpop.f32.mrb[0].mxu0
          %2386 = vmatprep.mubr.bf16.mxu0 0
          %2387 = vmatmul.mubr.bf16.gmra.mrb[0].mxu0 %v1000
          %v2388 = vpop.f32.mrb[0].mxu0
          %v2389 = vadd.f32 %v2228, %v2388
          %v2390 = vpop.f32.mrb[0].mxu0
          %v2391 = vpop.f32.mrb[0].mxu0
          %v2392 = vadd.f32 %v2231, %v2391
          %v2393 = vpop.f32.mrb[0].mxu0
          %2394 = vmatprep.mubr.bf16.mxu0 0
          %2395 = vmatmul.mubr.bf16.gmra.mrb[0].mxu0 %v1009
          %v2396 = vpop.f32.mrb[0].mxu0
          %v2397 = vadd.f32 %v2236, %v2396
          %v2398 = vpop.f32.mrb[0].mxu0
          %v2399 = vpop.f32.mrb[0].mxu0
          %v2400 = vadd.f32 %v2239, %v2399
          %v2401 = vpop.f32.mrb[0].mxu0
          %2402 = vmatprep.mubr.bf16.mxu0 0
          %2403 = vmatmul.mubr.bf16.gmra.mrb[0].mxu0 %v1018
          %v2404 = vpop.f32.mrb[0].mxu0
          %v2405 = vadd.f32 %v2244, %v2404
          %v2406 = vpop.f32.mrb[0].mxu0
          %v2407 = vpop.f32.mrb[0].mxu0
          %v2408 = vadd.f32 %v2247, %v2407
          %v2409 = vpop.f32.mrb[0].mxu0
          %2410 = vmatprep.mubr.bf16.mxu0 0
          %2411 = vmatmul.mubr.bf16.gmra.mrb[0].mxu0 %v1027
          %v2412 = vpop.f32.mrb[0].mxu0
          %v2413 = vadd.f32 %v2252, %v2412
          %v2414 = vpop.f32.mrb[0].mxu0
          %v2415 = vpop.f32.mrb[0].mxu0
          %v2416 = vadd.f32 %v2255, %v2415
          %v2417 = vpop.f32.mrb[0].mxu0
          %2418 = vmatprep.mubr.bf16.mxu0 0
          %2419 = vmatmul.mubr.bf16.gmra.mrb[0].mxu0 %v1036
          %v2420 = vpop.f32.mrb[0].mxu0
          %v2421 = vadd.f32 %v2260, %v2420
          %v2422 = vpop.f32.mrb[0].mxu0
          %v2423 = vpop.f32.mrb[0].mxu0
          %v2424 = vadd.f32 %v2263, %v2423
          %v2425 = vpop.f32.mrb[0].mxu0
          %2426 = vmatprep.mubr.bf16.mxu0 0
          %2427 = vmatmul.mubr.bf16.gmra.mrb[0].mxu0 %v1045
          %v2428 = vpop.f32.mrb[0].mxu0
          %v2429 = vadd.f32 %v2268, %v2428
          %v2430 = vpop.f32.mrb[0].mxu0
          %v2431 = vpop.f32.mrb[0].mxu0
          %v2432 = vadd.f32 %v2271, %v2431
          %v2433 = vpop.f32.mrb[0].mxu0
          %2434 = vmatprep.mubr.bf16.mxu0 0
          %2435 = vmatmul.mubr.bf16.gmra.mrb[0].mxu0 %v1054
          %v2436 = vpop.f32.mrb[0].mxu0
          %v2437 = vadd.f32 %v2276, %v2436
          %v2438 = vpop.f32.mrb[0].mxu0
          %v2439 = vpop.f32.mrb[0].mxu0
          %v2440 = vadd.f32 %v2279, %v2439
          %v2441 = vpop.f32.mrb[0].mxu0
          %2442 = vmatprep.mubr.bf16.mxu0 0
          %2443 = vmatmul.mubr.bf16.gmra.mrb[0].mxu0 %v1063
          %v2444 = vpop.f32.mrb[0].mxu0
          %v2445 = vadd.f32 %v2284, %v2444
          %v2446 = vpop.f32.mrb[0].mxu0
          %v2447 = vpop.f32.mrb[0].mxu0
          %v2448 = vadd.f32 %v2287, %v2447
          %v2449 = vpop.f32.mrb[0].mxu0
          %2450 = vmatprep.mubr.bf16.mxu0 0
          %2451 = vmatmul.mubr.bf16.gmra.mrb[0].mxu0 %v1072
          %v2452 = vpop.f32.mrb[0].mxu0
          %v2453 = vadd.f32 %v2292, %v2452
          %v2454 = vpop.f32.mrb[0].mxu0
          %v2455 = vpop.f32.mrb[0].mxu0
          %v2456 = vadd.f32 %v2295, %v2455
          %v2457 = vpop.f32.mrb[0].mxu0
          %2458 = vmatprep.mubr.bf16.mxu0 0
          %2459 = vmatmul.mubr.bf16.gmra.mrb[0].mxu0 %v1081
          %v2460 = vpop.f32.mrb[0].mxu0
          %v2461 = vadd.f32 %v2300, %v2460
          %v2462 = vpop.f32.mrb[0].mxu0
          %v2463 = vpop.f32.mrb[0].mxu0
          %v2464 = vadd.f32 %v2303, %v2463
          %v2465 = vpop.f32.mrb[0].mxu0
          %2466 = vmatprep.mubr.bf16.mxu0 0
          %2467 = vmatmul.mubr.bf16.gmra.mrb[0].mxu0 %v1090
          %v2468 = vpop.f32.mrb[0].mxu0
          %v2469 = vadd.f32 %v2308, %v2468
          %v2470 = vpop.f32.mrb[0].mxu0
          %v2471 = vpop.f32.mrb[0].mxu0
          %v2472 = vadd.f32 %v2311, %v2471
          %v2473 = vpop.f32.mrb[0].mxu0
          %2474 = vmatprep.mubr.bf16.mxu0 0
          %2475 = vmatmul.mubr.bf16.gmra.mrb[0].mxu0 %v1099
          %v2476 = vpop.f32.mrb[0].mxu0
          %v2477 = vadd.f32 %v2316, %v2476
          %v2478 = vpop.f32.mrb[0].mxu0
          %v2479 = vpop.f32.mrb[0].mxu0
          %v2480 = vadd.f32 %v2319, %v2479
          %v2481 = vpop.f32.mrb[0].mxu0
          %2482 = vmatprep.mubr.bf16.mxu0 0
          %2483 = vmatmul.mubr.bf16.gmra.mrb[0].mxu0 %v1108
          %v2484 = vpop.f32.mrb[0].mxu0
          %v2485 = vadd.f32 %v2324, %v2484
          %v2486 = vpop.f32.mrb[0].mxu0
          %v2487 = vpop.f32.mrb[0].mxu0
          %v2488 = vadd.f32 %v2327, %v2487
          %v2489 = vpop.f32.mrb[0].mxu0
          %2490 = vmatprep.mubr.bf16.mxu0 0
          %2491 = vmatmul.mubr.bf16.gmra.mrb[0].mxu0 %v1117
          %v2492 = vpop.f32.mrb[0].mxu0
          %v2493 = vadd.f32 %v2332, %v2492
          %v2494 = vpop.f32.mrb[0].mxu0
          %v2495 = vpop.f32.mrb[0].mxu0
          %v2496 = vadd.f32 %v2335, %v2495
          %v2497 = vpop.f32.mrb[0].mxu0
          %2498 = vdwg.mxu0
          %v2499 = vunpack.c.h.b16 %v382
          %v2500 = vunpack.c.h.b16 %v383
          %v2501 = vunpack.c.h.b16 %v384
          %v2502 = vunpack.c.h.b16 %v385
          %v2503 = vunpack.c.h.b16 %v386
          %v2504 = vunpack.c.h.b16 %v387
          %v2505 = vunpack.c.h.b16 %v388
          %v2506 = vunpack.c.h.b16 %v389
          %v2507 = vunpack.c.h.b16 %v390
          %v2508 = vunpack.c.h.b16 %v391
          %v2509 = vunpack.c.h.b16 %v392
          %v2510 = vunpack.c.h.b16 %v393
          %v2511 = vunpack.c.h.b16 %v394
          %v2512 = vunpack.c.h.b16 %v395
          %v2513 = vunpack.c.h.b16 %v396
          %v2514 = vunpack.c.h.b16 %v397
          %v2515 = vunpack.c.h.b16 %v398
          %v2516 = vunpack.c.h.b16 %v399
          %v2517 = vunpack.c.h.b16 %v400
          %v2518 = vunpack.c.h.b16 %v401
          %v2519 = vunpack.c.h.b16 %v402
          %v2520 = vunpack.c.h.b16 %v403
          %v2521 = vunpack.c.h.b16 %v404
          %v2522 = vunpack.c.h.b16 %v405
          %v2523 = vunpack.c.h.b16 %v406
          %v2524 = vunpack.c.h.b16 %v407
          %v2525 = vunpack.c.h.b16 %v408
          %v2526 = vunpack.c.h.b16 %v409
          %v2527 = vunpack.c.h.b16 %v410
          %v2528 = vunpack.c.h.b16 %v411
          %v2529 = vunpack.c.h.b16 %v412
          %v2530 = vunpack.c.h.b16 %v413
          %v2531 = vunpack.c.h.b16 %v414
          %v2532 = vunpack.c.h.b16 %v415
          %v2533 = vunpack.c.h.b16 %v416
          %v2534 = vunpack.c.h.b16 %v417
          %v2535 = vunpack.c.h.b16 %v418
          %v2536 = vunpack.c.h.b16 %v419
          %v2537 = vunpack.c.h.b16 %v420
          %v2538 = vunpack.c.h.b16 %v421
          %v2539 = vunpack.c.h.b16 %v422
          %v2540 = vunpack.c.h.b16 %v423
          %v2541 = vunpack.c.h.b16 %v424
          %v2542 = vunpack.c.h.b16 %v425
          %v2543 = vunpack.c.h.b16 %v426
          %v2544 = vunpack.c.h.b16 %v427
          %v2545 = vunpack.c.h.b16 %v428
          %v2546 = vunpack.c.h.b16 %v429
          %v2547 = vunpack.c.h.b16 %v430
          %v2548 = vunpack.c.h.b16 %v431
          %v2549 = vunpack.c.h.b16 %v432
          %v2550 = vunpack.c.h.b16 %v433
          %v2551 = vunpack.c.h.b16 %v434
          %v2552 = vunpack.c.h.b16 %v435
          %v2553 = vunpack.c.h.b16 %v436
          %v2554 = vunpack.c.h.b16 %v437
          %v2555 = vunpack.c.h.b16 %v438
          %v2556 = vunpack.c.h.b16 %v439
          %v2557 = vunpack.c.h.b16 %v440
          %v2558 = vunpack.c.h.b16 %v441
          %v2559 = vunpack.c.h.b16 %v442
          %v2560 = vunpack.c.h.b16 %v443
          %v2561 = vunpack.c.h.b16 %v444
          %v2562 = vunpack.c.h.b16 %v445
          %v2563 = vunpack.c.h.b16 %v446
          %v2564 = vunpack.c.h.b16 %v447
          %v2565 = vunpack.c.h.b16 %v448
          %v2566 = vunpack.c.h.b16 %v449
          %v2567 = vunpack.c.h.b16 %v450
          %v2568 = vunpack.c.h.b16 %v451
          %v2569 = vunpack.c.h.b16 %v452
          %v2570 = vunpack.c.h.b16 %v453
          %v2571 = vunpack.c.h.b16 %v454
          %v2572 = vunpack.c.h.b16 %v455
          %v2573 = vunpack.c.h.b16 %v456
          %v2574 = vunpack.c.h.b16 %v457
          %v2575 = vunpack.c.h.b16 %v458
          %v2576 = vunpack.c.h.b16 %v459
          %v2577 = vunpack.c.h.b16 %v460
          %v2578 = vunpack.c.h.b16 %v461
          %v2579 = vunpack.c.h.b16 %v462
          %v2580 = vunpack.c.h.b16 %v463
          %v2581 = vunpack.c.h.b16 %v464
          %v2582 = vunpack.c.h.b16 %v465
          %v2583 = vunpack.c.h.b16 %v466
          %v2584 = vunpack.c.h.b16 %v467
          %v2585 = vunpack.c.h.b16 %v468
          %v2586 = vunpack.c.h.b16 %v469
          %v2587 = vunpack.c.h.b16 %v470
          %v2588 = vunpack.c.h.b16 %v471
          %v2589 = vunpack.c.h.b16 %v472
          %v2590 = vunpack.c.h.b16 %v473
          %v2591 = vunpack.c.h.b16 %v474
          %v2592 = vunpack.c.h.b16 %v475
          %v2593 = vunpack.c.h.b16 %v476
          %v2594 = vunpack.c.h.b16 %v477
          %v2595 = vunpack.c.h.b16 %v478
          %v2596 = vunpack.c.h.b16 %v479
          %v2597 = vunpack.c.h.b16 %v480
          %v2598 = vunpack.c.h.b16 %v481
          %v2599 = vunpack.c.h.b16 %v482
          %v2600 = vunpack.c.h.b16 %v483
          %v2601 = vunpack.c.h.b16 %v484
          %v2602 = vunpack.c.h.b16 %v485
          %v2603 = vunpack.c.h.b16 %v486
          %v2604 = vunpack.c.h.b16 %v487
          %v2605 = vunpack.c.h.b16 %v488
          %v2606 = vunpack.c.h.b16 %v489
          %v2607 = vunpack.c.h.b16 %v490
          %v2608 = vunpack.c.h.b16 %v491
          %v2609 = vunpack.c.h.b16 %v492
          %v2610 = vunpack.c.h.b16 %v493
          %v2611 = vunpack.c.h.b16 %v494
          %v2612 = vunpack.c.h.b16 %v495
          %v2613 = vunpack.c.h.b16 %v496
          %v2614 = vunpack.c.h.b16 %v497
          %v2615 = vunpack.c.h.b16 %v498
          %v2616 = vunpack.c.h.b16 %v499
          %v2617 = vunpack.c.h.b16 %v500
          %v2618 = vunpack.c.h.b16 %v501
          %v2619 = vunpack.c.h.b16 %v502
          %v2620 = vunpack.c.h.b16 %v503
          %v2621 = vunpack.c.h.b16 %v504
          %v2622 = vunpack.c.h.b16 %v505
          %v2623 = vunpack.c.h.b16 %v506
          %v2624 = vunpack.c.h.b16 %v507
          %v2625 = vunpack.c.h.b16 %v508
          %v2626 = vunpack.c.h.b16 %v509
          %v2627 = vunpack.c.h.b16 %v510
          %v2628 = vunpack.c.h.b16 %v511
          %v2629 = vunpack.c.h.b16 %v512
          %v2630 = vunpack.c.h.b16 %v513
          %v2631 = vunpack.c.h.b16 %v514
          %v2632 = vunpack.c.h.b16 %v515
          %v2633 = vunpack.c.h.b16 %v516
          %v2634 = vunpack.c.h.b16 %v517
          %v2635 = vunpack.c.h.b16 %v518
          %v2636 = vunpack.c.h.b16 %v519
          %v2637 = vunpack.c.h.b16 %v520
          %v2638 = vunpack.c.h.b16 %v521
          %v2639 = vunpack.c.h.b16 %v522
          %v2640 = vunpack.c.h.b16 %v523
          %v2641 = vunpack.c.h.b16 %v524
          %v2642 = vunpack.c.h.b16 %v525
          %v2643 = vpack.c.b16 %v2500, %v2499
          %v2644 = vpack.c.b16 %v2502, %v2501
          %v2645 = vpack.c.b16 %v2504, %v2503
          %v2646 = vpack.c.b16 %v2506, %v2505
          %v2647 = vpack.c.b16 %v2508, %v2507
          %v2648 = vpack.c.b16 %v2510, %v2509
          %v2649 = vpack.c.b16 %v2512, %v2511
          %v2650 = vpack.c.b16 %v2514, %v2513
          %v2651 = vpack.c.b16 %v2516, %v2515
          %v2652 = vpack.c.b16 %v2518, %v2517
          %v2653 = vpack.c.b16 %v2520, %v2519
          %v2654 = vpack.c.b16 %v2522, %v2521
          %v2655 = vpack.c.b16 %v2524, %v2523
          %v2656 = vpack.c.b16 %v2526, %v2525
          %v2657 = vpack.c.b16 %v2528, %v2527
          %v2658 = vpack.c.b16 %v2530, %v2529
          %v2659 = vpack.c.b16 %v2532, %v2531
          %v2660 = vpack.c.b16 %v2534, %v2533
          %v2661 = vpack.c.b16 %v2536, %v2535
          %v2662 = vpack.c.b16 %v2538, %v2537
          %v2663 = vpack.c.b16 %v2540, %v2539
          %v2664 = vpack.c.b16 %v2542, %v2541
          %v2665 = vpack.c.b16 %v2544, %v2543
          %v2666 = vpack.c.b16 %v2546, %v2545
          %v2667 = vpack.c.b16 %v2548, %v2547
          %v2668 = vpack.c.b16 %v2550, %v2549
          %v2669 = vpack.c.b16 %v2552, %v2551
          %v2670 = vpack.c.b16 %v2554, %v2553
          %v2671 = vpack.c.b16 %v2556, %v2555
          %v2672 = vpack.c.b16 %v2558, %v2557
          %v2673 = vpack.c.b16 %v2560, %v2559
          %v2674 = vpack.c.b16 %v2562, %v2561
          %v2675 = vpack.c.b16 %v2564, %v2563
          %v2676 = vpack.c.b16 %v2566, %v2565
          %v2677 = vpack.c.b16 %v2568, %v2567
          %v2678 = vpack.c.b16 %v2570, %v2569
          %v2679 = vpack.c.b16 %v2572, %v2571
          %v2680 = vpack.c.b16 %v2574, %v2573
          %v2681 = vpack.c.b16 %v2576, %v2575
          %v2682 = vpack.c.b16 %v2578, %v2577
          %v2683 = vpack.c.b16 %v2580, %v2579
          %v2684 = vpack.c.b16 %v2582, %v2581
          %v2685 = vpack.c.b16 %v2584, %v2583
          %v2686 = vpack.c.b16 %v2586, %v2585
          %v2687 = vpack.c.b16 %v2588, %v2587
          %v2688 = vpack.c.b16 %v2590, %v2589
          %v2689 = vpack.c.b16 %v2592, %v2591
          %v2690 = vpack.c.b16 %v2594, %v2593
          %v2691 = vpack.c.b16 %v2596, %v2595
          %v2692 = vpack.c.b16 %v2598, %v2597
          %v2693 = vpack.c.b16 %v2600, %v2599
          %v2694 = vpack.c.b16 %v2602, %v2601
          %v2695 = vpack.c.b16 %v2604, %v2603
          %v2696 = vpack.c.b16 %v2606, %v2605
          %v2697 = vpack.c.b16 %v2608, %v2607
          %v2698 = vpack.c.b16 %v2610, %v2609
          %v2699 = vpack.c.b16 %v2612, %v2611
          %v2700 = vpack.c.b16 %v2614, %v2613
          %v2701 = vpack.c.b16 %v2616, %v2615
          %v2702 = vpack.c.b16 %v2618, %v2617
          %v2703 = vpack.c.b16 %v2620, %v2619
          %v2704 = vpack.c.b16 %v2622, %v2621
          %v2705 = vpack.c.b16 %v2624, %v2623
          %v2706 = vpack.c.b16 %v2626, %v2625
          %v2707 = vpack.c.b16 %v2628, %v2627
          %v2708 = vpack.c.b16 %v2630, %v2629
          %v2709 = vpack.c.b16 %v2632, %v2631
          %v2710 = vpack.c.b16 %v2634, %v2633
          %v2711 = vpack.c.b16 %v2636, %v2635
          %v2712 = vpack.c.b16 %v2638, %v2637
          %v2713 = vpack.c.b16 %v2640, %v2639
          %v2714 = vpack.c.b16 %v2642, %v2641
          %2787 = vmatprep.subr.bf16.mxu0 0
          %2788 = vmatpush1.bf16.msra.mxu0 %v2643
          %2789 = vmatprep.subr.bf16.mxu0 0
          %2790 = vmatpush1.bf16.msra.mxu0 %v2644
          %2791 = vmatprep.subr.bf16.mxu0 0
          %2792 = vmatpush1.bf16.msra.mxu0 %v2645
          %2793 = vmatprep.subr.bf16.mxu0 0
          %2794 = vmatpush1.bf16.msra.mxu0 %v2646
          %2795 = vmatprep.subr.bf16.mxu0 0
          %2796 = vmatpush1.bf16.msra.mxu0 %v2647
          %2797 = vmatprep.subr.bf16.mxu0 0
          %2798 = vmatpush1.bf16.msra.mxu0 %v2648
          %2799 = vmatprep.subr.bf16.mxu0 0
          %2800 = vmatpush1.bf16.msra.mxu0 %v2649
          %2801 = vmatprep.subr.bf16.mxu0 0
          %2802 = vmatpush1.bf16.msra.mxu0 %v2650
          %2803 = vmatprep.subr.bf16.mxu0 0
          %2804 = vmatpush1.bf16.msra.mxu0 %v2651
          %2805 = vmatprep.subr.bf16.mxu0 0
          %2806 = vmatpush1.bf16.msra.mxu0 %v2652
          %2807 = vmatprep.subr.bf16.mxu0 0
          %2808 = vmatpush1.bf16.msra.mxu0 %v2653
          %2809 = vmatprep.subr.bf16.mxu0 0
          %2810 = vmatpush1.bf16.msra.mxu0 %v2654
          %2811 = vmatprep.subr.bf16.mxu0 0
          %2812 = vmatpush1.bf16.msra.mxu0 %v2655
          %2813 = vmatprep.subr.bf16.mxu0 0
          %2814 = vmatpush1.bf16.msra.mxu0 %v2656
          %2815 = vmatprep.subr.bf16.mxu0 0
          %2816 = vmatpush1.bf16.msra.mxu0 %v2657
          %2817 = vmatprep.subr.bf16.mxu0 0
          %2818 = vmatpush1.bf16.msra.mxu0 %v2658
          %2819 = vmatprep.mubr.bf16.mxu0 %v975
          %2820 = vmatmul.mubr.bf16.gmra.mrb[0].mxu0 %v974
          %v2821 = vpop.f32.mrb[0].mxu0
          %v2822 = vadd.f32 0.0, %v2821
          %v2823 = vpop.f32.mrb[0].mxu0
          %v2824 = vpop.f32.mrb[0].mxu0
          %v2825 = vadd.f32 0.0, %v2824
          %v2826 = vpop.f32.mrb[0].mxu0
          %2827 = vmatprep.mubr.bf16.mxu0 %v984
          %2828 = vmatmul.mubr.bf16.gmra.mrb[0].mxu0 %v983
          %v2829 = vpop.f32.mrb[0].mxu0
          %v2830 = vadd.f32 0.0, %v2829
          %v2831 = vpop.f32.mrb[0].mxu0
          %v2832 = vpop.f32.mrb[0].mxu0
          %v2833 = vadd.f32 0.0, %v2832
          %v2834 = vpop.f32.mrb[0].mxu0
          %2835 = vmatprep.mubr.bf16.mxu0 %v993
          %2836 = vmatmul.mubr.bf16.gmra.mrb[0].mxu0 %v992
          %v2837 = vpop.f32.mrb[0].mxu0
          %v2838 = vadd.f32 0.0, %v2837
          %v2839 = vpop.f32.mrb[0].mxu0
          %v2840 = vpop.f32.mrb[0].mxu0
          %v2841 = vadd.f32 0.0, %v2840
          %v2842 = vpop.f32.mrb[0].mxu0
          %2843 = vmatprep.mubr.bf16.mxu0 %v1002
          %2844 = vmatmul.mubr.bf16.gmra.mrb[0].mxu0 %v1001
          %v2845 = vpop.f32.mrb[0].mxu0
          %v2846 = vadd.f32 0.0, %v2845
          %v2847 = vpop.f32.mrb[0].mxu0
          %v2848 = vpop.f32.mrb[0].mxu0
          %v2849 = vadd.f32 0.0, %v2848
          %v2850 = vpop.f32.mrb[0].mxu0
          %2851 = vmatprep.mubr.bf16.mxu0 %v1011
          %2852 = vmatmul.mubr.bf16.gmra.mrb[0].mxu0 %v1010
          %v2853 = vpop.f32.mrb[0].mxu0
          %v2854 = vadd.f32 0.0, %v2853
          %v2855 = vpop.f32.mrb[0].mxu0
          %v2856 = vpop.f32.mrb[0].mxu0
          %v2857 = vadd.f32 0.0, %v2856
          %v2858 = vpop.f32.mrb[0].mxu0
          %2859 = vmatprep.mubr.bf16.mxu0 %v1020
          %2860 = vmatmul.mubr.bf16.gmra.mrb[0].mxu0 %v1019
          %v2861 = vpop.f32.mrb[0].mxu0
          %v2862 = vadd.f32 0.0, %v2861
          %v2863 = vpop.f32.mrb[0].mxu0
          %v2864 = vpop.f32.mrb[0].mxu0
          %v2865 = vadd.f32 0.0, %v2864
          %v2866 = vpop.f32.mrb[0].mxu0
          %2867 = vmatprep.mubr.bf16.mxu0 %v1029
          %2868 = vmatmul.mubr.bf16.gmra.mrb[0].mxu0 %v1028
          %v2869 = vpop.f32.mrb[0].mxu0
          %v2870 = vadd.f32 0.0, %v2869
          %v2871 = vpop.f32.mrb[0].mxu0
          %v2872 = vpop.f32.mrb[0].mxu0
          %v2873 = vadd.f32 0.0, %v2872
          %v2874 = vpop.f32.mrb[0].mxu0
          %2875 = vmatprep.mubr.bf16.mxu0 %v1038
          %2876 = vmatmul.mubr.bf16.gmra.mrb[0].mxu0 %v1037
          %v2877 = vpop.f32.mrb[0].mxu0
          %v2878 = vadd.f32 0.0, %v2877
          %v2879 = vpop.f32.mrb[0].mxu0
          %v2880 = vpop.f32.mrb[0].mxu0
          %v2881 = vadd.f32 0.0, %v2880
          %v2882 = vpop.f32.mrb[0].mxu0
          %2883 = vmatprep.mubr.bf16.mxu0 %v1047
          %2884 = vmatmul.mubr.bf16.gmra.mrb[0].mxu0 %v1046
          %v2885 = vpop.f32.mrb[0].mxu0
          %v2886 = vadd.f32 0.0, %v2885
          %v2887 = vpop.f32.mrb[0].mxu0
          %v2888 = vpop.f32.mrb[0].mxu0
          %v2889 = vadd.f32 0.0, %v2888
          %v2890 = vpop.f32.mrb[0].mxu0
          %2891 = vmatprep.mubr.bf16.mxu0 %v1056
          %2892 = vmatmul.mubr.bf16.gmra.mrb[0].mxu0 %v1055
          %v2893 = vpop.f32.mrb[0].mxu0
          %v2894 = vadd.f32 0.0, %v2893
          %v2895 = vpop.f32.mrb[0].mxu0
          %v2896 = vpop.f32.mrb[0].mxu0
          %v2897 = vadd.f32 0.0, %v2896
          %v2898 = vpop.f32.mrb[0].mxu0
          %2899 = vmatprep.mubr.bf16.mxu0 %v1065
          %2900 = vmatmul.mubr.bf16.gmra.mrb[0].mxu0 %v1064
          %v2901 = vpop.f32.mrb[0].mxu0
          %v2902 = vadd.f32 0.0, %v2901
          %v2903 = vpop.f32.mrb[0].mxu0
          %v2904 = vpop.f32.mrb[0].mxu0
          %v2905 = vadd.f32 0.0, %v2904
          %v2906 = vpop.f32.mrb[0].mxu0
          %2907 = vmatprep.mubr.bf16.mxu0 %v1074
          %2908 = vmatmul.mubr.bf16.gmra.mrb[0].mxu0 %v1073
          %v2909 = vpop.f32.mrb[0].mxu0
          %v2910 = vadd.f32 0.0, %v2909
          %v2911 = vpop.f32.mrb[0].mxu0
          %v2912 = vpop.f32.mrb[0].mxu0
          %v2913 = vadd.f32 0.0, %v2912
          %v2914 = vpop.f32.mrb[0].mxu0
          %2915 = vmatprep.mubr.bf16.mxu0 %v1083
          %2916 = vmatmul.mubr.bf16.gmra.mrb[0].mxu0 %v1082
          %v2917 = vpop.f32.mrb[0].mxu0
          %v2918 = vadd.f32 0.0, %v2917
          %v2919 = vpop.f32.mrb[0].mxu0
          %v2920 = vpop.f32.mrb[0].mxu0
          %v2921 = vadd.f32 0.0, %v2920
          %v2922 = vpop.f32.mrb[0].mxu0
          %2923 = vmatprep.mubr.bf16.mxu0 %v1092
          %2924 = vmatmul.mubr.bf16.gmra.mrb[0].mxu0 %v1091
          %v2925 = vpop.f32.mrb[0].mxu0
          %v2926 = vadd.f32 0.0, %v2925
          %v2927 = vpop.f32.mrb[0].mxu0
          %v2928 = vpop.f32.mrb[0].mxu0
          %v2929 = vadd.f32 0.0, %v2928
          %v2930 = vpop.f32.mrb[0].mxu0
          %2931 = vmatprep.mubr.bf16.mxu0 %v1101
          %2932 = vmatmul.mubr.bf16.gmra.mrb[0].mxu0 %v1100
          %v2933 = vpop.f32.mrb[0].mxu0
          %v2934 = vadd.f32 0.0, %v2933
          %v2935 = vpop.f32.mrb[0].mxu0
          %v2936 = vpop.f32.mrb[0].mxu0
          %v2937 = vadd.f32 0.0, %v2936
          %v2938 = vpop.f32.mrb[0].mxu0
          %2939 = vmatprep.mubr.bf16.mxu0 %v1110
          %2940 = vmatmul.mubr.bf16.gmra.mrb[0].mxu0 %v1109
          %v2941 = vpop.f32.mrb[0].mxu0
          %v2942 = vadd.f32 0.0, %v2941
          %v2943 = vpop.f32.mrb[0].mxu0
          %v2944 = vpop.f32.mrb[0].mxu0
          %v2945 = vadd.f32 0.0, %v2944
          %v2946 = vpop.f32.mrb[0].mxu0
          %2947 = vdwg.mxu0
          %2948 = vmatprep.subr.bf16.mxu0 0
          %2949 = vmatpush1.bf16.msra.mxu0 %v2659
          %2950 = vmatprep.subr.bf16.mxu0 0
          %2951 = vmatpush1.bf16.msra.mxu0 %v2660
          %2952 = vmatprep.subr.bf16.mxu0 0
          %2953 = vmatpush1.bf16.msra.mxu0 %v2661
          %2954 = vmatprep.subr.bf16.mxu0 0
          %2955 = vmatpush1.bf16.msra.mxu0 %v2662
          %2956 = vmatprep.subr.bf16.mxu0 0
          %2957 = vmatpush1.bf16.msra.mxu0 %v2663
          %2958 = vmatprep.subr.bf16.mxu0 0
          %2959 = vmatpush1.bf16.msra.mxu0 %v2664
          %2960 = vmatprep.subr.bf16.mxu0 0
          %2961 = vmatpush1.bf16.msra.mxu0 %v2665
          %2962 = vmatprep.subr.bf16.mxu0 0
          %2963 = vmatpush1.bf16.msra.mxu0 %v2666
          %2964 = vmatprep.subr.bf16.mxu0 0
          %2965 = vmatpush1.bf16.msra.mxu0 %v2667
          %2966 = vmatprep.subr.bf16.mxu0 0
          %2967 = vmatpush1.bf16.msra.mxu0 %v2668
          %2968 = vmatprep.subr.bf16.mxu0 0
          %2969 = vmatpush1.bf16.msra.mxu0 %v2669
          %2970 = vmatprep.subr.bf16.mxu0 0
          %2971 = vmatpush1.bf16.msra.mxu0 %v2670
          %2972 = vmatprep.subr.bf16.mxu0 0
          %2973 = vmatpush1.bf16.msra.mxu0 %v2671
          %2974 = vmatprep.subr.bf16.mxu0 0
          %2975 = vmatpush1.bf16.msra.mxu0 %v2672
          %2976 = vmatprep.subr.bf16.mxu0 0
          %2977 = vmatpush1.bf16.msra.mxu0 %v2673
          %2978 = vmatprep.subr.bf16.mxu0 0
          %2979 = vmatpush1.bf16.msra.mxu0 %v2674
          %2980 = vmatprep.mubr.bf16.mxu0 %v977
          %2981 = vmatmul.mubr.bf16.gmra.mrb[0].mxu0 %v976
          %v2982 = vpop.f32.mrb[0].mxu0
          %v2983 = vadd.f32 %v2822, %v2982
          %v2984 = vpop.f32.mrb[0].mxu0
          %v2985 = vpop.f32.mrb[0].mxu0
          %v2986 = vadd.f32 %v2825, %v2985
          %v2987 = vpop.f32.mrb[0].mxu0
          %2988 = vmatprep.mubr.bf16.mxu0 %v986
          %2989 = vmatmul.mubr.bf16.gmra.mrb[0].mxu0 %v985
          %v2990 = vpop.f32.mrb[0].mxu0
          %v2991 = vadd.f32 %v2830, %v2990
          %v2992 = vpop.f32.mrb[0].mxu0
          %v2993 = vpop.f32.mrb[0].mxu0
          %v2994 = vadd.f32 %v2833, %v2993
          %v2995 = vpop.f32.mrb[0].mxu0
          %2996 = vmatprep.mubr.bf16.mxu0 %v995
          %2997 = vmatmul.mubr.bf16.gmra.mrb[0].mxu0 %v994
          %v2998 = vpop.f32.mrb[0].mxu0
          %v2999 = vadd.f32 %v2838, %v2998
          %v3000 = vpop.f32.mrb[0].mxu0
          %v3001 = vpop.f32.mrb[0].mxu0
          %v3002 = vadd.f32 %v2841, %v3001
          %v3003 = vpop.f32.mrb[0].mxu0
          %3004 = vmatprep.mubr.bf16.mxu0 %v1004
          %3005 = vmatmul.mubr.bf16.gmra.mrb[0].mxu0 %v1003
          %v3006 = vpop.f32.mrb[0].mxu0
          %v3007 = vadd.f32 %v2846, %v3006
          %v3008 = vpop.f32.mrb[0].mxu0
          %v3009 = vpop.f32.mrb[0].mxu0
          %v3010 = vadd.f32 %v2849, %v3009
          %v3011 = vpop.f32.mrb[0].mxu0
          %3012 = vmatprep.mubr.bf16.mxu0 %v1013
          %3013 = vmatmul.mubr.bf16.gmra.mrb[0].mxu0 %v1012
          %v3014 = vpop.f32.mrb[0].mxu0
          %v3015 = vadd.f32 %v2854, %v3014
          %v3016 = vpop.f32.mrb[0].mxu0
          %v3017 = vpop.f32.mrb[0].mxu0
          %v3018 = vadd.f32 %v2857, %v3017
          %v3019 = vpop.f32.mrb[0].mxu0
          %3020 = vmatprep.mubr.bf16.mxu0 %v1022
          %3021 = vmatmul.mubr.bf16.gmra.mrb[0].mxu0 %v1021
          %v3022 = vpop.f32.mrb[0].mxu0
          %v3023 = vadd.f32 %v2862, %v3022
          %v3024 = vpop.f32.mrb[0].mxu0
          %v3025 = vpop.f32.mrb[0].mxu0
          %v3026 = vadd.f32 %v2865, %v3025
          %v3027 = vpop.f32.mrb[0].mxu0
          %3028 = vmatprep.mubr.bf16.mxu0 %v1031
          %3029 = vmatmul.mubr.bf16.gmra.mrb[0].mxu0 %v1030
          %v3030 = vpop.f32.mrb[0].mxu0
          %v3031 = vadd.f32 %v2870, %v3030
          %v3032 = vpop.f32.mrb[0].mxu0
          %v3033 = vpop.f32.mrb[0].mxu0
          %v3034 = vadd.f32 %v2873, %v3033
          %v3035 = vpop.f32.mrb[0].mxu0
          %3036 = vmatprep.mubr.bf16.mxu0 %v1040
          %3037 = vmatmul.mubr.bf16.gmra.mrb[0].mxu0 %v1039
          %v3038 = vpop.f32.mrb[0].mxu0
          %v3039 = vadd.f32 %v2878, %v3038
          %v3040 = vpop.f32.mrb[0].mxu0
          %v3041 = vpop.f32.mrb[0].mxu0
          %v3042 = vadd.f32 %v2881, %v3041
          %v3043 = vpop.f32.mrb[0].mxu0
          %3044 = vmatprep.mubr.bf16.mxu0 %v1049
          %3045 = vmatmul.mubr.bf16.gmra.mrb[0].mxu0 %v1048
          %v3046 = vpop.f32.mrb[0].mxu0
          %v3047 = vadd.f32 %v2886, %v3046
          %v3048 = vpop.f32.mrb[0].mxu0
          %v3049 = vpop.f32.mrb[0].mxu0
          %v3050 = vadd.f32 %v2889, %v3049
          %v3051 = vpop.f32.mrb[0].mxu0
          %3052 = vmatprep.mubr.bf16.mxu0 %v1058
          %3053 = vmatmul.mubr.bf16.gmra.mrb[0].mxu0 %v1057
          %v3054 = vpop.f32.mrb[0].mxu0
          %v3055 = vadd.f32 %v2894, %v3054
          %v3056 = vpop.f32.mrb[0].mxu0
          %v3057 = vpop.f32.mrb[0].mxu0
          %v3058 = vadd.f32 %v2897, %v3057
          %v3059 = vpop.f32.mrb[0].mxu0
          %3060 = vmatprep.mubr.bf16.mxu0 %v1067
          %3061 = vmatmul.mubr.bf16.gmra.mrb[0].mxu0 %v1066
          %v3062 = vpop.f32.mrb[0].mxu0
          %v3063 = vadd.f32 %v2902, %v3062
          %v3064 = vpop.f32.mrb[0].mxu0
          %v3065 = vpop.f32.mrb[0].mxu0
          %v3066 = vadd.f32 %v2905, %v3065
          %v3067 = vpop.f32.mrb[0].mxu0
          %3068 = vmatprep.mubr.bf16.mxu0 %v1076
          %3069 = vmatmul.mubr.bf16.gmra.mrb[0].mxu0 %v1075
          %v3070 = vpop.f32.mrb[0].mxu0
          %v3071 = vadd.f32 %v2910, %v3070
          %v3072 = vpop.f32.mrb[0].mxu0
          %v3073 = vpop.f32.mrb[0].mxu0
          %v3074 = vadd.f32 %v2913, %v3073
          %v3075 = vpop.f32.mrb[0].mxu0
          %3076 = vmatprep.mubr.bf16.mxu0 %v1085
          %3077 = vmatmul.mubr.bf16.gmra.mrb[0].mxu0 %v1084
          %v3078 = vpop.f32.mrb[0].mxu0
          %v3079 = vadd.f32 %v2918, %v3078
          %v3080 = vpop.f32.mrb[0].mxu0
          %v3081 = vpop.f32.mrb[0].mxu0
          %v3082 = vadd.f32 %v2921, %v3081
          %v3083 = vpop.f32.mrb[0].mxu0
          %3084 = vmatprep.mubr.bf16.mxu0 %v1094
          %3085 = vmatmul.mubr.bf16.gmra.mrb[0].mxu0 %v1093
          %v3086 = vpop.f32.mrb[0].mxu0
          %v3087 = vadd.f32 %v2926, %v3086
          %v3088 = vpop.f32.mrb[0].mxu0
          %v3089 = vpop.f32.mrb[0].mxu0
          %v3090 = vadd.f32 %v2929, %v3089
          %v3091 = vpop.f32.mrb[0].mxu0
          %3092 = vmatprep.mubr.bf16.mxu0 %v1103
          %3093 = vmatmul.mubr.bf16.gmra.mrb[0].mxu0 %v1102
          %v3094 = vpop.f32.mrb[0].mxu0
          %v3095 = vadd.f32 %v2934, %v3094
          %v3096 = vpop.f32.mrb[0].mxu0
          %v3097 = vpop.f32.mrb[0].mxu0
          %v3098 = vadd.f32 %v2937, %v3097
          %v3099 = vpop.f32.mrb[0].mxu0
          %3100 = vmatprep.mubr.bf16.mxu0 %v1112
          %3101 = vmatmul.mubr.bf16.gmra.mrb[0].mxu0 %v1111
          %v3102 = vpop.f32.mrb[0].mxu0
          %v3103 = vadd.f32 %v2942, %v3102
          %v3104 = vpop.f32.mrb[0].mxu0
          %v3105 = vpop.f32.mrb[0].mxu0
          %v3106 = vadd.f32 %v2945, %v3105
          %v3107 = vpop.f32.mrb[0].mxu0
          %3108 = vdwg.mxu0
          %3109 = vmatprep.subr.bf16.mxu0 0
          %3110 = vmatpush1.bf16.msra.mxu0 %v2675
          %3111 = vmatprep.subr.bf16.mxu0 0
          %3112 = vmatpush1.bf16.msra.mxu0 %v2676
          %3113 = vmatprep.subr.bf16.mxu0 0
          %3114 = vmatpush1.bf16.msra.mxu0 %v2677
          %3115 = vmatprep.subr.bf16.mxu0 0
          %3116 = vmatpush1.bf16.msra.mxu0 %v2678
          %3117 = vmatprep.subr.bf16.mxu0 0
          %3118 = vmatpush1.bf16.msra.mxu0 %v2679
          %3119 = vmatprep.subr.bf16.mxu0 0
          %3120 = vmatpush1.bf16.msra.mxu0 %v2680
          %3121 = vmatprep.subr.bf16.mxu0 0
          %3122 = vmatpush1.bf16.msra.mxu0 %v2681
          %3123 = vmatprep.subr.bf16.mxu0 0
          %3124 = vmatpush1.bf16.msra.mxu0 %v2682
          %3125 = vmatprep.subr.bf16.mxu0 0
          %3126 = vmatpush1.bf16.msra.mxu0 %v2683
          %3127 = vmatprep.subr.bf16.mxu0 0
          %3128 = vmatpush1.bf16.msra.mxu0 %v2684
          %3129 = vmatprep.subr.bf16.mxu0 0
          %3130 = vmatpush1.bf16.msra.mxu0 %v2685
          %3131 = vmatprep.subr.bf16.mxu0 0
          %3132 = vmatpush1.bf16.msra.mxu0 %v2686
          %3133 = vmatprep.subr.bf16.mxu0 0
          %3134 = vmatpush1.bf16.msra.mxu0 %v2687
          %3135 = vmatprep.subr.bf16.mxu0 0
          %3136 = vmatpush1.bf16.msra.mxu0 %v2688
          %3137 = vmatprep.subr.bf16.mxu0 0
          %3138 = vmatpush1.bf16.msra.mxu0 %v2689
          %3139 = vmatprep.subr.bf16.mxu0 0
          %3140 = vmatpush1.bf16.msra.mxu0 %v2690
          %3141 = vmatprep.mubr.bf16.mxu0 %v979
          %3142 = vmatmul.mubr.bf16.gmra.mrb[0].mxu0 %v978
          %v3143 = vpop.f32.mrb[0].mxu0
          %v3144 = vadd.f32 %v2983, %v3143
          %v3145 = vpop.f32.mrb[0].mxu0
          %v3146 = vpop.f32.mrb[0].mxu0
          %v3147 = vadd.f32 %v2986, %v3146
          %v3148 = vpop.f32.mrb[0].mxu0
          %3149 = vmatprep.mubr.bf16.mxu0 %v988
          %3150 = vmatmul.mubr.bf16.gmra.mrb[0].mxu0 %v987
          %v3151 = vpop.f32.mrb[0].mxu0
          %v3152 = vadd.f32 %v2991, %v3151
          %v3153 = vpop.f32.mrb[0].mxu0
          %v3154 = vpop.f32.mrb[0].mxu0
          %v3155 = vadd.f32 %v2994, %v3154
          %v3156 = vpop.f32.mrb[0].mxu0
          %3157 = vmatprep.mubr.bf16.mxu0 %v997
          %3158 = vmatmul.mubr.bf16.gmra.mrb[0].mxu0 %v996
          %v3159 = vpop.f32.mrb[0].mxu0
          %v3160 = vadd.f32 %v2999, %v3159
          %v3161 = vpop.f32.mrb[0].mxu0
          %v3162 = vpop.f32.mrb[0].mxu0
          %v3163 = vadd.f32 %v3002, %v3162
          %v3164 = vpop.f32.mrb[0].mxu0
          %3165 = vmatprep.mubr.bf16.mxu0 %v1006
          %3166 = vmatmul.mubr.bf16.gmra.mrb[0].mxu0 %v1005
          %v3167 = vpop.f32.mrb[0].mxu0
          %v3168 = vadd.f32 %v3007, %v3167
          %v3169 = vpop.f32.mrb[0].mxu0
          %v3170 = vpop.f32.mrb[0].mxu0
          %v3171 = vadd.f32 %v3010, %v3170
          %v3172 = vpop.f32.mrb[0].mxu0
          %3173 = vmatprep.mubr.bf16.mxu0 %v1015
          %3174 = vmatmul.mubr.bf16.gmra.mrb[0].mxu0 %v1014
          %v3175 = vpop.f32.mrb[0].mxu0
          %v3176 = vadd.f32 %v3015, %v3175
          %v3177 = vpop.f32.mrb[0].mxu0
          %v3178 = vpop.f32.mrb[0].mxu0
          %v3179 = vadd.f32 %v3018, %v3178
          %v3180 = vpop.f32.mrb[0].mxu0
          %3181 = vmatprep.mubr.bf16.mxu0 %v1024
          %3182 = vmatmul.mubr.bf16.gmra.mrb[0].mxu0 %v1023
          %v3183 = vpop.f32.mrb[0].mxu0
          %v3184 = vadd.f32 %v3023, %v3183
          %v3185 = vpop.f32.mrb[0].mxu0
          %v3186 = vpop.f32.mrb[0].mxu0
          %v3187 = vadd.f32 %v3026, %v3186
          %v3188 = vpop.f32.mrb[0].mxu0
          %3189 = vmatprep.mubr.bf16.mxu0 %v1033
          %3190 = vmatmul.mubr.bf16.gmra.mrb[0].mxu0 %v1032
          %v3191 = vpop.f32.mrb[0].mxu0
          %v3192 = vadd.f32 %v3031, %v3191
          %v3193 = vpop.f32.mrb[0].mxu0
          %v3194 = vpop.f32.mrb[0].mxu0
          %v3195 = vadd.f32 %v3034, %v3194
          %v3196 = vpop.f32.mrb[0].mxu0
          %3197 = vmatprep.mubr.bf16.mxu0 %v1042
          %3198 = vmatmul.mubr.bf16.gmra.mrb[0].mxu0 %v1041
          %v3199 = vpop.f32.mrb[0].mxu0
          %v3200 = vadd.f32 %v3039, %v3199
          %v3201 = vpop.f32.mrb[0].mxu0
          %v3202 = vpop.f32.mrb[0].mxu0
          %v3203 = vadd.f32 %v3042, %v3202
          %v3204 = vpop.f32.mrb[0].mxu0
          %3205 = vmatprep.mubr.bf16.mxu0 %v1051
          %3206 = vmatmul.mubr.bf16.gmra.mrb[0].mxu0 %v1050
          %v3207 = vpop.f32.mrb[0].mxu0
          %v3208 = vadd.f32 %v3047, %v3207
          %v3209 = vpop.f32.mrb[0].mxu0
          %v3210 = vpop.f32.mrb[0].mxu0
          %v3211 = vadd.f32 %v3050, %v3210
          %v3212 = vpop.f32.mrb[0].mxu0
          %3213 = vmatprep.mubr.bf16.mxu0 %v1060
          %3214 = vmatmul.mubr.bf16.gmra.mrb[0].mxu0 %v1059
          %v3215 = vpop.f32.mrb[0].mxu0
          %v3216 = vadd.f32 %v3055, %v3215
          %v3217 = vpop.f32.mrb[0].mxu0
          %v3218 = vpop.f32.mrb[0].mxu0
          %v3219 = vadd.f32 %v3058, %v3218
          %v3220 = vpop.f32.mrb[0].mxu0
          %3221 = vmatprep.mubr.bf16.mxu0 %v1069
          %3222 = vmatmul.mubr.bf16.gmra.mrb[0].mxu0 %v1068
          %v3223 = vpop.f32.mrb[0].mxu0
          %v3224 = vadd.f32 %v3063, %v3223
          %v3225 = vpop.f32.mrb[0].mxu0
          %v3226 = vpop.f32.mrb[0].mxu0
          %v3227 = vadd.f32 %v3066, %v3226
          %v3228 = vpop.f32.mrb[0].mxu0
          %3229 = vmatprep.mubr.bf16.mxu0 %v1078
          %3230 = vmatmul.mubr.bf16.gmra.mrb[0].mxu0 %v1077
          %v3231 = vpop.f32.mrb[0].mxu0
          %v3232 = vadd.f32 %v3071, %v3231
          %v3233 = vpop.f32.mrb[0].mxu0
          %v3234 = vpop.f32.mrb[0].mxu0
          %v3235 = vadd.f32 %v3074, %v3234
          %v3236 = vpop.f32.mrb[0].mxu0
          %3237 = vmatprep.mubr.bf16.mxu0 %v1087
          %3238 = vmatmul.mubr.bf16.gmra.mrb[0].mxu0 %v1086
          %v3239 = vpop.f32.mrb[0].mxu0
          %v3240 = vadd.f32 %v3079, %v3239
          %v3241 = vpop.f32.mrb[0].mxu0
          %v3242 = vpop.f32.mrb[0].mxu0
          %v3243 = vadd.f32 %v3082, %v3242
          %v3244 = vpop.f32.mrb[0].mxu0
          %3245 = vmatprep.mubr.bf16.mxu0 %v1096
          %3246 = vmatmul.mubr.bf16.gmra.mrb[0].mxu0 %v1095
          %v3247 = vpop.f32.mrb[0].mxu0
          %v3248 = vadd.f32 %v3087, %v3247
          %v3249 = vpop.f32.mrb[0].mxu0
          %v3250 = vpop.f32.mrb[0].mxu0
          %v3251 = vadd.f32 %v3090, %v3250
          %v3252 = vpop.f32.mrb[0].mxu0
          %3253 = vmatprep.mubr.bf16.mxu0 %v1105
          %3254 = vmatmul.mubr.bf16.gmra.mrb[0].mxu0 %v1104
          %v3255 = vpop.f32.mrb[0].mxu0
          %v3256 = vadd.f32 %v3095, %v3255
          %v3257 = vpop.f32.mrb[0].mxu0
          %v3258 = vpop.f32.mrb[0].mxu0
          %v3259 = vadd.f32 %v3098, %v3258
          %v3260 = vpop.f32.mrb[0].mxu0
          %3261 = vmatprep.mubr.bf16.mxu0 %v1114
          %3262 = vmatmul.mubr.bf16.gmra.mrb[0].mxu0 %v1113
          %v3263 = vpop.f32.mrb[0].mxu0
          %v3264 = vadd.f32 %v3103, %v3263
          %v3265 = vpop.f32.mrb[0].mxu0
          %v3266 = vpop.f32.mrb[0].mxu0
          %v3267 = vadd.f32 %v3106, %v3266
          %v3268 = vpop.f32.mrb[0].mxu0
          %3269 = vdwg.mxu0
          %3270 = vmatprep.subr.bf16.mxu0 0
          %3271 = vmatpush1.bf16.msra.mxu0 %v2691
          %3272 = vmatprep.subr.bf16.mxu0 0
          %3273 = vmatpush1.bf16.msra.mxu0 %v2692
          %3274 = vmatprep.subr.bf16.mxu0 0
          %3275 = vmatpush1.bf16.msra.mxu0 %v2693
          %3276 = vmatprep.subr.bf16.mxu0 0
          %3277 = vmatpush1.bf16.msra.mxu0 %v2694
          %3278 = vmatprep.subr.bf16.mxu0 0
          %3279 = vmatpush1.bf16.msra.mxu0 %v2695
          %3280 = vmatprep.subr.bf16.mxu0 0
          %3281 = vmatpush1.bf16.msra.mxu0 %v2696
          %3282 = vmatprep.subr.bf16.mxu0 0
          %3283 = vmatpush1.bf16.msra.mxu0 %v2697
          %3284 = vmatprep.subr.bf16.mxu0 0
          %3285 = vmatpush1.bf16.msra.mxu0 %v2698
          %3286 = vmatprep.subr.bf16.mxu0 0
          %3287 = vmatpush1.bf16.msra.mxu0 %v2699
          %3288 = vmatprep.subr.bf16.mxu0 0
          %3289 = vmatpush1.bf16.msra.mxu0 %v2700
          %3290 = vmatprep.subr.bf16.mxu0 0
          %3291 = vmatpush1.bf16.msra.mxu0 %v2701
          %3292 = vmatprep.subr.bf16.mxu0 0
          %3293 = vmatpush1.bf16.msra.mxu0 %v2702
          %3294 = vmatprep.subr.bf16.mxu0 0
          %3295 = vmatpush1.bf16.msra.mxu0 %v2703
          %3296 = vmatprep.subr.bf16.mxu0 0
          %3297 = vmatpush1.bf16.msra.mxu0 %v2704
          %3298 = vmatprep.subr.bf16.mxu0 0
          %3299 = vmatpush1.bf16.msra.mxu0 %v2705
          %3300 = vmatprep.subr.bf16.mxu0 0
          %3301 = vmatpush1.bf16.msra.mxu0 %v2706
          %3302 = vmatprep.mubr.bf16.mxu0 %v981
          %3303 = vmatmul.mubr.bf16.gmra.mrb[0].mxu0 %v980
          %v3304 = vpop.f32.mrb[0].mxu0
          %v3305 = vadd.f32 %v3144, %v3304
          %v3306 = vpop.f32.mrb[0].mxu0
          %v3307 = vpop.f32.mrb[0].mxu0
          %v3308 = vadd.f32 %v3147, %v3307
          %v3309 = vpop.f32.mrb[0].mxu0
          %3310 = vmatprep.mubr.bf16.mxu0 %v990
          %3311 = vmatmul.mubr.bf16.gmra.mrb[0].mxu0 %v989
          %v3312 = vpop.f32.mrb[0].mxu0
          %v3313 = vadd.f32 %v3152, %v3312
          %v3314 = vpop.f32.mrb[0].mxu0
          %v3315 = vpop.f32.mrb[0].mxu0
          %v3316 = vadd.f32 %v3155, %v3315
          %v3317 = vpop.f32.mrb[0].mxu0
          %3318 = vmatprep.mubr.bf16.mxu0 %v999
          %3319 = vmatmul.mubr.bf16.gmra.mrb[0].mxu0 %v998
          %v3320 = vpop.f32.mrb[0].mxu0
          %v3321 = vadd.f32 %v3160, %v3320
          %v3322 = vpop.f32.mrb[0].mxu0
          %v3323 = vpop.f32.mrb[0].mxu0
          %v3324 = vadd.f32 %v3163, %v3323
          %v3325 = vpop.f32.mrb[0].mxu0
          %3326 = vmatprep.mubr.bf16.mxu0 %v1008
          %3327 = vmatmul.mubr.bf16.gmra.mrb[0].mxu0 %v1007
          %v3328 = vpop.f32.mrb[0].mxu0
          %v3329 = vadd.f32 %v3168, %v3328
          %v3330 = vpop.f32.mrb[0].mxu0
          %v3331 = vpop.f32.mrb[0].mxu0
          %v3332 = vadd.f32 %v3171, %v3331
          %v3333 = vpop.f32.mrb[0].mxu0
          %3334 = vmatprep.mubr.bf16.mxu0 %v1017
          %3335 = vmatmul.mubr.bf16.gmra.mrb[0].mxu0 %v1016
          %v3336 = vpop.f32.mrb[0].mxu0
          %v3337 = vadd.f32 %v3176, %v3336
          %v3338 = vpop.f32.mrb[0].mxu0
          %v3339 = vpop.f32.mrb[0].mxu0
          %v3340 = vadd.f32 %v3179, %v3339
          %v3341 = vpop.f32.mrb[0].mxu0
          %3342 = vmatprep.mubr.bf16.mxu0 %v1026
          %3343 = vmatmul.mubr.bf16.gmra.mrb[0].mxu0 %v1025
          %v3344 = vpop.f32.mrb[0].mxu0
          %v3345 = vadd.f32 %v3184, %v3344
          %v3346 = vpop.f32.mrb[0].mxu0
          %v3347 = vpop.f32.mrb[0].mxu0
          %v3348 = vadd.f32 %v3187, %v3347
          %v3349 = vpop.f32.mrb[0].mxu0
          %3350 = vmatprep.mubr.bf16.mxu0 %v1035
          %3351 = vmatmul.mubr.bf16.gmra.mrb[0].mxu0 %v1034
          %v3352 = vpop.f32.mrb[0].mxu0
          %v3353 = vadd.f32 %v3192, %v3352
          %v3354 = vpop.f32.mrb[0].mxu0
          %v3355 = vpop.f32.mrb[0].mxu0
          %v3356 = vadd.f32 %v3195, %v3355
          %v3357 = vpop.f32.mrb[0].mxu0
          %3358 = vmatprep.mubr.bf16.mxu0 %v1044
          %3359 = vmatmul.mubr.bf16.gmra.mrb[0].mxu0 %v1043
          %v3360 = vpop.f32.mrb[0].mxu0
          %v3361 = vadd.f32 %v3200, %v3360
          %v3362 = vpop.f32.mrb[0].mxu0
          %v3363 = vpop.f32.mrb[0].mxu0
          %v3364 = vadd.f32 %v3203, %v3363
          %v3365 = vpop.f32.mrb[0].mxu0
          %3366 = vmatprep.mubr.bf16.mxu0 %v1053
          %3367 = vmatmul.mubr.bf16.gmra.mrb[0].mxu0 %v1052
          %v3368 = vpop.f32.mrb[0].mxu0
          %v3369 = vadd.f32 %v3208, %v3368
          %v3370 = vpop.f32.mrb[0].mxu0
          %v3371 = vpop.f32.mrb[0].mxu0
          %v3372 = vadd.f32 %v3211, %v3371
          %v3373 = vpop.f32.mrb[0].mxu0
          %3374 = vmatprep.mubr.bf16.mxu0 %v1062
          %3375 = vmatmul.mubr.bf16.gmra.mrb[0].mxu0 %v1061
          %v3376 = vpop.f32.mrb[0].mxu0
          %v3377 = vadd.f32 %v3216, %v3376
          %v3378 = vpop.f32.mrb[0].mxu0
          %v3379 = vpop.f32.mrb[0].mxu0
          %v3380 = vadd.f32 %v3219, %v3379
          %v3381 = vpop.f32.mrb[0].mxu0
          %3382 = vmatprep.mubr.bf16.mxu0 %v1071
          %3383 = vmatmul.mubr.bf16.gmra.mrb[0].mxu0 %v1070
          %v3384 = vpop.f32.mrb[0].mxu0
          %v3385 = vadd.f32 %v3224, %v3384
          %v3386 = vpop.f32.mrb[0].mxu0
          %v3387 = vpop.f32.mrb[0].mxu0
          %v3388 = vadd.f32 %v3227, %v3387
          %v3389 = vpop.f32.mrb[0].mxu0
          %3390 = vmatprep.mubr.bf16.mxu0 %v1080
          %3391 = vmatmul.mubr.bf16.gmra.mrb[0].mxu0 %v1079
          %v3392 = vpop.f32.mrb[0].mxu0
          %v3393 = vadd.f32 %v3232, %v3392
          %v3394 = vpop.f32.mrb[0].mxu0
          %v3395 = vpop.f32.mrb[0].mxu0
          %v3396 = vadd.f32 %v3235, %v3395
          %v3397 = vpop.f32.mrb[0].mxu0
          %3398 = vmatprep.mubr.bf16.mxu0 %v1089
          %3399 = vmatmul.mubr.bf16.gmra.mrb[0].mxu0 %v1088
          %v3400 = vpop.f32.mrb[0].mxu0
          %v3401 = vadd.f32 %v3240, %v3400
          %v3402 = vpop.f32.mrb[0].mxu0
          %v3403 = vpop.f32.mrb[0].mxu0
          %v3404 = vadd.f32 %v3243, %v3403
          %v3405 = vpop.f32.mrb[0].mxu0
          %3406 = vmatprep.mubr.bf16.mxu0 %v1098
          %3407 = vmatmul.mubr.bf16.gmra.mrb[0].mxu0 %v1097
          %v3408 = vpop.f32.mrb[0].mxu0
          %v3409 = vadd.f32 %v3248, %v3408
          %v3410 = vpop.f32.mrb[0].mxu0
          %v3411 = vpop.f32.mrb[0].mxu0
          %v3412 = vadd.f32 %v3251, %v3411
          %v3413 = vpop.f32.mrb[0].mxu0
          %3414 = vmatprep.mubr.bf16.mxu0 %v1107
          %3415 = vmatmul.mubr.bf16.gmra.mrb[0].mxu0 %v1106
          %v3416 = vpop.f32.mrb[0].mxu0
          %v3417 = vadd.f32 %v3256, %v3416
          %v3418 = vpop.f32.mrb[0].mxu0
          %v3419 = vpop.f32.mrb[0].mxu0
          %v3420 = vadd.f32 %v3259, %v3419
          %v3421 = vpop.f32.mrb[0].mxu0
          %3422 = vmatprep.mubr.bf16.mxu0 %v1116
          %3423 = vmatmul.mubr.bf16.gmra.mrb[0].mxu0 %v1115
          %v3424 = vpop.f32.mrb[0].mxu0
          %v3425 = vadd.f32 %v3264, %v3424
          %v3426 = vpop.f32.mrb[0].mxu0
          %v3427 = vpop.f32.mrb[0].mxu0
          %v3428 = vadd.f32 %v3267, %v3427
          %v3429 = vpop.f32.mrb[0].mxu0
          %3430 = vdwg.mxu0
          %3431 = vmatprep.subr.bf16.mxu0 0
          %3432 = vmatpush1.bf16.msra.mxu0 %v2707
          %3433 = vmatprep.subr.bf16.mxu0 0
          %3434 = vmatpush1.bf16.msra.mxu0 %v2708
          %3435 = vmatprep.subr.bf16.mxu0 0
          %3436 = vmatpush1.bf16.msra.mxu0 %v2709
          %3437 = vmatprep.subr.bf16.mxu0 0
          %3438 = vmatpush1.bf16.msra.mxu0 %v2710
          %3439 = vmatprep.subr.bf16.mxu0 0
          %3440 = vmatpush1.bf16.msra.mxu0 %v2711
          %3441 = vmatprep.subr.bf16.mxu0 0
          %3442 = vmatpush1.bf16.msra.mxu0 %v2712
          %3443 = vmatprep.subr.bf16.mxu0 0
          %3444 = vmatpush1.bf16.msra.mxu0 %v2713
          %3445 = vmatprep.subr.bf16.mxu0 0
          %3446 = vmatpush1.bf16.msra.mxu0 %v2714
          %3447 = vmatprep.subr.bf16.mxu0 0
          %3448 = vmatpush1.bf16.msra.mxu0 0
          %3449 = vmatprep.subr.bf16.mxu0 0
          %3450 = vmatpush1.bf16.msra.mxu0 0
          %3451 = vmatprep.subr.bf16.mxu0 0
          %3452 = vmatpush1.bf16.msra.mxu0 0
          %3453 = vmatprep.subr.bf16.mxu0 0
          %3454 = vmatpush1.bf16.msra.mxu0 0
          %3455 = vmatprep.subr.bf16.mxu0 0
          %3456 = vmatpush1.bf16.msra.mxu0 0
          %3457 = vmatprep.subr.bf16.mxu0 0
          %3458 = vmatpush1.bf16.msra.mxu0 0
          %3459 = vmatprep.subr.bf16.mxu0 0
          %3460 = vmatpush1.bf16.msra.mxu0 0
          %3461 = vmatprep.subr.bf16.mxu0 0
          %3462 = vmatpush1.bf16.msra.mxu0 0
          %3463 = vmatprep.mubr.bf16.mxu0 0
          %3464 = vmatmul.mubr.bf16.gmra.mrb[0].mxu0 %v982
          %v3465 = vpop.f32.mrb[0].mxu0
          %v3466 = vadd.f32 %v3305, %v3465
          %v3467 = vpop.f32.mrb[0].mxu0
          %v3468 = vpop.f32.mrb[0].mxu0
          %v3469 = vadd.f32 %v3308, %v3468
          %v3470 = vpop.f32.mrb[0].mxu0
          %3471 = vmatprep.mubr.bf16.mxu0 0
          %3472 = vmatmul.mubr.bf16.gmra.mrb[0].mxu0 %v991
          %v3473 = vpop.f32.mrb[0].mxu0
          %v3474 = vadd.f32 %v3313, %v3473
          %v3475 = vpop.f32.mrb[0].mxu0
          %v3476 = vpop.f32.mrb[0].mxu0
          %v3477 = vadd.f32 %v3316, %v3476
          %v3478 = vpop.f32.mrb[0].mxu0
          %3479 = vmatprep.mubr.bf16.mxu0 0
          %3480 = vmatmul.mubr.bf16.gmra.mrb[0].mxu0 %v1000
          %v3481 = vpop.f32.mrb[0].mxu0
          %v3482 = vadd.f32 %v3321, %v3481
          %v3483 = vpop.f32.mrb[0].mxu0
          %v3484 = vpop.f32.mrb[0].mxu0
          %v3485 = vadd.f32 %v3324, %v3484
          %v3486 = vpop.f32.mrb[0].mxu0
          %3487 = vmatprep.mubr.bf16.mxu0 0
          %3488 = vmatmul.mubr.bf16.gmra.mrb[0].mxu0 %v1009
          %v3489 = vpop.f32.mrb[0].mxu0
          %v3490 = vadd.f32 %v3329, %v3489
          %v3491 = vpop.f32.mrb[0].mxu0
          %v3492 = vpop.f32.mrb[0].mxu0
          %v3493 = vadd.f32 %v3332, %v3492
          %v3494 = vpop.f32.mrb[0].mxu0
          %3495 = vmatprep.mubr.bf16.mxu0 0
          %3496 = vmatmul.mubr.bf16.gmra.mrb[0].mxu0 %v1018
          %v3497 = vpop.f32.mrb[0].mxu0
          %v3498 = vadd.f32 %v3337, %v3497
          %v3499 = vpop.f32.mrb[0].mxu0
          %v3500 = vpop.f32.mrb[0].mxu0
          %v3501 = vadd.f32 %v3340, %v3500
          %v3502 = vpop.f32.mrb[0].mxu0
          %3503 = vmatprep.mubr.bf16.mxu0 0
          %3504 = vmatmul.mubr.bf16.gmra.mrb[0].mxu0 %v1027
          %v3505 = vpop.f32.mrb[0].mxu0
          %v3506 = vadd.f32 %v3345, %v3505
          %v3507 = vpop.f32.mrb[0].mxu0
          %v3508 = vpop.f32.mrb[0].mxu0
          %v3509 = vadd.f32 %v3348, %v3508
          %v3510 = vpop.f32.mrb[0].mxu0
          %3511 = vmatprep.mubr.bf16.mxu0 0
          %3512 = vmatmul.mubr.bf16.gmra.mrb[0].mxu0 %v1036
          %v3513 = vpop.f32.mrb[0].mxu0
          %v3514 = vadd.f32 %v3353, %v3513
          %v3515 = vpop.f32.mrb[0].mxu0
          %v3516 = vpop.f32.mrb[0].mxu0
          %v3517 = vadd.f32 %v3356, %v3516
          %v3518 = vpop.f32.mrb[0].mxu0
          %3519 = vmatprep.mubr.bf16.mxu0 0
          %3520 = vmatmul.mubr.bf16.gmra.mrb[0].mxu0 %v1045
          %v3521 = vpop.f32.mrb[0].mxu0
          %v3522 = vadd.f32 %v3361, %v3521
          %v3523 = vpop.f32.mrb[0].mxu0
          %v3524 = vpop.f32.mrb[0].mxu0
          %v3525 = vadd.f32 %v3364, %v3524
          %v3526 = vpop.f32.mrb[0].mxu0
          %3527 = vmatprep.mubr.bf16.mxu0 0
          %3528 = vmatmul.mubr.bf16.gmra.mrb[0].mxu0 %v1054
          %v3529 = vpop.f32.mrb[0].mxu0
          %v3530 = vadd.f32 %v3369, %v3529
          %v3531 = vpop.f32.mrb[0].mxu0
          %v3532 = vpop.f32.mrb[0].mxu0
          %v3533 = vadd.f32 %v3372, %v3532
          %v3534 = vpop.f32.mrb[0].mxu0
          %3535 = vmatprep.mubr.bf16.mxu0 0
          %3536 = vmatmul.mubr.bf16.gmra.mrb[0].mxu0 %v1063
          %v3537 = vpop.f32.mrb[0].mxu0
          %v3538 = vadd.f32 %v3377, %v3537
          %v3539 = vpop.f32.mrb[0].mxu0
          %v3540 = vpop.f32.mrb[0].mxu0
          %v3541 = vadd.f32 %v3380, %v3540
          %v3542 = vpop.f32.mrb[0].mxu0
          %3543 = vmatprep.mubr.bf16.mxu0 0
          %3544 = vmatmul.mubr.bf16.gmra.mrb[0].mxu0 %v1072
          %v3545 = vpop.f32.mrb[0].mxu0
          %v3546 = vadd.f32 %v3385, %v3545
          %v3547 = vpop.f32.mrb[0].mxu0
          %v3548 = vpop.f32.mrb[0].mxu0
          %v3549 = vadd.f32 %v3388, %v3548
          %v3550 = vpop.f32.mrb[0].mxu0
          %3551 = vmatprep.mubr.bf16.mxu0 0
          %3552 = vmatmul.mubr.bf16.gmra.mrb[0].mxu0 %v1081
          %v3553 = vpop.f32.mrb[0].mxu0
          %v3554 = vadd.f32 %v3393, %v3553
          %v3555 = vpop.f32.mrb[0].mxu0
          %v3556 = vpop.f32.mrb[0].mxu0
          %v3557 = vadd.f32 %v3396, %v3556
          %v3558 = vpop.f32.mrb[0].mxu0
          %3559 = vmatprep.mubr.bf16.mxu0 0
          %3560 = vmatmul.mubr.bf16.gmra.mrb[0].mxu0 %v1090
          %v3561 = vpop.f32.mrb[0].mxu0
          %v3562 = vadd.f32 %v3401, %v3561
          %v3563 = vpop.f32.mrb[0].mxu0
          %v3564 = vpop.f32.mrb[0].mxu0
          %v3565 = vadd.f32 %v3404, %v3564
          %v3566 = vpop.f32.mrb[0].mxu0
          %3567 = vmatprep.mubr.bf16.mxu0 0
          %3568 = vmatmul.mubr.bf16.gmra.mrb[0].mxu0 %v1099
          %v3569 = vpop.f32.mrb[0].mxu0
          %v3570 = vadd.f32 %v3409, %v3569
          %v3571 = vpop.f32.mrb[0].mxu0
          %v3572 = vpop.f32.mrb[0].mxu0
          %v3573 = vadd.f32 %v3412, %v3572
          %v3574 = vpop.f32.mrb[0].mxu0
          %3575 = vmatprep.mubr.bf16.mxu0 0
          %3576 = vmatmul.mubr.bf16.gmra.mrb[0].mxu0 %v1108
          %v3577 = vpop.f32.mrb[0].mxu0
          %v3578 = vadd.f32 %v3417, %v3577
          %v3579 = vpop.f32.mrb[0].mxu0
          %v3580 = vpop.f32.mrb[0].mxu0
          %v3581 = vadd.f32 %v3420, %v3580
          %v3582 = vpop.f32.mrb[0].mxu0
          %3583 = vmatprep.mubr.bf16.mxu0 0
          %3584 = vmatmul.mubr.bf16.gmra.mrb[0].mxu0 %v1117
          %v3585 = vpop.f32.mrb[0].mxu0
          %v3586 = vadd.f32 %v3425, %v3585
          %v3587 = vpop.f32.mrb[0].mxu0
          %v3588 = vpop.f32.mrb[0].mxu0
          %v3589 = vadd.f32 %v3428, %v3588
          %v3590 = vpop.f32.mrb[0].mxu0
          %3591 = vdwg.mxu0
          %s3592 = smul.u32 %s22, 64
          %s3593 = smul.addr %s3592, 8
          %s3594 = scalar_lea.vmem [#allocation2], %s3593
          %3595 = vst [vmem:[%s3594] sm:$0xff] %v2373
          %3596 = vst [vmem:[%s3594 + $0x8] sm:$0xff] %v3466
          %3597 = vst [vmem:[%s3594 + $0x10] sm:$0xff] %v2376
          %3598 = vst [vmem:[%s3594 + $0x18] sm:$0xff] %v3469
          %3599 = vst [vmem:[%s3594 + $0x20] sm:$0xff] %v2381
          %3600 = vst [vmem:[%s3594 + $0x28] sm:$0xff] %v3474
          %3601 = vst [vmem:[%s3594 + $0x30] sm:$0xff] %v2384
          %3602 = vst [vmem:[%s3594 + $0x38] sm:$0xff] %v3477
          %3603 = vst [vmem:[%s3594 + $0x40] sm:$0xff] %v2389
          %3604 = vst [vmem:[%s3594 + $0x48] sm:$0xff] %v3482
          %3605 = vst [vmem:[%s3594 + $0x50] sm:$0xff] %v2392
          %3606 = vst [vmem:[%s3594 + $0x58] sm:$0xff] %v3485
          %3607 = vst [vmem:[%s3594 + $0x60] sm:$0xff] %v2397
          %3608 = vst [vmem:[%s3594 + $0x68] sm:$0xff] %v3490
          %3609 = vst [vmem:[%s3594 + $0x70] sm:$0xff] %v2400
          %3610 = vst [vmem:[%s3594 + $0x78] sm:$0xff] %v3493
          %3611 = vst [vmem:[%s3594 + $0x80] sm:$0xff] %v2405
          %3612 = vst [vmem:[%s3594 + $0x88] sm:$0xff] %v3498
          %3613 = vst [vmem:[%s3594 + $0x90] sm:$0xff] %v2408
          %3614 = vst [vmem:[%s3594 + $0x98] sm:$0xff] %v3501
          %3615 = vst [vmem:[%s3594 + $0xa0] sm:$0xff] %v2413
          %3616 = vst [vmem:[%s3594 + $0xa8] sm:$0xff] %v3506
          %3617 = vst [vmem:[%s3594 + $0xb0] sm:$0xff] %v2416
          %3618 = vst [vmem:[%s3594 + $0xb8] sm:$0xff] %v3509
          %3619 = vst [vmem:[%s3594 + $0xc0] sm:$0xff] %v2421
          %3620 = vst [vmem:[%s3594 + $0xc8] sm:$0xff] %v3514
          %3621 = vst [vmem:[%s3594 + $0xd0] sm:$0xff] %v2424
          %3622 = vst [vmem:[%s3594 + $0xd8] sm:$0xff] %v3517
          %3623 = vst [vmem:[%s3594 + $0xe0] sm:$0xff] %v2429
          %3624 = vst [vmem:[%s3594 + $0xe8] sm:$0xff] %v3522
          %3625 = vst [vmem:[%s3594 + $0xf0] sm:$0xff] %v2432
          %3626 = vst [vmem:[%s3594 + $0xf8] sm:$0xff] %v3525
          %3627 = vst [vmem:[%s3594 + $0x100] sm:$0xff] %v2437
          %3628 = vst [vmem:[%s3594 + $0x108] sm:$0xff] %v3530
          %3629 = vst [vmem:[%s3594 + $0x110] sm:$0xff] %v2440
          %3630 = vst [vmem:[%s3594 + $0x118] sm:$0xff] %v3533
          %3631 = vst [vmem:[%s3594 + $0x120] sm:$0xff] %v2445
          %3632 = vst [vmem:[%s3594 + $0x128] sm:$0xff] %v3538
          %3633 = vst [vmem:[%s3594 + $0x130] sm:$0xff] %v2448
          %3634 = vst [vmem:[%s3594 + $0x138] sm:$0xff] %v3541
          %3635 = vst [vmem:[%s3594 + $0x140] sm:$0xff] %v2453
          %3636 = vst [vmem:[%s3594 + $0x148] sm:$0xff] %v3546
          %3637 = vst [vmem:[%s3594 + $0x150] sm:$0xff] %v2456
          %3638 = vst [vmem:[%s3594 + $0x158] sm:$0xff] %v3549
          %3639 = vst [vmem:[%s3594 + $0x160] sm:$0xff] %v2461
          %3640 = vst [vmem:[%s3594 + $0x168] sm:$0xff] %v3554
          %3641 = vst [vmem:[%s3594 + $0x170] sm:$0xff] %v2464
          %3642 = vst [vmem:[%s3594 + $0x178] sm:$0xff] %v3557
          %3643 = vst [vmem:[%s3594 + $0x180] sm:$0xff] %v2469
          %3644 = vst [vmem:[%s3594 + $0x188] sm:$0xff] %v3562
          %3645 = vst [vmem:[%s3594 + $0x190] sm:$0xff] %v2472
          %3646 = vst [vmem:[%s3594 + $0x198] sm:$0xff] %v3565
          %3647 = vst [vmem:[%s3594 + $0x1a0] sm:$0xff] %v2477
          %3648 = vst [vmem:[%s3594 + $0x1a8] sm:$0xff] %v3570
          %3649 = vst [vmem:[%s3594 + $0x1b0] sm:$0xff] %v2480
          %3650 = vst [vmem:[%s3594 + $0x1b8] sm:$0xff] %v3573
          %3651 = vst [vmem:[%s3594 + $0x1c0] sm:$0xff] %v2485
          %3652 = vst [vmem:[%s3594 + $0x1c8] sm:$0xff] %v3578
          %3653 = vst [vmem:[%s3594 + $0x1d0] sm:$0xff] %v2488
          %3654 = vst [vmem:[%s3594 + $0x1d8] sm:$0xff] %v3581
          %3655 = vst [vmem:[%s3594 + $0x1e0] sm:$0xff] %v2493
          %3656 = vst [vmem:[%s3594 + $0x1e8] sm:$0xff] %v3586
          %3657 = vst [vmem:[%s3594 + $0x1f0] sm:$0xff] %v2496
          %3658 = vst [vmem:[%s3594 + $0x1f8] sm:$0xff] %v3589
          %v3659 = vld [vmem:[#allocation3] ss:$8 sm:$0x3]
          %v3660 = vadd.f32 %v2373, %v2376
          %v3661 = vadd.f32 %v3660, %v2381
          %v3662 = vadd.f32 %v3661, %v2384
          %v3663 = vadd.f32 %v3662, %v2389
          %v3664 = vadd.f32 %v3663, %v2392
          %v3665 = vadd.f32 %v3664, %v2397
          %v3666 = vadd.f32 %v3665, %v2400
          %v3667 = vadd.f32 %v3666, %v2405
          %v3668 = vadd.f32 %v3667, %v2408
          %v3669 = vadd.f32 %v3668, %v2413
          %v3670 = vadd.f32 %v3669, %v2416
          %v3671 = vadd.f32 %v3670, %v2421
          %v3672 = vadd.f32 %v3671, %v2424
          %v3673 = vadd.f32 %v3672, %v2429
          %v3674 = vadd.f32 %v3673, %v2432
          %v3675 = vadd.f32 %v3674, %v2437
          %v3676 = vadd.f32 %v3675, %v2440
          %v3677 = vadd.f32 %v3676, %v2445
          %v3678 = vadd.f32 %v3677, %v2448
          %v3679 = vadd.f32 %v3678, %v2453
          %v3680 = vadd.f32 %v3679, %v2456
          %v3681 = vadd.f32 %v3680, %v2461
          %v3682 = vadd.f32 %v3681, %v2464
          %v3683 = vadd.f32 %v3682, %v2469
          %v3684 = vadd.f32 %v3683, %v2472
          %v3685 = vadd.f32 %v3684, %v2477
          %v3686 = vadd.f32 %v3685, %v2480
          %v3687 = vadd.f32 %v3686, %v2485
          %v3688 = vadd.f32 %v3687, %v2488
          %v3689 = vadd.f32 %v3688, %v2493
          %v3690 = vadd.f32 %v3689, %v2496
          %v3691 = vrot.slane %v3690, 4
          %v3692 = vadd.f32 %v3690, %v3691
          %v3693 = vrot.slane %v3692, 2
          %v3694 = vadd.f32 %v3692, %v3693
          %v3695 = vrot.slane %v3694, 1
          %v3696 = vadd.f32 %v3694, %v3695
          %v3697 = vadd.f32 %v3466, %v3469
          %v3698 = vadd.f32 %v3697, %v3474
          %v3699 = vadd.f32 %v3698, %v3477
          %v3700 = vadd.f32 %v3699, %v3482
          %v3701 = vadd.f32 %v3700, %v3485
          %v3702 = vadd.f32 %v3701, %v3490
          %v3703 = vadd.f32 %v3702, %v3493
          %v3704 = vadd.f32 %v3703, %v3498
          %v3705 = vadd.f32 %v3704, %v3501
          %v3706 = vadd.f32 %v3705, %v3506
          %v3707 = vadd.f32 %v3706, %v3509
          %v3708 = vadd.f32 %v3707, %v3514
          %v3709 = vadd.f32 %v3708, %v3517
          %v3710 = vadd.f32 %v3709, %v3522
          %v3711 = vadd.f32 %v3710, %v3525
          %v3712 = vadd.f32 %v3711, %v3530
          %v3713 = vadd.f32 %v3712, %v3533
          %v3714 = vadd.f32 %v3713, %v3538
          %v3715 = vadd.f32 %v3714, %v3541
          %v3716 = vadd.f32 %v3715, %v3546
          %v3717 = vadd.f32 %v3716, %v3549
          %v3718 = vadd.f32 %v3717, %v3554
          %v3719 = vadd.f32 %v3718, %v3557
          %v3720 = vadd.f32 %v3719, %v3562
          %v3721 = vadd.f32 %v3720, %v3565
          %v3722 = vadd.f32 %v3721, %v3570
          %v3723 = vadd.f32 %v3722, %v3573
          %v3724 = vadd.f32 %v3723, %v3578
          %v3725 = vadd.f32 %v3724, %v3581
          %v3726 = vadd.f32 %v3725, %v3586
          %v3727 = vadd.f32 %v3726, %v3589
          %v3728 = vrot.slane %v3727, 4
          %v3729 = vadd.f32 %v3727, %v3728
          %v3730 = vrot.slane %v3729, 2
          %v3731 = vadd.f32 %v3729, %v3730
          %v3732 = vrot.slane %v3731, 1
          %v3733 = vadd.f32 %v3731, %v3732
          %v3736 = vcombine.low %v3696, %v3733
          %v3738 = vunpack.c.l.s4 1966171168
          %v3739 = vunpack.c.0.s8 %v3738
          %v3740 = vlaneseq
          %v3741 = vshrl.u32 %v3740, 7
          %v3742 = vsub.s32 %v3739, %v3741
          %v3743 = vrot.slane %v3736, %v3742
          %v3745 = vunpack.c.l.s4 1966171168
          %v3746 = vunpack.c.0.s8 %v3745
          %v3747 = vlaneseq
          %v3748 = vshrl.u32 %v3747, 7
          %v3749 = vsub.s32 %v3746, %v3748
          %v3750 = vrot.slane %v3743, %v3749
          %v3752 = vadd.f32 %v3659, %v3750
          %v3753 = vlaneseq
          %vm3754 = vcmp.ge.s32.totalorder %v3753, 0
          %vm3755 = vcmp.lt.s32.totalorder %v3753, 256
          %vm3756 = vmand %vm3754, %vm3755
          %3757 = vst.msk [vmem:[#allocation3] ss:$8 sm:$0x3] %vm3756, %v3752
          %3758 = vst.msk [vmem:[#allocation3] ss:$8 sm:$0x0] %vm3756, %v3752
          %s3759 = scalar_lea.vmem [#allocation3], 1
          %v3760 = vld [vmem:[%s3759] ss:$8 sm:$0x3]
          %v3761 = vmul.f32 %v2373, %v2373
          %v3762 = vmul.f32 %v3466, %v3466
          %v3763 = vmul.f32 %v2376, %v2376
          %v3764 = vmul.f32 %v3469, %v3469
          %v3765 = vmul.f32 %v2381, %v2381
          %v3766 = vmul.f32 %v3474, %v3474
          %v3767 = vmul.f32 %v2384, %v2384
          %v3768 = vmul.f32 %v3477, %v3477
          %v3769 = vmul.f32 %v2389, %v2389
          %v3770 = vmul.f32 %v3482, %v3482
          %v3771 = vmul.f32 %v2392, %v2392
          %v3772 = vmul.f32 %v3485, %v3485
          %v3773 = vmul.f32 %v2397, %v2397
          %v3774 = vmul.f32 %v3490, %v3490
          %v3775 = vmul.f32 %v2400, %v2400
          %v3776 = vmul.f32 %v3493, %v3493
          %v3777 = vmul.f32 %v2405, %v2405
          %v3778 = vmul.f32 %v3498, %v3498
          %v3779 = vmul.f32 %v2408, %v2408
          %v3780 = vmul.f32 %v3501, %v3501
          %v3781 = vmul.f32 %v2413, %v2413
          %v3782 = vmul.f32 %v3506, %v3506
          %v3783 = vmul.f32 %v2416, %v2416
          %v3784 = vmul.f32 %v3509, %v3509
          %v3785 = vmul.f32 %v2421, %v2421
          %v3786 = vmul.f32 %v3514, %v3514
          %v3787 = vmul.f32 %v2424, %v2424
          %v3788 = vmul.f32 %v3517, %v3517
          %v3789 = vmul.f32 %v2429, %v2429
          %v3790 = vmul.f32 %v3522, %v3522
          %v3791 = vmul.f32 %v2432, %v2432
          %v3792 = vmul.f32 %v3525, %v3525
          %v3793 = vmul.f32 %v2437, %v2437
          %v3794 = vmul.f32 %v3530, %v3530
          %v3795 = vmul.f32 %v2440, %v2440
          %v3796 = vmul.f32 %v3533, %v3533
          %v3797 = vmul.f32 %v2445, %v2445
          %v3798 = vmul.f32 %v3538, %v3538
          %v3799 = vmul.f32 %v2448, %v2448
          %v3800 = vmul.f32 %v3541, %v3541
          %v3801 = vmul.f32 %v2453, %v2453
          %v3802 = vmul.f32 %v3546, %v3546
          %v3803 = vmul.f32 %v2456, %v2456
          %v3804 = vmul.f32 %v3549, %v3549
          %v3805 = vmul.f32 %v2461, %v2461
          %v3806 = vmul.f32 %v3554, %v3554
          %v3807 = vmul.f32 %v2464, %v2464
          %v3808 = vmul.f32 %v3557, %v3557
          %v3809 = vmul.f32 %v2469, %v2469
          %v3810 = vmul.f32 %v3562, %v3562
          %v3811 = vmul.f32 %v2472, %v2472
          %v3812 = vmul.f32 %v3565, %v3565
          %v3813 = vmul.f32 %v2477, %v2477
          %v3814 = vmul.f32 %v3570, %v3570
          %v3815 = vmul.f32 %v2480, %v2480
          %v3816 = vmul.f32 %v3573, %v3573
          %v3817 = vmul.f32 %v2485, %v2485
          %v3818 = vmul.f32 %v3578, %v3578
          %v3819 = vmul.f32 %v2488, %v2488
          %v3820 = vmul.f32 %v3581, %v3581
          %v3821 = vmul.f32 %v2493, %v2493
          %v3822 = vmul.f32 %v3586, %v3586
          %v3823 = vmul.f32 %v2496, %v2496
          %v3824 = vmul.f32 %v3589, %v3589
          %v3825 = vadd.f32 %v3761, %v3763
          %v3826 = vadd.f32 %v3825, %v3765
          %v3827 = vadd.f32 %v3826, %v3767
          %v3828 = vadd.f32 %v3827, %v3769
          %v3829 = vadd.f32 %v3828, %v3771
          %v3830 = vadd.f32 %v3829, %v3773
          %v3831 = vadd.f32 %v3830, %v3775
          %v3832 = vadd.f32 %v3831, %v3777
          %v3833 = vadd.f32 %v3832, %v3779
          %v3834 = vadd.f32 %v3833, %v3781
          %v3835 = vadd.f32 %v3834, %v3783
          %v3836 = vadd.f32 %v3835, %v3785
          %v3837 = vadd.f32 %v3836, %v3787
          %v3838 = vadd.f32 %v3837, %v3789
          %v3839 = vadd.f32 %v3838, %v3791
          %v3840 = vadd.f32 %v3839, %v3793
          %v3841 = vadd.f32 %v3840, %v3795
          %v3842 = vadd.f32 %v3841, %v3797
          %v3843 = vadd.f32 %v3842, %v3799
          %v3844 = vadd.f32 %v3843, %v3801
          %v3845 = vadd.f32 %v3844, %v3803
          %v3846 = vadd.f32 %v3845, %v3805
          %v3847 = vadd.f32 %v3846, %v3807
          %v3848 = vadd.f32 %v3847, %v3809
          %v3849 = vadd.f32 %v3848, %v3811
          %v3850 = vadd.f32 %v3849, %v3813
          %v3851 = vadd.f32 %v3850, %v3815
          %v3852 = vadd.f32 %v3851, %v3817
          %v3853 = vadd.f32 %v3852, %v3819
          %v3854 = vadd.f32 %v3853, %v3821
          %v3855 = vadd.f32 %v3854, %v3823
          %v3856 = vrot.slane %v3855, 4
          %v3857 = vadd.f32 %v3855, %v3856
          %v3858 = vrot.slane %v3857, 2
          %v3859 = vadd.f32 %v3857, %v3858
          %v3860 = vrot.slane %v3859, 1
          %v3861 = vadd.f32 %v3859, %v3860
          %v3862 = vadd.f32 %v3762, %v3764
          %v3863 = vadd.f32 %v3862, %v3766
          %v3864 = vadd.f32 %v3863, %v3768
          %v3865 = vadd.f32 %v3864, %v3770
          %v3866 = vadd.f32 %v3865, %v3772
          %v3867 = vadd.f32 %v3866, %v3774
          %v3868 = vadd.f32 %v3867, %v3776
          %v3869 = vadd.f32 %v3868, %v3778
          %v3870 = vadd.f32 %v3869, %v3780
          %v3871 = vadd.f32 %v3870, %v3782
          %v3872 = vadd.f32 %v3871, %v3784
          %v3873 = vadd.f32 %v3872, %v3786
          %v3874 = vadd.f32 %v3873, %v3788
          %v3875 = vadd.f32 %v3874, %v3790
          %v3876 = vadd.f32 %v3875, %v3792
          %v3877 = vadd.f32 %v3876, %v3794
          %v3878 = vadd.f32 %v3877, %v3796
          %v3879 = vadd.f32 %v3878, %v3798
          %v3880 = vadd.f32 %v3879, %v3800
          %v3881 = vadd.f32 %v3880, %v3802
          %v3882 = vadd.f32 %v3881, %v3804
          %v3883 = vadd.f32 %v3882, %v3806
          %v3884 = vadd.f32 %v3883, %v3808
          %v3885 = vadd.f32 %v3884, %v3810
          %v3886 = vadd.f32 %v3885, %v3812
          %v3887 = vadd.f32 %v3886, %v3814
          %v3888 = vadd.f32 %v3887, %v3816
          %v3889 = vadd.f32 %v3888, %v3818
          %v3890 = vadd.f32 %v3889, %v3820
          %v3891 = vadd.f32 %v3890, %v3822
          %v3892 = vadd.f32 %v3891, %v3824
          %v3893 = vrot.slane %v3892, 4
          %v3894 = vadd.f32 %v3892, %v3893
          %v3895 = vrot.slane %v3894, 2
          %v3896 = vadd.f32 %v3894, %v3895
          %v3897 = vrot.slane %v3896, 1
          %v3898 = vadd.f32 %v3896, %v3897
          %v3901 = vcombine.low %v3861, %v3898
          %v3903 = vunpack.c.l.s4 1966171168
          %v3904 = vunpack.c.0.s8 %v3903
          %v3905 = vlaneseq
          %v3906 = vshrl.u32 %v3905, 7
          %v3907 = vsub.s32 %v3904, %v3906
          %v3908 = vrot.slane %v3901, %v3907
          %v3910 = vunpack.c.l.s4 1966171168
          %v3911 = vunpack.c.0.s8 %v3910
          %v3912 = vlaneseq
          %v3913 = vshrl.u32 %v3912, 7
          %v3914 = vsub.s32 %v3911, %v3913
          %v3915 = vrot.slane %v3908, %v3914
          %v3917 = vadd.f32 %v3760, %v3915
          %3918 = vst.msk [vmem:[%s3759] ss:$8 sm:$0x3] %vm3756, %v3917
          %3919 = vst.msk [vmem:[%s3759] ss:$8 sm:$0x0] %vm3756, %v3917
        $region36: #{block_res_forward_nhwc.1} parent=31 // pred_fallthru
          _
        %p3920 = scmp.eq.s32.totalorder %s21, 1
        %p3921 = scmp.eq.s32.totalorder %s22, 0
        %p3922 = pnand %p3920, %p3921
        %p3923 = pneg %p3922
        // Predicated region
        $region41: #{block_res_forward_nhwc.1} parent=31 // pred_check
          _
        $region42: #{block_res_forward_nhwc.1} parent=31 // pred_check_branch
          %3925 = sbr.rel (%p3922) target = $region44
        $region43: #{block_res_forward_nhwc.1} parent=31 // pred_region
          %v3926 = vld [vmem:[#allocation3] ss:$8 sm:$0x3]
          %v3927 = vmul.f32 %v3926, 0.001953125
          %s3928 = scalar_lea.vmem [#allocation3], 1
          %v3929 = vld [vmem:[%s3928] ss:$8 sm:$0x3]
          %v3930 = vmul.f32 %v3929, 0.001953125
          %v3931 = vmul.f32 %v3927, %v3927
          %v3932 = vsub.f32 %v3930, %v3931
          %v3933 = vmax.f32 %v3932, 0.0
          %v3934 = vld [vmem:[%s2] ss:$8 sm:$0x3]
          %v3935 = vadd.f32 %v3933, 1e-05
          %v3936 = vrsqrt.pop %v3935
          %v3937 = vmul.f32 %v3934, %v3936
          %v3938 = vlaneseq
          %vm3939 = vcmp.ge.s32.totalorder %v3938, 0
          %vm3940 = vcmp.lt.s32.totalorder %v3938, 256
          %vm3941 = vmand %vm3939, %vm3940
          %s3942 = scalar_lea.vmem [#allocation3], 2
          %3943 = vst.msk [vmem:[%s3942] ss:$8 sm:$0x3] %vm3941, %v3937
          %3944 = vst.msk [vmem:[%s3942] ss:$8 sm:$0x0] %vm3941, %v3937
          %s3945 = scalar_lea.vmem %s2, 1
          %v3946 = vld [vmem:[%s3945] ss:$8 sm:$0x3]
          %v3947 = vmul.f32 %v3927, %v3937
          %v3948 = vsub.f32 %v3946, %v3947
          %s3949 = scalar_lea.vmem [#allocation3], 3
          %3950 = vst.msk [vmem:[%s3949] ss:$8 sm:$0x3] %vm3941, %v3948
          %3951 = vst.msk [vmem:[%s3949] ss:$8 sm:$0x0] %vm3941, %v3948
        $region44: #{block_res_forward_nhwc.1} parent=31 // pred_fallthru
          _
        // Predicated region
        $region45: #{block_res_forward_nhwc.1} parent=31 // pred_check
          %p3952 = pneg %p3920
        $region46: #{block_res_forward_nhwc.1} parent=31 // pred_check_branch
          %3954 = sbr.rel (%p3952) target = $region48
        $region47: #{block_res_forward_nhwc.1} parent=31 // pred_region
          %s3955 = smul.u32 %s22, 64
          %s3956 = smul.addr %s3955, 8
          %s3957 = scalar_lea.vmem [#allocation2], %s3956
          %v3958 = vld [vmem:[%s3957] sm:$0xff]
          %v3959 = vld [vmem:[%s3957 + $0x8] sm:$0xff]
          %v3960 = vld [vmem:[%s3957 + $0x10] sm:$0xff]
          %v3961 = vld [vmem:[%s3957 + $0x18] sm:$0xff]
          %v3962 = vld [vmem:[%s3957 + $0x20] sm:$0xff]
          %v3963 = vld [vmem:[%s3957 + $0x28] sm:$0xff]
          %v3964 = vld [vmem:[%s3957 + $0x30] sm:$0xff]
          %v3965 = vld [vmem:[%s3957 + $0x38] sm:$0xff]
          %v3966 = vld [vmem:[%s3957 + $0x40] sm:$0xff]
          %v3967 = vld [vmem:[%s3957 + $0x48] sm:$0xff]
          %v3968 = vld [vmem:[%s3957 + $0x50] sm:$0xff]
          %v3969 = vld [vmem:[%s3957 + $0x58] sm:$0xff]
          %v3970 = vld [vmem:[%s3957 + $0x60] sm:$0xff]
          %v3971 = vld [vmem:[%s3957 + $0x68] sm:$0xff]
          %v3972 = vld [vmem:[%s3957 + $0x70] sm:$0xff]
          %v3973 = vld [vmem:[%s3957 + $0x78] sm:$0xff]
          %v3974 = vld [vmem:[%s3957 + $0x80] sm:$0xff]
          %v3975 = vld [vmem:[%s3957 + $0x88] sm:$0xff]
          %v3976 = vld [vmem:[%s3957 + $0x90] sm:$0xff]
          %v3977 = vld [vmem:[%s3957 + $0x98] sm:$0xff]
          %v3978 = vld [vmem:[%s3957 + $0xa0] sm:$0xff]
          %v3979 = vld [vmem:[%s3957 + $0xa8] sm:$0xff]
          %v3980 = vld [vmem:[%s3957 + $0xb0] sm:$0xff]
          %v3981 = vld [vmem:[%s3957 + $0xb8] sm:$0xff]
          %v3982 = vld [vmem:[%s3957 + $0xc0] sm:$0xff]
          %v3983 = vld [vmem:[%s3957 + $0xc8] sm:$0xff]
          %v3984 = vld [vmem:[%s3957 + $0xd0] sm:$0xff]
          %v3985 = vld [vmem:[%s3957 + $0xd8] sm:$0xff]
          %v3986 = vld [vmem:[%s3957 + $0xe0] sm:$0xff]
          %v3987 = vld [vmem:[%s3957 + $0xe8] sm:$0xff]
          %v3988 = vld [vmem:[%s3957 + $0xf0] sm:$0xff]
          %v3989 = vld [vmem:[%s3957 + $0xf8] sm:$0xff]
          %v3990 = vld [vmem:[%s3957 + $0x100] sm:$0xff]
          %v3991 = vld [vmem:[%s3957 + $0x108] sm:$0xff]
          %v3992 = vld [vmem:[%s3957 + $0x110] sm:$0xff]
          %v3993 = vld [vmem:[%s3957 + $0x118] sm:$0xff]
          %v3994 = vld [vmem:[%s3957 + $0x120] sm:$0xff]
          %v3995 = vld [vmem:[%s3957 + $0x128] sm:$0xff]
          %v3996 = vld [vmem:[%s3957 + $0x130] sm:$0xff]
          %v3997 = vld [vmem:[%s3957 + $0x138] sm:$0xff]
          %v3998 = vld [vmem:[%s3957 + $0x140] sm:$0xff]
          %v3999 = vld [vmem:[%s3957 + $0x148] sm:$0xff]
          %v4000 = vld [vmem:[%s3957 + $0x150] sm:$0xff]
          %v4001 = vld [vmem:[%s3957 + $0x158] sm:$0xff]
          %v4002 = vld [vmem:[%s3957 + $0x160] sm:$0xff]
          %v4003 = vld [vmem:[%s3957 + $0x168] sm:$0xff]
          %v4004 = vld [vmem:[%s3957 + $0x170] sm:$0xff]
          %v4005 = vld [vmem:[%s3957 + $0x178] sm:$0xff]
          %v4006 = vld [vmem:[%s3957 + $0x180] sm:$0xff]
          %v4007 = vld [vmem:[%s3957 + $0x188] sm:$0xff]
          %v4008 = vld [vmem:[%s3957 + $0x190] sm:$0xff]
          %v4009 = vld [vmem:[%s3957 + $0x198] sm:$0xff]
          %v4010 = vld [vmem:[%s3957 + $0x1a0] sm:$0xff]
          %v4011 = vld [vmem:[%s3957 + $0x1a8] sm:$0xff]
          %v4012 = vld [vmem:[%s3957 + $0x1b0] sm:$0xff]
          %v4013 = vld [vmem:[%s3957 + $0x1b8] sm:$0xff]
          %v4014 = vld [vmem:[%s3957 + $0x1c0] sm:$0xff]
          %v4015 = vld [vmem:[%s3957 + $0x1c8] sm:$0xff]
          %v4016 = vld [vmem:[%s3957 + $0x1d0] sm:$0xff]
          %v4017 = vld [vmem:[%s3957 + $0x1d8] sm:$0xff]
          %v4018 = vld [vmem:[%s3957 + $0x1e0] sm:$0xff]
          %v4019 = vld [vmem:[%s3957 + $0x1e8] sm:$0xff]
          %v4020 = vld [vmem:[%s3957 + $0x1f0] sm:$0xff]
          %v4021 = vld [vmem:[%s3957 + $0x1f8] sm:$0xff]
          %s4022 = scalar_lea.vmem [#allocation3], 2
          %v4023 = vld [vmem:[%s4022] ss:$8 sm:$0x3]
          %v4025 = vlaneseq
          %v4026 = vshrl.u32 %v4025, 7
          %v4027 = vsub.s32 0, %v4026
          %v4028 = vrot.slane %v4023, %v4027
          %v4029 = vlaneseq
          %v4030 = vshrl.u32 %v4029, 7
          %v4031 = vsub.s32 1, %v4030
          %v4032 = vrot.slane %v4023, %v4031
          %v4035 = vmul.f32 %v3958, %v4028
          %v4036 = vmul.f32 %v3959, %v4032
          %v4037 = vmul.f32 %v3960, %v4028
          %v4038 = vmul.f32 %v3961, %v4032
          %v4039 = vmul.f32 %v3962, %v4028
          %v4040 = vmul.f32 %v3963, %v4032
          %v4041 = vmul.f32 %v3964, %v4028
          %v4042 = vmul.f32 %v3965, %v4032
          %v4043 = vmul.f32 %v3966, %v4028
          %v4044 = vmul.f32 %v3967, %v4032
          %v4045 = vmul.f32 %v3968, %v4028
          %v4046 = vmul.f32 %v3969, %v4032
          %v4047 = vmul.f32 %v3970, %v4028
          %v4048 = vmul.f32 %v3971, %v4032
          %v4049 = vmul.f32 %v3972, %v4028
          %v4050 = vmul.f32 %v3973, %v4032
          %v4051 = vmul.f32 %v3974, %v4028
          %v4052 = vmul.f32 %v3975, %v4032
          %v4053 = vmul.f32 %v3976, %v4028
          %v4054 = vmul.f32 %v3977, %v4032
          %v4055 = vmul.f32 %v3978, %v4028
          %v4056 = vmul.f32 %v3979, %v4032
          %v4057 = vmul.f32 %v3980, %v4028
          %v4058 = vmul.f32 %v3981, %v4032
          %v4059 = vmul.f32 %v3982, %v4028
          %v4060 = vmul.f32 %v3983, %v4032
          %v4061 = vmul.f32 %v3984, %v4028
          %v4062 = vmul.f32 %v3985, %v4032
          %v4063 = vmul.f32 %v3986, %v4028
          %v4064 = vmul.f32 %v3987, %v4032
          %v4065 = vmul.f32 %v3988, %v4028
          %v4066 = vmul.f32 %v3989, %v4032
          %v4067 = vmul.f32 %v3990, %v4028
          %v4068 = vmul.f32 %v3991, %v4032
          %v4069 = vmul.f32 %v3992, %v4028
          %v4070 = vmul.f32 %v3993, %v4032
          %v4071 = vmul.f32 %v3994, %v4028
          %v4072 = vmul.f32 %v3995, %v4032
          %v4073 = vmul.f32 %v3996, %v4028
          %v4074 = vmul.f32 %v3997, %v4032
          %v4075 = vmul.f32 %v3998, %v4028
          %v4076 = vmul.f32 %v3999, %v4032
          %v4077 = vmul.f32 %v4000, %v4028
          %v4078 = vmul.f32 %v4001, %v4032
          %v4079 = vmul.f32 %v4002, %v4028
          %v4080 = vmul.f32 %v4003, %v4032
          %v4081 = vmul.f32 %v4004, %v4028
          %v4082 = vmul.f32 %v4005, %v4032
          %v4083 = vmul.f32 %v4006, %v4028
          %v4084 = vmul.f32 %v4007, %v4032
          %v4085 = vmul.f32 %v4008, %v4028
          %v4086 = vmul.f32 %v4009, %v4032
          %v4087 = vmul.f32 %v4010, %v4028
          %v4088 = vmul.f32 %v4011, %v4032
          %v4089 = vmul.f32 %v4012, %v4028
          %v4090 = vmul.f32 %v4013, %v4032
          %v4091 = vmul.f32 %v4014, %v4028
          %v4092 = vmul.f32 %v4015, %v4032
          %v4093 = vmul.f32 %v4016, %v4028
          %v4094 = vmul.f32 %v4017, %v4032
          %v4095 = vmul.f32 %v4018, %v4028
          %v4096 = vmul.f32 %v4019, %v4032
          %v4097 = vmul.f32 %v4020, %v4028
          %v4098 = vmul.f32 %v4021, %v4032
          %s4099 = scalar_lea.vmem [#allocation3], 3
          %v4100 = vld [vmem:[%s4099] ss:$8 sm:$0x3]
          %v4102 = vlaneseq
          %v4103 = vshrl.u32 %v4102, 7
          %v4104 = vsub.s32 0, %v4103
          %v4105 = vrot.slane %v4100, %v4104
          %v4106 = vlaneseq
          %v4107 = vshrl.u32 %v4106, 7
          %v4108 = vsub.s32 1, %v4107
          %v4109 = vrot.slane %v4100, %v4108
          %v4112 = vadd.f32 %v4035, %v4105
          %v4113 = vadd.f32 %v4036, %v4109
          %v4114 = vadd.f32 %v4037, %v4105
          %v4115 = vadd.f32 %v4038, %v4109
          %v4116 = vadd.f32 %v4039, %v4105
          %v4117 = vadd.f32 %v4040, %v4109
          %v4118 = vadd.f32 %v4041, %v4105
          %v4119 = vadd.f32 %v4042, %v4109
          %v4120 = vadd.f32 %v4043, %v4105
          %v4121 = vadd.f32 %v4044, %v4109
          %v4122 = vadd.f32 %v4045, %v4105
          %v4123 = vadd.f32 %v4046, %v4109
          %v4124 = vadd.f32 %v4047, %v4105
          %v4125 = vadd.f32 %v4048, %v4109
          %v4126 = vadd.f32 %v4049, %v4105
          %v4127 = vadd.f32 %v4050, %v4109
          %v4128 = vadd.f32 %v4051, %v4105
          %v4129 = vadd.f32 %v4052, %v4109
          %v4130 = vadd.f32 %v4053, %v4105
          %v4131 = vadd.f32 %v4054, %v4109
          %v4132 = vadd.f32 %v4055, %v4105
          %v4133 = vadd.f32 %v4056, %v4109
          %v4134 = vadd.f32 %v4057, %v4105
          %v4135 = vadd.f32 %v4058, %v4109
          %v4136 = vadd.f32 %v4059, %v4105
          %v4137 = vadd.f32 %v4060, %v4109
          %v4138 = vadd.f32 %v4061, %v4105
          %v4139 = vadd.f32 %v4062, %v4109
          %v4140 = vadd.f32 %v4063, %v4105
          %v4141 = vadd.f32 %v4064, %v4109
          %v4142 = vadd.f32 %v4065, %v4105
          %v4143 = vadd.f32 %v4066, %v4109
          %v4144 = vadd.f32 %v4067, %v4105
          %v4145 = vadd.f32 %v4068, %v4109
          %v4146 = vadd.f32 %v4069, %v4105
          %v4147 = vadd.f32 %v4070, %v4109
          %v4148 = vadd.f32 %v4071, %v4105
          %v4149 = vadd.f32 %v4072, %v4109
          %v4150 = vadd.f32 %v4073, %v4105
          %v4151 = vadd.f32 %v4074, %v4109
          %v4152 = vadd.f32 %v4075, %v4105
          %v4153 = vadd.f32 %v4076, %v4109
          %v4154 = vadd.f32 %v4077, %v4105
          %v4155 = vadd.f32 %v4078, %v4109
          %v4156 = vadd.f32 %v4079, %v4105
          %v4157 = vadd.f32 %v4080, %v4109
          %v4158 = vadd.f32 %v4081, %v4105
          %v4159 = vadd.f32 %v4082, %v4109
          %v4160 = vadd.f32 %v4083, %v4105
          %v4161 = vadd.f32 %v4084, %v4109
          %v4162 = vadd.f32 %v4085, %v4105
          %v4163 = vadd.f32 %v4086, %v4109
          %v4164 = vadd.f32 %v4087, %v4105
          %v4165 = vadd.f32 %v4088, %v4109
          %v4166 = vadd.f32 %v4089, %v4105
          %v4167 = vadd.f32 %v4090, %v4109
          %v4168 = vadd.f32 %v4091, %v4105
          %v4169 = vadd.f32 %v4092, %v4109
          %v4170 = vadd.f32 %v4093, %v4105
          %v4171 = vadd.f32 %v4094, %v4109
          %v4172 = vadd.f32 %v4095, %v4105
          %v4173 = vadd.f32 %v4096, %v4109
          %v4174 = vadd.f32 %v4097, %v4105
          %v4175 = vadd.f32 %v4098, %v4109
          %v4176 = vmax.f32 %v4112, 0.0
          %v4177 = vmax.f32 %v4114, 0.0
          %v4178 = vmax.f32 %v4116, 0.0
          %v4179 = vmax.f32 %v4118, 0.0
          %v4180 = vmax.f32 %v4120, 0.0
          %v4181 = vmax.f32 %v4122, 0.0
          %v4182 = vmax.f32 %v4124, 0.0
          %v4183 = vmax.f32 %v4126, 0.0
          %v4184 = vmax.f32 %v4128, 0.0
          %v4185 = vmax.f32 %v4130, 0.0
          %v4186 = vmax.f32 %v4132, 0.0
          %v4187 = vmax.f32 %v4134, 0.0
          %v4188 = vmax.f32 %v4136, 0.0
          %v4189 = vmax.f32 %v4138, 0.0
          %v4190 = vmax.f32 %v4140, 0.0
          %v4191 = vmax.f32 %v4142, 0.0
          %v4192 = vmax.f32 %v4144, 0.0
          %v4193 = vmax.f32 %v4146, 0.0
          %v4194 = vmax.f32 %v4148, 0.0
          %v4195 = vmax.f32 %v4150, 0.0
          %v4196 = vmax.f32 %v4152, 0.0
          %v4197 = vmax.f32 %v4154, 0.0
          %v4198 = vmax.f32 %v4156, 0.0
          %v4199 = vmax.f32 %v4158, 0.0
          %v4200 = vmax.f32 %v4160, 0.0
          %v4201 = vmax.f32 %v4162, 0.0
          %v4202 = vmax.f32 %v4164, 0.0
          %v4203 = vmax.f32 %v4166, 0.0
          %v4204 = vmax.f32 %v4168, 0.0
          %v4205 = vmax.f32 %v4170, 0.0
          %v4206 = vmax.f32 %v4172, 0.0
          %v4207 = vmax.f32 %v4174, 0.0
          %v4208 = vadd.f32 %v4176, %v4113
          %v4209 = vadd.f32 %v4177, %v4115
          %v4210 = vadd.f32 %v4178, %v4117
          %v4211 = vadd.f32 %v4179, %v4119
          %v4212 = vadd.f32 %v4180, %v4121
          %v4213 = vadd.f32 %v4181, %v4123
          %v4214 = vadd.f32 %v4182, %v4125
          %v4215 = vadd.f32 %v4183, %v4127
          %v4216 = vadd.f32 %v4184, %v4129
          %v4217 = vadd.f32 %v4185, %v4131
          %v4218 = vadd.f32 %v4186, %v4133
          %v4219 = vadd.f32 %v4187, %v4135
          %v4220 = vadd.f32 %v4188, %v4137
          %v4221 = vadd.f32 %v4189, %v4139
          %v4222 = vadd.f32 %v4190, %v4141
          %v4223 = vadd.f32 %v4191, %v4143
          %v4224 = vadd.f32 %v4192, %v4145
          %v4225 = vadd.f32 %v4193, %v4147
          %v4226 = vadd.f32 %v4194, %v4149
          %v4227 = vadd.f32 %v4195, %v4151
          %v4228 = vadd.f32 %v4196, %v4153
          %v4229 = vadd.f32 %v4197, %v4155
          %v4230 = vadd.f32 %v4198, %v4157
          %v4231 = vadd.f32 %v4199, %v4159
          %v4232 = vadd.f32 %v4200, %v4161
          %v4233 = vadd.f32 %v4201, %v4163
          %v4234 = vadd.f32 %v4202, %v4165
          %v4235 = vadd.f32 %v4203, %v4167
          %v4236 = vadd.f32 %v4204, %v4169
          %v4237 = vadd.f32 %v4205, %v4171
          %v4238 = vadd.f32 %v4206, %v4173
          %v4239 = vadd.f32 %v4207, %v4175
          %v4240 = vmax.f32 %v4208, 0.0
          %v4241 = vmax.f32 %v4209, 0.0
          %v4242 = vmax.f32 %v4210, 0.0
          %v4243 = vmax.f32 %v4211, 0.0
          %v4244 = vmax.f32 %v4212, 0.0
          %v4245 = vmax.f32 %v4213, 0.0
          %v4246 = vmax.f32 %v4214, 0.0
          %v4247 = vmax.f32 %v4215, 0.0
          %v4248 = vmax.f32 %v4216, 0.0
          %v4249 = vmax.f32 %v4217, 0.0
          %v4250 = vmax.f32 %v4218, 0.0
          %v4251 = vmax.f32 %v4219, 0.0
          %v4252 = vmax.f32 %v4220, 0.0
          %v4253 = vmax.f32 %v4221, 0.0
          %v4254 = vmax.f32 %v4222, 0.0
          %v4255 = vmax.f32 %v4223, 0.0
          %v4256 = vmax.f32 %v4224, 0.0
          %v4257 = vmax.f32 %v4225, 0.0
          %v4258 = vmax.f32 %v4226, 0.0
          %v4259 = vmax.f32 %v4227, 0.0
          %v4260 = vmax.f32 %v4228, 0.0
          %v4261 = vmax.f32 %v4229, 0.0
          %v4262 = vmax.f32 %v4230, 0.0
          %v4263 = vmax.f32 %v4231, 0.0
          %v4264 = vmax.f32 %v4232, 0.0
          %v4265 = vmax.f32 %v4233, 0.0
          %v4266 = vmax.f32 %v4234, 0.0
          %v4267 = vmax.f32 %v4235, 0.0
          %v4268 = vmax.f32 %v4236, 0.0
          %v4269 = vmax.f32 %v4237, 0.0
          %v4270 = vmax.f32 %v4238, 0.0
          %v4271 = vmax.f32 %v4239, 0.0
          %4272 = vst [vmem:[%s195] sm:$0xff] %v4240
          %4273 = vst [vmem:[%s195 + $0x8] sm:$0xff] %v4241
          %4274 = vst [vmem:[%s195 + $0x10] sm:$0xff] %v4242
          %4275 = vst [vmem:[%s195 + $0x18] sm:$0xff] %v4243
          %4276 = vst [vmem:[%s195 + $0x20] sm:$0xff] %v4244
          %4277 = vst [vmem:[%s195 + $0x28] sm:$0xff] %v4245
          %4278 = vst [vmem:[%s195 + $0x30] sm:$0xff] %v4246
          %4279 = vst [vmem:[%s195 + $0x38] sm:$0xff] %v4247
          %4280 = vst [vmem:[%s195 + $0x40] sm:$0xff] %v4248
          %4281 = vst [vmem:[%s195 + $0x48] sm:$0xff] %v4249
          %4282 = vst [vmem:[%s195 + $0x50] sm:$0xff] %v4250
          %4283 = vst [vmem:[%s195 + $0x58] sm:$0xff] %v4251
          %4284 = vst [vmem:[%s195 + $0x60] sm:$0xff] %v4252
          %4285 = vst [vmem:[%s195 + $0x68] sm:$0xff] %v4253
          %4286 = vst [vmem:[%s195 + $0x70] sm:$0xff] %v4254
          %4287 = vst [vmem:[%s195 + $0x78] sm:$0xff] %v4255
          %4288 = vst [vmem:[%s195 + $0x80] sm:$0xff] %v4256
          %4289 = vst [vmem:[%s195 + $0x88] sm:$0xff] %v4257
          %4290 = vst [vmem:[%s195 + $0x90] sm:$0xff] %v4258
          %4291 = vst [vmem:[%s195 + $0x98] sm:$0xff] %v4259
          %4292 = vst [vmem:[%s195 + $0xa0] sm:$0xff] %v4260
          %4293 = vst [vmem:[%s195 + $0xa8] sm:$0xff] %v4261
          %4294 = vst [vmem:[%s195 + $0xb0] sm:$0xff] %v4262
          %4295 = vst [vmem:[%s195 + $0xb8] sm:$0xff] %v4263
          %4296 = vst [vmem:[%s195 + $0xc0] sm:$0xff] %v4264
          %4297 = vst [vmem:[%s195 + $0xc8] sm:$0xff] %v4265
          %4298 = vst [vmem:[%s195 + $0xd0] sm:$0xff] %v4266
          %4299 = vst [vmem:[%s195 + $0xd8] sm:$0xff] %v4267
          %4300 = vst [vmem:[%s195 + $0xe0] sm:$0xff] %v4268
          %4301 = vst [vmem:[%s195 + $0xe8] sm:$0xff] %v4269
          %4302 = vst [vmem:[%s195 + $0xf0] sm:$0xff] %v4270
          %4303 = vst [vmem:[%s195 + $0xf8] sm:$0xff] %v4271
        $region48: #{block_res_forward_nhwc.1} parent=31 // pred_fallthru
          _
        %s4304 = sand.u32 %s113, 1
        %s4305 = scalar_lea.sflag [#allocation5], %s4304
        %s4306 = sand.u32 %s113, 1
        %s4307 = smul.addr %s4306, 256
        %s4308 = scalar_lea.vmem [#allocation4], %s4307
        // Predicated region
        $region49: #{block_res_forward_nhwc.1} parent=31 // pred_check
          %p4309 = pneg %p123
        $region50: #{block_res_forward_nhwc.1} parent=31 // pred_check_branch
          %4311 = sbr.rel (%p4309) target = $region52
        $region51: #{block_res_forward_nhwc.1} parent=31 // pred_region
          %s4312 = smul.u32 %s22, %s21
          %s4313 = smul.u32 32, %s4312
          %s4315 = ssub.s32 4096, 4096
          %4316 = vsyncadd %s4305, %s4315
          %s4317 = smul.addr %s4313, 128
          %s4318 = scalar_lea.hbm %s3, %s4317
          %s4319 = sshll.u32 %s4308, 4
          %s4320 = int_to_ptr.vmem [resolvable:$true] %s4319
          %4325 = dma.vmem_to_hbm [thread:$0]  %s4320, 4096, %s4318, %s4305, 128, 128, 8
        $region52: #{block_res_forward_nhwc.1} parent=31 // pred_fallthru
          _
      $region32: #{block_res_forward_nhwc.1} parent=5 // pred_fallthru
        _
      %p4326 = scmp.le.s32.totalorder 2, %s12
      // Predicated region
      $region53: #{block_res_forward_nhwc.1} parent=5 // pred_check
        %p4327 = pneg %p4326
      $region54: #{block_res_forward_nhwc.1} parent=5 // pred_check_branch
        %4329 = sbr.rel (%p4327) target = $region56
      $region55: #{block_res_forward_nhwc.1} parent=5 // pred_region
        %s4330 = ssub.s32 %s12, 2
        // Predicated region
        $region57: #{block_res_forward_nhwc.1} parent=55 // pred_check
          %p4331 = pneg %p129
        $region58: #{block_res_forward_nhwc.1} parent=55 // pred_check_branch
          %4333 = sbr.rel (%p4331) target = $region60
        $region59: #{block_res_forward_nhwc.1} parent=55 // pred_region
          %s4334 = sand.u32 %s114, 1
          %s4335 = scalar_lea.sflag [#allocation5], %s4334
          %s4336 = sand.u32 %s114, 1
          %s4337 = smul.addr %s4336, 256
          %s4338 = scalar_lea.vmem [#allocation4], %s4337
          %4339 = dma.done %s4335, 4096
        $region60: #{block_res_forward_nhwc.1} parent=55 // pred_fallthru
          _
      $region56: #{block_res_forward_nhwc.1} parent=5 // pred_fallthru
        _
    $region6: #{block_res_forward_nhwc.1} parent=1 // loop_footer
      %s16 = sadd.s32 1, %s12
    $region7: #{block_res_forward_nhwc.1} parent=1 // loop_footer_branch
      %11 = sbr.rel target = $region3
    $region8: #{block_res_forward_nhwc.1} parent=1 // loop_exit
      _
    %4340 = vsyncpa [#allocation5], 1
    %s4341 = scalar_lea.sflag [#allocation5], 1
    %4342 = vsyncpa %s4341, 1

</llo_original>
